<compile_context>
chip_gen: v5e
topology: v5e:2x2
jax: 0.10.0
libtpu: 0.0.40
codegen_flags: <defaults>
</compile_context>

<pallas_src>
import math
import numpy as np
import jax
import jax.numpy as jnp
from jax.experimental import pallas as pl
from jax.experimental.pallas import tpu as pltpu

WINDOW_SIZE = 11
SIGMA = 1.5
C1 = 0.01 ** 2
C2 = 0.03 ** 2


def _gaussian_1d(window_size, sigma):
    g = np.array(
        [math.exp(-((x - window_size // 2) ** 2) / float(2 * sigma ** 2))
         for x in range(window_size)],
        dtype=np.float64,
    )
    g = g / g.sum()
    return g.astype(np.float32)


def _band_matrix(n, taps):
    """Banded Toeplitz matrix M with M[i, j] = taps[j - i + pad] (zero-padded conv)."""
    pad = len(taps) // 2
    m = np.zeros((n, n), dtype=np.float32)
    for i in range(n):
        for k, t in enumerate(taps):
            j = i + k - pad
            if 0 <= j < n:
                m[i, j] = float(t)
    return m


def _pick_plane_block(n_planes, H, W):
    """Largest divisor of n_planes that keeps the VMEM working set modest and
    leaves >= 2 grid steps (megacore / both TCs) when possible."""
    plane_bytes = H * W * 4
    budget = 20 * 1024 * 1024          # conservative across v5e / v6e / v7x
    # ~16 plane-sized f32 temporaries live per plane in a block (inputs,
    # stacked conv inputs, horizontal-pass result, per-plane temps).
    cap = min(8, max(1, budget // max(1, 16 * plane_bytes)))
    best = 1
    for g in range(1, n_planes + 1):
        if n_planes % g == 0 and g <= cap and n_planes // g >= min(2, n_planes):
            best = g
    return best


def _make_ssim_kernel(G, H, W):
    prec = jax.lax.Precision.HIGHEST   # keep f32 accuracy for the band matmuls

    def kernel(kv_ref, kh_ref, x1_ref, x2_ref, out_ref):
        kv = kv_ref[...]                       # (H, H) f32, resident across grid
        kh = kh_ref[...]                       # (W, W) f32, resident across grid

        # Build the 5 conv inputs per plane and stack them along the sublane
        # axis so the horizontal Gaussian pass is ONE tall MXU matmul.
        quants = []
        for g in range(G):                     # static unroll over planes in block
            a = x1_ref[g].astype(jnp.float32)  # (H, W), cast in-kernel
            b = x2_ref[g].astype(jnp.float32)
            quants.extend([a, b, a * b, a * a, b * b])
        stacked = jnp.concatenate(quants, axis=0)            # (5*G*H, W)
        h_pass = jnp.dot(stacked, kh,                         # horizontal pass
                         preferred_element_type=jnp.float32,
                         precision=prec)                      # (5*G*H, W)

        for g in range(G):
            base = 5 * g * H

            def vconv(k, _base=base):
                # vertical pass on one (H, W) block of the fused result
                blk = h_pass[_base + k * H:_base + (k + 1) * H, :]
                return jnp.dot(kv, blk, preferred_element_type=jnp.float32,
                               precision=prec)

            mu1 = vconv(0)                     # conv(a)
            mu2 = vconv(1)                     # conv(b)
            c12 = vconv(2)                     # conv(a*b)
            c11 = vconv(3)                     # conv(a*a)
            c22 = vconv(4)                     # conv(b*b)

            num1 = 2.0 * (mu1 * mu2) + C1                    # 2*mu1*mu2 + C1
            den1 = mu1 * mu1 + mu2 * mu2 + C1                # mu1^2 + mu2^2 + C1
            num2 = 2.0 * c12 - num1 + (C1 + C2)              # 2*sigma12 + C2
            den2 = c11 + c22 - den1 + (C1 + C2)              # sigma1^2+sigma2^2+C2

            ssim_map = (num1 * num2) / (den1 * den2)
            out_ref[g] = jnp.sum(ssim_map, axis=(0, 1), keepdims=True)

    return kernel


def ssim_pallas(img1, img2, window_size=WINDOW_SIZE, size_average=True):
    B, C, H, W = img1.shape
    N = B * C
    x1 = img1.reshape(N, H, W)                 # keep native dtype in HBM
    x2 = img2.reshape(N, H, W)

    taps = _gaussian_1d(window_size, SIGMA)
    kv = jnp.asarray(_band_matrix(H, taps))        # vertical pass:   Kv @ X
    kh = jnp.asarray(_band_matrix(W, taps).T)      # horizontal pass: X @ Kh

    G = _pick_plane_block(N, H, W)
    grid = (N // G,)
    kernel = _make_ssim_kernel(G, H, W)

    partial = pl.pallas_call(
        kernel,
        out_shape=jax.ShapeDtypeStruct((N, 1, 1), jnp.float32),
        grid_spec=pltpu.PrefetchScalarGridSpec(
            num_scalar_prefetch=0,
            grid=grid,
            in_specs=[
                pl.BlockSpec((H, H), lambda i: (0, 0)),        # Kv (resident)
                pl.BlockSpec((W, W), lambda i: (0, 0)),        # Kh (resident)
                pl.BlockSpec((G, H, W), lambda i: (i, 0, 0)),  # img1 planes
                pl.BlockSpec((G, H, W), lambda i: (i, 0, 0)),  # img2 planes
            ],
            out_specs=pl.BlockSpec((G, 1, 1), lambda i: (i, 0, 0)),
        ),
        compiler_params=pltpu.CompilerParams(
            dimension_semantics=("parallel",),
            vmem_limit_bytes=48 * 1024 * 1024,
        ),
    )(kv, kh, x1, x2)

    per_plane_mean = partial[:, 0, 0].reshape(B, C) / float(H * W)   # (B, C)
    if size_average:
        return jnp.mean(per_plane_mean)                 # ssim_map.mean()
    else:
        return jnp.mean(per_plane_mean, axis=1)         # .mean(1).mean(1).mean(1)


def ssim_reference(img1, img2, window_size=WINDOW_SIZE, size_average=True):
    # Pure-JAX reference mirroring the PyTorch _ssim (depthwise conv2d).
    B, C, H, W = img1.shape
    pad = window_size // 2
    w1d = _gaussian_1d(window_size, SIGMA)
    w2d = np.outer(w1d, w1d).astype(np.float32)
    w = jnp.broadcast_to(jnp.asarray(w2d), (C, 1, window_size, window_size))

    def conv(x):
        return jax.lax.conv_general_dilated(
            x, w, window_strides=(1, 1), padding=[(pad, pad), (pad, pad)],
            dimension_numbers=("NCHW", "OIHW", "NCHW"),
            feature_group_count=C,
            precision=jax.lax.Precision.HIGHEST)

    x1 = img1.astype(jnp.float32)
    x2 = img2.astype(jnp.float32)
    mu1 = conv(x1)
    mu2 = conv(x2)
    mu1_sq, mu2_sq, mu1_mu2 = mu1 * mu1, mu2 * mu2, mu1 * mu2
    sigma1_sq = conv(x1 * x1) - mu1_sq
    sigma2_sq = conv(x2 * x2) - mu2_sq
    sigma12 = conv(x1 * x2) - mu1_mu2
    ssim_map = ((2 * mu1_mu2 + C1) * (2 * sigma12 + C2)) / (
        (mu1_sq + mu2_sq + C1) * (sigma1_sq + sigma2_sq + C2))
    if size_average:
        return jnp.mean(ssim_map)
    else:
        return jnp.mean(ssim_map, axis=(1, 2, 3))


if __name__ == "__main__":
    key = jax.random.PRNGKey(0)
    k1, k2 = jax.random.split(key)
    B, C, H, W = 2, 4, 16, 16
    img1 = jax.random.uniform(k1, (B, C, H, W), dtype=jnp.float32)
    img2 = jax.random.uniform(k2, (B, C, H, W), dtype=jnp.float32)

    out = ssim_pallas(img1, img2, size_average=True)
    out = jax.block_until_ready(out)

    ref = jax.block_until_ready(ssim_reference(img1, img2, size_average=True))
    np.testing.assert_allclose(np.asarray(out), np.asarray(ref),
                               rtol=1e-4, atol=1e-5)
    print("KERNEL_OK")
</pallas_src>

<mosaic_0001>
module attributes {stable_mosaic.version = 11 : i64} {
  func.func @kernel(%arg0: i32, %arg1: memref<16x16xf32, #tpu.memory_space<vmem>>, %arg2: memref<16x16xf32, #tpu.memory_space<vmem>>, %arg3: memref<4x16x16xf32, #tpu.memory_space<vmem>>, %arg4: memref<4x16x16xf32, #tpu.memory_space<vmem>>, %arg5: memref<4x1x1xf32, #tpu.memory_space<vmem>>) attributes {dimension_semantics = [#tpu.dimension_semantics<parallel>], iteration_bounds = array<i64: 2>, scalar_prefetch = 0 : i64, scratch_operands = 0 : i64, tpu.core_type = #tpu.core_type<tc>, window_params = [{pipeline_mode = #tpu.pipeline_mode<synchronous>, transform_indices = @transform_0, window_bounds = array<i64: 16, 16>}, {pipeline_mode = #tpu.pipeline_mode<synchronous>, transform_indices = @transform_1, window_bounds = array<i64: 16, 16>}, {transform_indices = @transform_2, window_bounds = array<i64: 4, 16, 16>}, {transform_indices = @transform_3, window_bounds = array<i64: 4, 16, 16>}, {transform_indices = @transform_4, window_bounds = array<i64: 4, 1, 1>}]} {
    %c0 = arith.constant 0 : index
    %c0_0 = arith.constant 0 : index
    %0 = vector.load %arg1[%c0, %c0_0] : memref<16x16xf32, #tpu.memory_space<vmem>>, vector<16x16xf32>
    %c0_1 = arith.constant 0 : index
    %c0_2 = arith.constant 0 : index
    %1 = vector.load %arg2[%c0_1, %c0_2] : memref<16x16xf32, #tpu.memory_space<vmem>>, vector<16x16xf32>
    %c0_3 = arith.constant 0 : index
    %c0_4 = arith.constant 0 : index
    %c0_5 = arith.constant 0 : index
    %2 = vector.load %arg3[%c0_3, %c0_4, %c0_5] : memref<4x16x16xf32, #tpu.memory_space<vmem>>, vector<1x16x16xf32>
    %3 = vector.shape_cast %2 : vector<1x16x16xf32> to vector<16x16xf32>
    %c0_6 = arith.constant 0 : index
    %c0_7 = arith.constant 0 : index
    %c0_8 = arith.constant 0 : index
    %4 = vector.load %arg4[%c0_6, %c0_7, %c0_8] : memref<4x16x16xf32, #tpu.memory_space<vmem>>, vector<1x16x16xf32>
    %5 = vector.shape_cast %4 : vector<1x16x16xf32> to vector<16x16xf32>
    %6 = arith.mulf %3, %5 : vector<16x16xf32>
    %7 = arith.mulf %3, %3 : vector<16x16xf32>
    %8 = arith.mulf %5, %5 : vector<16x16xf32>
    %c1 = arith.constant 1 : index
    %c0_9 = arith.constant 0 : index
    %c0_10 = arith.constant 0 : index
    %9 = vector.load %arg3[%c1, %c0_9, %c0_10] : memref<4x16x16xf32, #tpu.memory_space<vmem>>, vector<1x16x16xf32>
    %10 = vector.shape_cast %9 : vector<1x16x16xf32> to vector<16x16xf32>
    %c1_11 = arith.constant 1 : index
    %c0_12 = arith.constant 0 : index
    %c0_13 = arith.constant 0 : index
    %11 = vector.load %arg4[%c1_11, %c0_12, %c0_13] : memref<4x16x16xf32, #tpu.memory_space<vmem>>, vector<1x16x16xf32>
    %12 = vector.shape_cast %11 : vector<1x16x16xf32> to vector<16x16xf32>
    %13 = arith.mulf %10, %12 : vector<16x16xf32>
    %14 = arith.mulf %10, %10 : vector<16x16xf32>
    %15 = arith.mulf %12, %12 : vector<16x16xf32>
    %c2 = arith.constant 2 : index
    %c0_14 = arith.constant 0 : index
    %c0_15 = arith.constant 0 : index
    %16 = vector.load %arg3[%c2, %c0_14, %c0_15] : memref<4x16x16xf32, #tpu.memory_space<vmem>>, vector<1x16x16xf32>
    %17 = vector.shape_cast %16 : vector<1x16x16xf32> to vector<16x16xf32>
    %c2_16 = arith.constant 2 : index
    %c0_17 = arith.constant 0 : index
    %c0_18 = arith.constant 0 : index
    %18 = vector.load %arg4[%c2_16, %c0_17, %c0_18] : memref<4x16x16xf32, #tpu.memory_space<vmem>>, vector<1x16x16xf32>
    %19 = vector.shape_cast %18 : vector<1x16x16xf32> to vector<16x16xf32>
    %20 = arith.mulf %17, %19 : vector<16x16xf32>
    %21 = arith.mulf %17, %17 : vector<16x16xf32>
    %22 = arith.mulf %19, %19 : vector<16x16xf32>
    %c3 = arith.constant 3 : index
    %c0_19 = arith.constant 0 : index
    %c0_20 = arith.constant 0 : index
    %23 = vector.load %arg3[%c3, %c0_19, %c0_20] : memref<4x16x16xf32, #tpu.memory_space<vmem>>, vector<1x16x16xf32>
    %24 = vector.shape_cast %23 : vector<1x16x16xf32> to vector<16x16xf32>
    %c3_21 = arith.constant 3 : index
    %c0_22 = arith.constant 0 : index
    %c0_23 = arith.constant 0 : index
    %25 = vector.load %arg4[%c3_21, %c0_22, %c0_23] : memref<4x16x16xf32, #tpu.memory_space<vmem>>, vector<1x16x16xf32>
    %26 = vector.shape_cast %25 : vector<1x16x16xf32> to vector<16x16xf32>
    %27 = arith.mulf %24, %26 : vector<16x16xf32>
    %28 = arith.mulf %24, %24 : vector<16x16xf32>
    %29 = arith.mulf %26, %26 : vector<16x16xf32>
    %30 = tpu.concatenate %3, %5, %6, %7, %8, %10, %12, %13, %14, %15, %17, %19, %20, %21, %22, %24 in 0 : vector<16x16xf32>, vector<16x16xf32>, vector<16x16xf32>, vector<16x16xf32>, vector<16x16xf32>, vector<16x16xf32>, vector<16x16xf32>, vector<16x16xf32>, vector<16x16xf32>, vector<16x16xf32>, vector<16x16xf32>, vector<16x16xf32>, vector<16x16xf32>, vector<16x16xf32>, vector<16x16xf32>, vector<16x16xf32> -> vector<256x16xf32>
    %31 = tpu.concatenate %26, %27, %28, %29 in 0 : vector<16x16xf32>, vector<16x16xf32>, vector<16x16xf32>, vector<16x16xf32> -> vector<64x16xf32>
    %32 = tpu.concatenate %30, %31 in 0 : vector<256x16xf32>, vector<64x16xf32> -> vector<320x16xf32>
    %cst = arith.constant dense<0.000000e+00> : vector<320x16xf32>
    %33 = tpu.matmul %32, %1, %cst {dimension_numbers = #tpu.dot_dimension_numbers<[1], [0], [0], [1], [0, 0, 1, 1], [], []>, precision = #tpu.contract_precision<fp32>} : vector<320x16xf32>, vector<16x16xf32>, vector<320x16xf32> -> vector<320x16xf32>
    %34 = vector.extract_strided_slice %33 {offsets = [0, 0], sizes = [16, 16], strides = [1, 1]} : vector<320x16xf32> to vector<16x16xf32>
    %cst_24 = arith.constant dense<0.000000e+00> : vector<16x16xf32>
    %35 = tpu.matmul %0, %34, %cst_24 {dimension_numbers = #tpu.dot_dimension_numbers<[1], [0], [0], [1], [0, 0, 1, 1], [], []>, precision = #tpu.contract_precision<fp32>} : vector<16x16xf32>, vector<16x16xf32>, vector<16x16xf32> -> vector<16x16xf32>
    %36 = vector.extract_strided_slice %33 {offsets = [16, 0], sizes = [16, 16], strides = [1, 1]} : vector<320x16xf32> to vector<16x16xf32>
    %cst_25 = arith.constant dense<0.000000e+00> : vector<16x16xf32>
    %37 = tpu.matmul %0, %36, %cst_25 {dimension_numbers = #tpu.dot_dimension_numbers<[1], [0], [0], [1], [0, 0, 1, 1], [], []>, precision = #tpu.contract_precision<fp32>} : vector<16x16xf32>, vector<16x16xf32>, vector<16x16xf32> -> vector<16x16xf32>
    %38 = vector.extract_strided_slice %33 {offsets = [32, 0], sizes = [16, 16], strides = [1, 1]} : vector<320x16xf32> to vector<16x16xf32>
    %cst_26 = arith.constant dense<0.000000e+00> : vector<16x16xf32>
    %39 = tpu.matmul %0, %38, %cst_26 {dimension_numbers = #tpu.dot_dimension_numbers<[1], [0], [0], [1], [0, 0, 1, 1], [], []>, precision = #tpu.contract_precision<fp32>} : vector<16x16xf32>, vector<16x16xf32>, vector<16x16xf32> -> vector<16x16xf32>
    %40 = vector.extract_strided_slice %33 {offsets = [48, 0], sizes = [16, 16], strides = [1, 1]} : vector<320x16xf32> to vector<16x16xf32>
    %cst_27 = arith.constant dense<0.000000e+00> : vector<16x16xf32>
    %41 = tpu.matmul %0, %40, %cst_27 {dimension_numbers = #tpu.dot_dimension_numbers<[1], [0], [0], [1], [0, 0, 1, 1], [], []>, precision = #tpu.contract_precision<fp32>} : vector<16x16xf32>, vector<16x16xf32>, vector<16x16xf32> -> vector<16x16xf32>
    %42 = vector.extract_strided_slice %33 {offsets = [64, 0], sizes = [16, 16], strides = [1, 1]} : vector<320x16xf32> to vector<16x16xf32>
    %cst_28 = arith.constant dense<0.000000e+00> : vector<16x16xf32>
    %43 = tpu.matmul %0, %42, %cst_28 {dimension_numbers = #tpu.dot_dimension_numbers<[1], [0], [0], [1], [0, 0, 1, 1], [], []>, precision = #tpu.contract_precision<fp32>} : vector<16x16xf32>, vector<16x16xf32>, vector<16x16xf32> -> vector<16x16xf32>
    %44 = arith.mulf %35, %37 : vector<16x16xf32>
    %cst_29 = arith.constant 2.000000e+00 : f32
    %45 = vector.broadcast %cst_29 : f32 to vector<16x16xf32>
    %46 = arith.mulf %45, %44 : vector<16x16xf32>
    %cst_30 = arith.constant 9.99999974E-5 : f32
    %47 = vector.broadcast %cst_30 : f32 to vector<16x16xf32>
    %48 = arith.addf %46, %47 : vector<16x16xf32>
    %49 = arith.mulf %35, %35 : vector<16x16xf32>
    %50 = arith.mulf %37, %37 : vector<16x16xf32>
    %51 = arith.addf %49, %50 : vector<16x16xf32>
    %cst_31 = arith.constant 9.99999974E-5 : f32
    %52 = vector.broadcast %cst_31 : f32 to vector<16x16xf32>
    %53 = arith.addf %51, %52 : vector<16x16xf32>
    %cst_32 = arith.constant 2.000000e+00 : f32
    %54 = vector.broadcast %cst_32 : f32 to vector<16x16xf32>
    %55 = arith.mulf %54, %39 : vector<16x16xf32>
    %56 = arith.subf %55, %48 : vector<16x16xf32>
    %cst_33 = arith.constant 1.000000e-03 : f32
    %57 = vector.broadcast %cst_33 : f32 to vector<16x16xf32>
    %58 = arith.addf %56, %57 : vector<16x16xf32>
    %59 = arith.addf %41, %43 : vector<16x16xf32>
    %60 = arith.subf %59, %53 : vector<16x16xf32>
    %cst_34 = arith.constant 1.000000e-03 : f32
    %61 = vector.broadcast %cst_34 : f32 to vector<16x16xf32>
    %62 = arith.addf %60, %61 : vector<16x16xf32>
    %63 = arith.mulf %48, %58 : vector<16x16xf32>
    %64 = arith.mulf %53, %62 : vector<16x16xf32>
    %65 = arith.divf %63, %64 : vector<16x16xf32>
    %66 = vector.shape_cast %65 : vector<16x16xf32> to vector<1x16x16xf32>
    %cst_35 = arith.constant dense<0.000000e+00> : vector<1xf32>
    %67 = vector.multi_reduction <add>, %66, %cst_35 [1, 2] : vector<1x16x16xf32> to vector<1xf32>
    %68 = vector.shape_cast %67 : vector<1xf32> to vector<1x1x1xf32>
    %69 = vector.extract %68[0, 0, 0] : f32 from vector<1x1x1xf32>
    %70 = vector.broadcast %69 : f32 to vector<1x1xf32>
    %c0_36 = arith.constant 0 : index
    %c0_37 = arith.constant 0 : index
    %c0_38 = arith.constant 0 : index
    %71 = vector.load %arg5[%c0_36, %c0_37, %c0_38] : memref<4x1x1xf32, #tpu.memory_space<vmem>>, vector<1x1x1xf32>
    %72 = vector.shape_cast %71 : vector<1x1x1xf32> to vector<1x1xf32>
    %73 = vector.shape_cast %70 : vector<1x1xf32> to vector<1x1x1xf32>
    tpu.vector_store %arg5[%c0_36, %c0_37, %c0_38], %73 {strides = array<i32>} : memref<4x1x1xf32, #tpu.memory_space<vmem>>, vector<1x1x1xf32>,
    %74 = vector.extract_strided_slice %33 {offsets = [80, 0], sizes = [16, 16], strides = [1, 1]} : vector<320x16xf32> to vector<16x16xf32>
    %cst_39 = arith.constant dense<0.000000e+00> : vector<16x16xf32>
    %75 = tpu.matmul %0, %74, %cst_39 {dimension_numbers = #tpu.dot_dimension_numbers<[1], [0], [0], [1], [0, 0, 1, 1], [], []>, precision = #tpu.contract_precision<fp32>} : vector<16x16xf32>, vector<16x16xf32>, vector<16x16xf32> -> vector<16x16xf32>
    %76 = vector.extract_strided_slice %33 {offsets = [96, 0], sizes = [16, 16], strides = [1, 1]} : vector<320x16xf32> to vector<16x16xf32>
    %cst_40 = arith.constant dense<0.000000e+00> : vector<16x16xf32>
    %77 = tpu.matmul %0, %76, %cst_40 {dimension_numbers = #tpu.dot_dimension_numbers<[1], [0], [0], [1], [0, 0, 1, 1], [], []>, precision = #tpu.contract_precision<fp32>} : vector<16x16xf32>, vector<16x16xf32>, vector<16x16xf32> -> vector<16x16xf32>
    %78 = vector.extract_strided_slice %33 {offsets = [112, 0], sizes = [16, 16], strides = [1, 1]} : vector<320x16xf32> to vector<16x16xf32>
    %cst_41 = arith.constant dense<0.000000e+00> : vector<16x16xf32>
    %79 = tpu.matmul %0, %78, %cst_41 {dimension_numbers = #tpu.dot_dimension_numbers<[1], [0], [0], [1], [0, 0, 1, 1], [], []>, precision = #tpu.contract_precision<fp32>} : vector<16x16xf32>, vector<16x16xf32>, vector<16x16xf32> -> vector<16x16xf32>
    %80 = vector.extract_strided_slice %33 {offsets = [128, 0], sizes = [16, 16], strides = [1, 1]} : vector<320x16xf32> to vector<16x16xf32>
    %cst_42 = arith.constant dense<0.000000e+00> : vector<16x16xf32>
    %81 = tpu.matmul %0, %80, %cst_42 {dimension_numbers = #tpu.dot_dimension_numbers<[1], [0], [0], [1], [0, 0, 1, 1], [], []>, precision = #tpu.contract_precision<fp32>} : vector<16x16xf32>, vector<16x16xf32>, vector<16x16xf32> -> vector<16x16xf32>
    %82 = vector.extract_strided_slice %33 {offsets = [144, 0], sizes = [16, 16], strides = [1, 1]} : vector<320x16xf32> to vector<16x16xf32>
    %cst_43 = arith.constant dense<0.000000e+00> : vector<16x16xf32>
    %83 = tpu.matmul %0, %82, %cst_43 {dimension_numbers = #tpu.dot_dimension_numbers<[1], [0], [0], [1], [0, 0, 1, 1], [], []>, precision = #tpu.contract_precision<fp32>} : vector<16x16xf32>, vector<16x16xf32>, vector<16x16xf32> -> vector<16x16xf32>
    %84 = arith.mulf %75, %77 : vector<16x16xf32>
    %cst_44 = arith.constant 2.000000e+00 : f32
    %85 = vector.broadcast %cst_44 : f32 to vector<16x16xf32>
    %86 = arith.mulf %85, %84 : vector<16x16xf32>
    %cst_45 = arith.constant 9.99999974E-5 : f32
    %87 = vector.broadcast %cst_45 : f32 to vector<16x16xf32>
    %88 = arith.addf %86, %87 : vector<16x16xf32>
    %89 = arith.mulf %75, %75 : vector<16x16xf32>
    %90 = arith.mulf %77, %77 : vector<16x16xf32>
    %91 = arith.addf %89, %90 : vector<16x16xf32>
    %cst_46 = arith.constant 9.99999974E-5 : f32
    %92 = vector.broadcast %cst_46 : f32 to vector<16x16xf32>
    %93 = arith.addf %91, %92 : vector<16x16xf32>
    %cst_47 = arith.constant 2.000000e+00 : f32
    %94 = vector.broadcast %cst_47 : f32 to vector<16x16xf32>
    %95 = arith.mulf %94, %79 : vector<16x16xf32>
    %96 = arith.subf %95, %88 : vector<16x16xf32>
    %cst_48 = arith.constant 1.000000e-03 : f32
    %97 = vector.broadcast %cst_48 : f32 to vector<16x16xf32>
    %98 = arith.addf %96, %97 : vector<16x16xf32>
    %99 = arith.addf %81, %83 : vector<16x16xf32>
    %100 = arith.subf %99, %93 : vector<16x16xf32>
    %cst_49 = arith.constant 1.000000e-03 : f32
    %101 = vector.broadcast %cst_49 : f32 to vector<16x16xf32>
    %102 = arith.addf %100, %101 : vector<16x16xf32>
    %103 = arith.mulf %88, %98 : vector<16x16xf32>
    %104 = arith.mulf %93, %102 : vector<16x16xf32>
    %105 = arith.divf %103, %104 : vector<16x16xf32>
    %106 = vector.shape_cast %105 : vector<16x16xf32> to vector<1x16x16xf32>
    %cst_50 = arith.constant dense<0.000000e+00> : vector<1xf32>
    %107 = vector.multi_reduction <add>, %106, %cst_50 [1, 2] : vector<1x16x16xf32> to vector<1xf32>
    %108 = vector.shape_cast %107 : vector<1xf32> to vector<1x1x1xf32>
    %109 = vector.extract %108[0, 0, 0] : f32 from vector<1x1x1xf32>
    %110 = vector.broadcast %109 : f32 to vector<1x1xf32>
    %c1_51 = arith.constant 1 : index
    %c0_52 = arith.constant 0 : index
    %c0_53 = arith.constant 0 : index
    %111 = vector.load %arg5[%c1_51, %c0_52, %c0_53] : memref<4x1x1xf32, #tpu.memory_space<vmem>>, vector<1x1x1xf32>
    %112 = vector.shape_cast %111 : vector<1x1x1xf32> to vector<1x1xf32>
    %113 = vector.shape_cast %110 : vector<1x1xf32> to vector<1x1x1xf32>
    tpu.vector_store %arg5[%c1_51, %c0_52, %c0_53], %113 {strides = array<i32>} : memref<4x1x1xf32, #tpu.memory_space<vmem>>, vector<1x1x1xf32>,
    %114 = vector.extract_strided_slice %33 {offsets = [160, 0], sizes = [16, 16], strides = [1, 1]} : vector<320x16xf32> to vector<16x16xf32>
    %cst_54 = arith.constant dense<0.000000e+00> : vector<16x16xf32>
    %115 = tpu.matmul %0, %114, %cst_54 {dimension_numbers = #tpu.dot_dimension_numbers<[1], [0], [0], [1], [0, 0, 1, 1], [], []>, precision = #tpu.contract_precision<fp32>} : vector<16x16xf32>, vector<16x16xf32>, vector<16x16xf32> -> vector<16x16xf32>
    %116 = vector.extract_strided_slice %33 {offsets = [176, 0], sizes = [16, 16], strides = [1, 1]} : vector<320x16xf32> to vector<16x16xf32>
    %cst_55 = arith.constant dense<0.000000e+00> : vector<16x16xf32>
    %117 = tpu.matmul %0, %116, %cst_55 {dimension_numbers = #tpu.dot_dimension_numbers<[1], [0], [0], [1], [0, 0, 1, 1], [], []>, precision = #tpu.contract_precision<fp32>} : vector<16x16xf32>, vector<16x16xf32>, vector<16x16xf32> -> vector<16x16xf32>
    %118 = vector.extract_strided_slice %33 {offsets = [192, 0], sizes = [16, 16], strides = [1, 1]} : vector<320x16xf32> to vector<16x16xf32>
    %cst_56 = arith.constant dense<0.000000e+00> : vector<16x16xf32>
    %119 = tpu.matmul %0, %118, %cst_56 {dimension_numbers = #tpu.dot_dimension_numbers<[1], [0], [0], [1], [0, 0, 1, 1], [], []>, precision = #tpu.contract_precision<fp32>} : vector<16x16xf32>, vector<16x16xf32>, vector<16x16xf32> -> vector<16x16xf32>
    %120 = vector.extract_strided_slice %33 {offsets = [208, 0], sizes = [16, 16], strides = [1, 1]} : vector<320x16xf32> to vector<16x16xf32>
    %cst_57 = arith.constant dense<0.000000e+00> : vector<16x16xf32>
    %121 = tpu.matmul %0, %120, %cst_57 {dimension_numbers = #tpu.dot_dimension_numbers<[1], [0], [0], [1], [0, 0, 1, 1], [], []>, precision = #tpu.contract_precision<fp32>} : vector<16x16xf32>, vector<16x16xf32>, vector<16x16xf32> -> vector<16x16xf32>
    %122 = vector.extract_strided_slice %33 {offsets = [224, 0], sizes = [16, 16], strides = [1, 1]} : vector<320x16xf32> to vector<16x16xf32>
    %cst_58 = arith.constant dense<0.000000e+00> : vector<16x16xf32>
    %123 = tpu.matmul %0, %122, %cst_58 {dimension_numbers = #tpu.dot_dimension_numbers<[1], [0], [0], [1], [0, 0, 1, 1], [], []>, precision = #tpu.contract_precision<fp32>} : vector<16x16xf32>, vector<16x16xf32>, vector<16x16xf32> -> vector<16x16xf32>
    %124 = arith.mulf %115, %117 : vector<16x16xf32>
    %cst_59 = arith.constant 2.000000e+00 : f32
    %125 = vector.broadcast %cst_59 : f32 to vector<16x16xf32>
    %126 = arith.mulf %125, %124 : vector<16x16xf32>
    %cst_60 = arith.constant 9.99999974E-5 : f32
    %127 = vector.broadcast %cst_60 : f32 to vector<16x16xf32>
    %128 = arith.addf %126, %127 : vector<16x16xf32>
    %129 = arith.mulf %115, %115 : vector<16x16xf32>
    %130 = arith.mulf %117, %117 : vector<16x16xf32>
    %131 = arith.addf %129, %130 : vector<16x16xf32>
    %cst_61 = arith.constant 9.99999974E-5 : f32
    %132 = vector.broadcast %cst_61 : f32 to vector<16x16xf32>
    %133 = arith.addf %131, %132 : vector<16x16xf32>
    %cst_62 = arith.constant 2.000000e+00 : f32
    %134 = vector.broadcast %cst_62 : f32 to vector<16x16xf32>
    %135 = arith.mulf %134, %119 : vector<16x16xf32>
    %136 = arith.subf %135, %128 : vector<16x16xf32>
    %cst_63 = arith.constant 1.000000e-03 : f32
    %137 = vector.broadcast %cst_63 : f32 to vector<16x16xf32>
    %138 = arith.addf %136, %137 : vector<16x16xf32>
    %139 = arith.addf %121, %123 : vector<16x16xf32>
    %140 = arith.subf %139, %133 : vector<16x16xf32>
    %cst_64 = arith.constant 1.000000e-03 : f32
    %141 = vector.broadcast %cst_64 : f32 to vector<16x16xf32>
    %142 = arith.addf %140, %141 : vector<16x16xf32>
    %143 = arith.mulf %128, %138 : vector<16x16xf32>
    %144 = arith.mulf %133, %142 : vector<16x16xf32>
    %145 = arith.divf %143, %144 : vector<16x16xf32>
    %146 = vector.shape_cast %145 : vector<16x16xf32> to vector<1x16x16xf32>
    %cst_65 = arith.constant dense<0.000000e+00> : vector<1xf32>
    %147 = vector.multi_reduction <add>, %146, %cst_65 [1, 2] : vector<1x16x16xf32> to vector<1xf32>
    %148 = vector.shape_cast %147 : vector<1xf32> to vector<1x1x1xf32>
    %149 = vector.extract %148[0, 0, 0] : f32 from vector<1x1x1xf32>
    %150 = vector.broadcast %149 : f32 to vector<1x1xf32>
    %c2_66 = arith.constant 2 : index
    %c0_67 = arith.constant 0 : index
    %c0_68 = arith.constant 0 : index
    %151 = vector.load %arg5[%c2_66, %c0_67, %c0_68] : memref<4x1x1xf32, #tpu.memory_space<vmem>>, vector<1x1x1xf32>
    %152 = vector.shape_cast %151 : vector<1x1x1xf32> to vector<1x1xf32>
    %153 = vector.shape_cast %150 : vector<1x1xf32> to vector<1x1x1xf32>
    tpu.vector_store %arg5[%c2_66, %c0_67, %c0_68], %153 {strides = array<i32>} : memref<4x1x1xf32, #tpu.memory_space<vmem>>, vector<1x1x1xf32>,
    %154 = vector.extract_strided_slice %33 {offsets = [240, 0], sizes = [16, 16], strides = [1, 1]} : vector<320x16xf32> to vector<16x16xf32>
    %cst_69 = arith.constant dense<0.000000e+00> : vector<16x16xf32>
    %155 = tpu.matmul %0, %154, %cst_69 {dimension_numbers = #tpu.dot_dimension_numbers<[1], [0], [0], [1], [0, 0, 1, 1], [], []>, precision = #tpu.contract_precision<fp32>} : vector<16x16xf32>, vector<16x16xf32>, vector<16x16xf32> -> vector<16x16xf32>
    %156 = vector.extract_strided_slice %33 {offsets = [256, 0], sizes = [16, 16], strides = [1, 1]} : vector<320x16xf32> to vector<16x16xf32>
    %cst_70 = arith.constant dense<0.000000e+00> : vector<16x16xf32>
    %157 = tpu.matmul %0, %156, %cst_70 {dimension_numbers = #tpu.dot_dimension_numbers<[1], [0], [0], [1], [0, 0, 1, 1], [], []>, precision = #tpu.contract_precision<fp32>} : vector<16x16xf32>, vector<16x16xf32>, vector<16x16xf32> -> vector<16x16xf32>
    %158 = vector.extract_strided_slice %33 {offsets = [272, 0], sizes = [16, 16], strides = [1, 1]} : vector<320x16xf32> to vector<16x16xf32>
    %cst_71 = arith.constant dense<0.000000e+00> : vector<16x16xf32>
    %159 = tpu.matmul %0, %158, %cst_71 {dimension_numbers = #tpu.dot_dimension_numbers<[1], [0], [0], [1], [0, 0, 1, 1], [], []>, precision = #tpu.contract_precision<fp32>} : vector<16x16xf32>, vector<16x16xf32>, vector<16x16xf32> -> vector<16x16xf32>
    %160 = vector.extract_strided_slice %33 {offsets = [288, 0], sizes = [16, 16], strides = [1, 1]} : vector<320x16xf32> to vector<16x16xf32>
    %cst_72 = arith.constant dense<0.000000e+00> : vector<16x16xf32>
    %161 = tpu.matmul %0, %160, %cst_72 {dimension_numbers = #tpu.dot_dimension_numbers<[1], [0], [0], [1], [0, 0, 1, 1], [], []>, precision = #tpu.contract_precision<fp32>} : vector<16x16xf32>, vector<16x16xf32>, vector<16x16xf32> -> vector<16x16xf32>
    %162 = vector.extract_strided_slice %33 {offsets = [304, 0], sizes = [16, 16], strides = [1, 1]} : vector<320x16xf32> to vector<16x16xf32>
    %cst_73 = arith.constant dense<0.000000e+00> : vector<16x16xf32>
    %163 = tpu.matmul %0, %162, %cst_73 {dimension_numbers = #tpu.dot_dimension_numbers<[1], [0], [0], [1], [0, 0, 1, 1], [], []>, precision = #tpu.contract_precision<fp32>} : vector<16x16xf32>, vector<16x16xf32>, vector<16x16xf32> -> vector<16x16xf32>
    %164 = arith.mulf %155, %157 : vector<16x16xf32>
    %cst_74 = arith.constant 2.000000e+00 : f32
    %165 = vector.broadcast %cst_74 : f32 to vector<16x16xf32>
    %166 = arith.mulf %165, %164 : vector<16x16xf32>
    %cst_75 = arith.constant 9.99999974E-5 : f32
    %167 = vector.broadcast %cst_75 : f32 to vector<16x16xf32>
    %168 = arith.addf %166, %167 : vector<16x16xf32>
    %169 = arith.mulf %155, %155 : vector<16x16xf32>
    %170 = arith.mulf %157, %157 : vector<16x16xf32>
    %171 = arith.addf %169, %170 : vector<16x16xf32>
    %cst_76 = arith.constant 9.99999974E-5 : f32
    %172 = vector.broadcast %cst_76 : f32 to vector<16x16xf32>
    %173 = arith.addf %171, %172 : vector<16x16xf32>
    %cst_77 = arith.constant 2.000000e+00 : f32
    %174 = vector.broadcast %cst_77 : f32 to vector<16x16xf32>
    %175 = arith.mulf %174, %159 : vector<16x16xf32>
    %176 = arith.subf %175, %168 : vector<16x16xf32>
    %cst_78 = arith.constant 1.000000e-03 : f32
    %177 = vector.broadcast %cst_78 : f32 to vector<16x16xf32>
    %178 = arith.addf %176, %177 : vector<16x16xf32>
    %179 = arith.addf %161, %163 : vector<16x16xf32>
    %180 = arith.subf %179, %173 : vector<16x16xf32>
    %cst_79 = arith.constant 1.000000e-03 : f32
    %181 = vector.broadcast %cst_79 : f32 to vector<16x16xf32>
    %182 = arith.addf %180, %181 : vector<16x16xf32>
    %183 = arith.mulf %168, %178 : vector<16x16xf32>
    %184 = arith.mulf %173, %182 : vector<16x16xf32>
    %185 = arith.divf %183, %184 : vector<16x16xf32>
    %186 = vector.shape_cast %185 : vector<16x16xf32> to vector<1x16x16xf32>
    %cst_80 = arith.constant dense<0.000000e+00> : vector<1xf32>
    %187 = vector.multi_reduction <add>, %186, %cst_80 [1, 2] : vector<1x16x16xf32> to vector<1xf32>
    %188 = vector.shape_cast %187 : vector<1xf32> to vector<1x1x1xf32>
    %189 = vector.extract %188[0, 0, 0] : f32 from vector<1x1x1xf32>
    %190 = vector.broadcast %189 : f32 to vector<1x1xf32>
    %c3_81 = arith.constant 3 : index
    %c0_82 = arith.constant 0 : index
    %c0_83 = arith.constant 0 : index
    %191 = vector.load %arg5[%c3_81, %c0_82, %c0_83] : memref<4x1x1xf32, #tpu.memory_space<vmem>>, vector<1x1x1xf32>
    %192 = vector.shape_cast %191 : vector<1x1x1xf32> to vector<1x1xf32>
    %193 = vector.shape_cast %190 : vector<1x1xf32> to vector<1x1x1xf32>
    tpu.vector_store %arg5[%c3_81, %c0_82, %c0_83], %193 {strides = array<i32>} : memref<4x1x1xf32, #tpu.memory_space<vmem>>, vector<1x1x1xf32>,
    return
  }
  func.func @transform_0(%arg0: i32) -> (i32, i32) {
    %c0_i32 = arith.constant 0 : i32
    %c0_i32_0 = arith.constant 0 : i32
    %c0_i32_1 = arith.constant 0 : i32
    return %c0_i32, %c0_i32_0 : i32, i32
  }
  func.func @transform_1(%arg0: i32) -> (i32, i32) {
    %c0_i32 = arith.constant 0 : i32
    %c0_i32_0 = arith.constant 0 : i32
    %c0_i32_1 = arith.constant 0 : i32
    return %c0_i32, %c0_i32_0 : i32, i32
  }
  func.func @transform_2(%arg0: i32) -> (i32, i32, i32) {
    %c0_i32 = arith.constant 0 : i32
    %c0_i32_0 = arith.constant 0 : i32
    %c0_i32_1 = arith.constant 0 : i32
    return %arg0, %c0_i32, %c0_i32_0 : i32, i32, i32
  }
  func.func @transform_3(%arg0: i32) -> (i32, i32, i32) {
    %c0_i32 = arith.constant 0 : i32
    %c0_i32_0 = arith.constant 0 : i32
    %c0_i32_1 = arith.constant 0 : i32
    return %arg0, %c0_i32, %c0_i32_0 : i32, i32, i32
  }
  func.func @transform_4(%arg0: i32) -> (i32, i32, i32) {
    %c0_i32 = arith.constant 0 : i32
    %c0_i32_0 = arith.constant 0 : i32
    %c0_i32_1 = arith.constant 0 : i32
    return %arg0, %c0_i32, %c0_i32_0 : i32, i32, i32
  }
}

</mosaic_0001>

<llo_original>
// kernel: tpu_custom_call.1
$region0: #{tpu_custom_call.1}
  #allocation0 [shape = 'u32[]', space=smem, size = 0x4, offset = 0x4, fixed_abs, tag = 'smem constant byte address 0x4 - core index']
  #allocation1 [shape = 'u32[72,128]{1,0:T(1,128)}', space=vmem, size = 0x9000, scoped, tag = 'internal scratch']
  %s0 = inlined_call_operand.hbm [shape: f32[16,16], index: 0, kind: input, shape index: {}]
  %s1 = inlined_call_operand.hbm [shape: f32[16,16], index: 1, kind: input, shape index: {}]
  %s2 = inlined_call_operand.hbm [shape: f32[8,16,16], index: 2, kind: input, shape index: {}]
  %s3 = inlined_call_operand.hbm [shape: f32[8,16,16], index: 3, kind: input, shape index: {}]
  %s4 = inlined_call_operand.vmem [shape: f32[8,1,1], index: 4, kind: output, shape index: {}]
  %s5 = sld [smem:[#allocation0]]
  $region65: #{tpu_custom_call.1} parent=0
    _
  %s7 = ssub.s32 1, %s5
  %s8 = scalar_select 0, %s7, %s5
  $region1: #{tpu_custom_call.1} parent=0
    #allocation2 [shape = 'u8[8192]{0}', space=vmem, size = 0x2000, scoped, tag = 'input window, operand 0, single buffered']
    #allocation3 [shape = 's32[2]{0}', space=sflag, size = 0x8, scoped, tag = 'scoped memory for tpu_custom_call.1']
    #allocation4 [shape = 'u8[8192]{0}', space=vmem, size = 0x2000, scoped, tag = 'input window, operand 1, single buffered']
    #allocation5 [shape = 's32[1]{0}', space=sflag, size = 0x4, scoped, tag = 'scoped memory for tpu_custom_call.1']
    #allocation6 [shape = 'u8[65536]{0}', space=vmem, size = 0x10000, scoped, tag = 'input window, operand 2']
    #allocation7 [shape = 'u8[65536]{0}', space=vmem, size = 0x10000, scoped, tag = 'input window, operand 3']
    %9 = vsyncpa [#allocation3], 0
    %10 = vsyncpa [#allocation5], 0
    loop: start=0, step=1, limit=4
    $region2: #{tpu_custom_call.1} parent=1 // loop_pre_header
      _
    $region3: #{tpu_custom_call.1} parent=1 // loop_header
      %s12 = sphi 0, %s16
      %p13 = scmp.ge.s32.totalorder %s12, 4
      %s20 = sphi 0, %s20
      %s22 = sphi 0, %s20
      %s23 = sphi 0, %s22
      %s37 = sphi 0, %s23
      %s41 = sphi 0, %s41
      %s43 = sphi 0, %s41
      %s44 = sphi 0, %s43
      %s58 = sphi 0, %s44
      %s64 = sphi 0, %s66
      %s67 = sphi 0, %s64
      %s68 = sphi 0, %s67
      %s84 = sphi 0, %s68
      %s90 = sphi 0, %s92
      %s93 = sphi 0, %s90
      %s94 = sphi 0, %s93
      %s110 = sphi 0, %s94
      %s116 = sphi 0, %s118
      %s119 = sphi 0, %s116
      %s120 = sphi 0, %s119
      %s136 = sphi 0, %s120
    $region4: #{tpu_custom_call.1} parent=1 // loop_header_branch
      %15 = sbr.rel (%p13) target = $region8
    $region5: #{tpu_custom_call.1} parent=1 // loop_body
      %s17 = ssub.s32 %s12, 1
      %s18 = ssub.s32 %s12, 2
      %s19 = sadd.s32 %s12, 1
      %s21 = sadd.s32 %s20, 1
      %p24 = scmp.eq.s32.totalorder %s12, 1
      %p25 = scmp.ne.s32.totalorder %s20, %s22
      %p26 = scmp.eq.s32.totalorder %s12, 0
      %p27 = por %p25, %p26
      %p28 = scmp.ne.s32.totalorder %s20, %s22
      %p29 = scmp.eq.s32.totalorder %s17, 1
      %p30 = por %p28, %p29
      %p31 = scmp.ne.s32.totalorder %s22, %s23
      %p32 = scmp.eq.s32.totalorder %s17, 0
      %p33 = por %p31, %p32
      %p34 = scmp.ne.s32.totalorder %s22, %s23
      %p35 = scmp.eq.s32.totalorder %s18, 1
      %p36 = por %p34, %p35
      %p38 = scmp.ne.s32.totalorder %s23, %s37
      %p39 = scmp.eq.s32.totalorder %s18, 0
      %p40 = por %p38, %p39
      %s42 = sadd.s32 %s41, 1
      %p45 = scmp.eq.s32.totalorder %s12, 1
      %p46 = scmp.ne.s32.totalorder %s41, %s43
      %p47 = scmp.eq.s32.totalorder %s12, 0
      %p48 = por %p46, %p47
      %p49 = scmp.ne.s32.totalorder %s41, %s43
      %p50 = scmp.eq.s32.totalorder %s17, 1
      %p51 = por %p49, %p50
      %p52 = scmp.ne.s32.totalorder %s43, %s44
      %p53 = scmp.eq.s32.totalorder %s17, 0
      %p54 = por %p52, %p53
      %p55 = scmp.ne.s32.totalorder %s43, %s44
      %p56 = scmp.eq.s32.totalorder %s18, 1
      %p57 = por %p55, %p56
      %p59 = scmp.ne.s32.totalorder %s44, %s58
      %p60 = scmp.eq.s32.totalorder %s18, 0
      %p61 = por %p59, %p60
      %s62 = ssub.s32 %s12, %s19
      %p63 = scmp.eq.s32.totalorder %s62, 0
      %s65 = sadd.s32 %s64, 1
      %s66 = scalar_select %p63, %s64, %s65
      %p69 = pneg %p63
      %p70 = scmp.eq.s32.totalorder %s12, 1
      %p71 = por %p69, %p70
      %p72 = scmp.ne.s32.totalorder %s64, %s67
      %p73 = scmp.eq.s32.totalorder %s12, 0
      %p74 = por %p72, %p73
      %p75 = scmp.ne.s32.totalorder %s64, %s67
      %p76 = scmp.eq.s32.totalorder %s17, 1
      %p77 = por %p75, %p76
      %p78 = scmp.ne.s32.totalorder %s67, %s68
      %p79 = scmp.eq.s32.totalorder %s17, 0
      %p80 = por %p78, %p79
      %p81 = scmp.ne.s32.totalorder %s67, %s68
      %p82 = scmp.eq.s32.totalorder %s18, 1
      %p83 = por %p81, %p82
      %p85 = scmp.ne.s32.totalorder %s68, %s84
      %p86 = scmp.eq.s32.totalorder %s18, 0
      %p87 = por %p85, %p86
      %s88 = ssub.s32 %s12, %s19
      %p89 = scmp.eq.s32.totalorder %s88, 0
      %s91 = sadd.s32 %s90, 1
      %s92 = scalar_select %p89, %s90, %s91
      %p95 = pneg %p89
      %p96 = scmp.eq.s32.totalorder %s12, 1
      %p97 = por %p95, %p96
      %p98 = scmp.ne.s32.totalorder %s90, %s93
      %p99 = scmp.eq.s32.totalorder %s12, 0
      %p100 = por %p98, %p99
      %p101 = scmp.ne.s32.totalorder %s90, %s93
      %p102 = scmp.eq.s32.totalorder %s17, 1
      %p103 = por %p101, %p102
      %p104 = scmp.ne.s32.totalorder %s93, %s94
      %p105 = scmp.eq.s32.totalorder %s17, 0
      %p106 = por %p104, %p105
      %p107 = scmp.ne.s32.totalorder %s93, %s94
      %p108 = scmp.eq.s32.totalorder %s18, 1
      %p109 = por %p107, %p108
      %p111 = scmp.ne.s32.totalorder %s94, %s110
      %p112 = scmp.eq.s32.totalorder %s18, 0
      %p113 = por %p111, %p112
      %s114 = ssub.s32 %s12, %s19
      %p115 = scmp.eq.s32.totalorder %s114, 0
      %s117 = sadd.s32 %s116, 1
      %s118 = scalar_select %p115, %s116, %s117
      %p121 = pneg %p115
      %p122 = scmp.eq.s32.totalorder %s12, 1
      %p123 = por %p121, %p122
      %p124 = scmp.ne.s32.totalorder %s116, %s119
      %p125 = scmp.eq.s32.totalorder %s12, 0
      %p126 = por %p124, %p125
      %p127 = scmp.ne.s32.totalorder %s116, %s119
      %p128 = scmp.eq.s32.totalorder %s17, 1
      %p129 = por %p127, %p128
      %p130 = scmp.ne.s32.totalorder %s119, %s120
      %p131 = scmp.eq.s32.totalorder %s17, 0
      %p132 = por %p130, %p131
      %p133 = scmp.ne.s32.totalorder %s119, %s120
      %p134 = scmp.eq.s32.totalorder %s18, 1
      %p135 = por %p133, %p134
      %p137 = scmp.ne.s32.totalorder %s120, %s136
      %p138 = scmp.eq.s32.totalorder %s18, 0
      %p139 = por %p137, %p138
      %p140 = scmp.le.s32.totalorder 1, %s12
      %p141 = scmp.lt.s32.totalorder %s12, 3
      %p142 = pnand %p140, %p141
      %p143 = pneg %p142
      // Predicated region
      $region9: #{tpu_custom_call.1} parent=5 // pred_check
        _
      $region10: #{tpu_custom_call.1} parent=5 // pred_check_branch
        %145 = sbr.rel (%p142) target = $region12
      $region11: #{tpu_custom_call.1} parent=5 // pred_region
        %s146 = ssub.s32 %s12, 1
        // Predicated region
        $region13: #{tpu_custom_call.1} parent=11 // pred_check
          %p147 = pneg %p33
        $region14: #{tpu_custom_call.1} parent=11 // pred_check_branch
          %149 = sbr.rel (%p147) target = $region16
        $region15: #{tpu_custom_call.1} parent=11 // pred_region
          %151 = vsyncadd [#allocation3], 0
          %s152 = sshll.u32 %s0, 4
          %s153 = int_to_ptr.hbm [resolvable:$true] %s152
          %s154 = sshll.u32 [#allocation2], 4
          %s155 = int_to_ptr.vmem [resolvable:$true] %s154
          %160 = dma.hbm_to_vmem [thread:$0]  %s153, 256, %s155, [#allocation3], 128, 128, 8
        $region16: #{tpu_custom_call.1} parent=11 // pred_fallthru
          _
        // Predicated region
        $region17: #{tpu_custom_call.1} parent=11 // pred_check
          %p161 = pneg %p54
        $region18: #{tpu_custom_call.1} parent=11 // pred_check_branch
          %163 = sbr.rel (%p161) target = $region20
        $region19: #{tpu_custom_call.1} parent=11 // pred_region
          %165 = vsyncadd [#allocation5], 0
          %s166 = sshll.u32 %s1, 4
          %s167 = int_to_ptr.hbm [resolvable:$true] %s166
          %s168 = sshll.u32 [#allocation4], 4
          %s169 = int_to_ptr.vmem [resolvable:$true] %s168
          %174 = dma.hbm_to_vmem [thread:$0]  %s167, 256, %s169, [#allocation5], 128, 128, 8
        $region20: #{tpu_custom_call.1} parent=11 // pred_fallthru
          _
      $region12: #{tpu_custom_call.1} parent=5 // pred_fallthru
        _
      %p175 = scmp.lt.s32.totalorder %s12, 2
      // Predicated region
      $region21: #{tpu_custom_call.1} parent=5 // pred_check
        %p176 = pneg %p175
      $region22: #{tpu_custom_call.1} parent=5 // pred_check_branch
        %178 = sbr.rel (%p176) target = $region24
      $region23: #{tpu_custom_call.1} parent=5 // pred_region
        // Predicated region
        $region25: #{tpu_custom_call.1} parent=23 // pred_check
          %p179 = pneg %p74
        $region26: #{tpu_custom_call.1} parent=23 // pred_check_branch
          %181 = sbr.rel (%p179) target = $region28
        $region27: #{tpu_custom_call.1} parent=23 // pred_region
          %s182 = sand.u32 %s12, 1
          %s183 = scalar_lea.sflag [#allocation3], %s182
          %s184 = sand.u32 %s64, 1
          %s185 = smul.addr %s184, 64
          %s186 = scalar_lea.vmem [#allocation6], %s185
          %s187 = smul.u32 4, %s12
          %189 = vsyncadd %s183, 0
          %s190 = smul.addr %s187, 2
          %s191 = smul.addr %s190, 8
          %s192 = scalar_lea.hbm %s2, %s191
          %s193 = sshll.u32 %s192, 4
          %s194 = int_to_ptr.hbm [resolvable:$true] %s193
          %s195 = sshll.u32 %s186, 4
          %s196 = int_to_ptr.vmem [resolvable:$true] %s195
          %201 = dma.hbm_to_vmem [thread:$0]  %s194, 1024, %s196, %s183, 128, 128, 8
        $region28: #{tpu_custom_call.1} parent=23 // pred_fallthru
          _
        // Predicated region
        $region29: #{tpu_custom_call.1} parent=23 // pred_check
          %p202 = pneg %p100
        $region30: #{tpu_custom_call.1} parent=23 // pred_check_branch
          %204 = sbr.rel (%p202) target = $region32
        $region31: #{tpu_custom_call.1} parent=23 // pred_region
          %s205 = sand.u32 %s12, 1
          %s206 = scalar_lea.sflag [#allocation3], %s205
          %s207 = sand.u32 %s90, 1
          %s208 = smul.addr %s207, 64
          %s209 = scalar_lea.vmem [#allocation7], %s208
          %s210 = smul.u32 4, %s12
          %212 = vsyncadd %s206, 0
          %s213 = smul.addr %s210, 2
          %s214 = smul.addr %s213, 8
          %s215 = scalar_lea.hbm %s3, %s214
          %s216 = sshll.u32 %s215, 4
          %s217 = int_to_ptr.hbm [resolvable:$true] %s216
          %s218 = sshll.u32 %s209, 4
          %s219 = int_to_ptr.vmem [resolvable:$true] %s218
          %224 = dma.hbm_to_vmem [thread:$0]  %s217, 1024, %s219, %s206, 128, 128, 8
        $region32: #{tpu_custom_call.1} parent=23 // pred_fallthru
          _
      $region24: #{tpu_custom_call.1} parent=5 // pred_fallthru
        _
      %p225 = scmp.le.s32.totalorder 1, %s12
      %p226 = scmp.lt.s32.totalorder %s12, 3
      %p227 = pnand %p225, %p226
      %p228 = pneg %p227
      // Predicated region
      $region33: #{tpu_custom_call.1} parent=5 // pred_check
        _
      $region34: #{tpu_custom_call.1} parent=5 // pred_check_branch
        %230 = sbr.rel (%p227) target = $region36
      $region35: #{tpu_custom_call.1} parent=5 // pred_region
        %s231 = ssub.s32 %s12, 1
        // Predicated region
        $region37: #{tpu_custom_call.1} parent=35 // pred_check
          %p232 = pneg %p33
        $region38: #{tpu_custom_call.1} parent=35 // pred_check_branch
          %234 = sbr.rel (%p232) target = $region40
        $region39: #{tpu_custom_call.1} parent=35 // pred_region
          %236 = dma.done [#allocation3], 256
        $region40: #{tpu_custom_call.1} parent=35 // pred_fallthru
          _
        // Predicated region
        $region41: #{tpu_custom_call.1} parent=35 // pred_check
          %p237 = pneg %p54
        $region42: #{tpu_custom_call.1} parent=35 // pred_check_branch
          %239 = sbr.rel (%p237) target = $region44
        $region43: #{tpu_custom_call.1} parent=35 // pred_region
          %241 = dma.done [#allocation5], 256
        $region44: #{tpu_custom_call.1} parent=35 // pred_fallthru
          _
        %s242 = sand.u32 %s17, 1
        %s243 = scalar_lea.sflag [#allocation3], %s242
        %s244 = sand.u32 %s67, 1
        %s245 = smul.addr %s244, 64
        %s246 = scalar_lea.vmem [#allocation6], %s245
        // Predicated region
        $region45: #{tpu_custom_call.1} parent=35 // pred_check
          %p247 = pneg %p80
        $region46: #{tpu_custom_call.1} parent=35 // pred_check_branch
          %249 = sbr.rel (%p247) target = $region48
        $region47: #{tpu_custom_call.1} parent=35 // pred_region
          %251 = dma.done %s243, 1024
        $region48: #{tpu_custom_call.1} parent=35 // pred_fallthru
          _
        %s252 = sand.u32 %s17, 1
        %s253 = scalar_lea.sflag [#allocation3], %s252
        %s254 = sand.u32 %s93, 1
        %s255 = smul.addr %s254, 64
        %s256 = scalar_lea.vmem [#allocation7], %s255
        // Predicated region
        $region49: #{tpu_custom_call.1} parent=35 // pred_check
          %p257 = pneg %p106
        $region50: #{tpu_custom_call.1} parent=35 // pred_check_branch
          %259 = sbr.rel (%p257) target = $region52
        $region51: #{tpu_custom_call.1} parent=35 // pred_region
          %261 = dma.done %s253, 1024
        $region52: #{tpu_custom_call.1} parent=35 // pred_fallthru
          _
        %p262 = pneg %p33
        %p263 = pneg %p30
        %p264 = pneg %p54
        %p265 = pneg %p51
        %s266 = sand.u32 %s17, 1
        %s267 = scalar_lea.sflag [#allocation3], %s266
        %s268 = sand.u32 %s67, 1
        %s269 = smul.addr %s268, 64
        %s270 = scalar_lea.vmem [#allocation6], %s269
        %p271 = pneg %p80
        %p272 = pneg %p77
        %s273 = sand.u32 %s17, 1
        %s274 = scalar_lea.sflag [#allocation3], %s273
        %s275 = sand.u32 %s93, 1
        %s276 = smul.addr %s275, 64
        %s277 = scalar_lea.vmem [#allocation7], %s276
        %p278 = pneg %p106
        %p279 = pneg %p103
        %p280 = pneg %p132
        %p281 = pneg %p129
        %s282 = smul.u32 4, %s17
        %p283 = scmp.lt.s32.totalorder %s282, 7
        %s284 = scalar_select %p283, %s282, 7
        %s285 = scalar_lea.vmem %s4, %s284
        %s286 = smul.u32 4, %s17
        %s287 = smul.u32 4, %s17
        %s288 = smul.u32 4, %s17
        %p289 = scmp.lt.s32.totalorder %s288, 7
        %s290 = scalar_select %p289, %s288, 7
        %s291 = scalar_lea.vmem %s4, %s290
        %s292 = smul.u32 4, %s17
        %v293 = vld [vmem:[#allocation2] sm:$0xff]
        %v294 = vld [vmem:[#allocation2 + $0x8] sm:$0xff]
        %v295 = vld [vmem:[#allocation4] sm:$0xff]
        %v296 = vld [vmem:[#allocation4 + $0x8] sm:$0xff]
        %v297 = vld [vmem:[%s246] sm:$0xff]
        %v298 = vld [vmem:[%s246 + $0x8] sm:$0xff]
        %v299 = vld [vmem:[%s256] sm:$0xff]
        %v300 = vld [vmem:[%s256 + $0x8] sm:$0xff]
        %v301 = vmul.f32 %v297, %v299
        %v302 = vmul.f32 %v298, %v300
        %v303 = vmul.f32 %v297, %v297
        %v304 = vmul.f32 %v298, %v298
        %v305 = vmul.f32 %v299, %v299
        %v306 = vmul.f32 %v300, %v300
        %s307 = scalar_lea.vmem %s246, 16 [#allocation6]
        %v308 = vld [vmem:[%s307] sm:$0xff]
        %v309 = vld [vmem:[%s307 + $0x8] sm:$0xff]
        %s310 = scalar_lea.vmem %s256, 16 [#allocation7]
        %v311 = vld [vmem:[%s310] sm:$0xff]
        %v312 = vld [vmem:[%s310 + $0x8] sm:$0xff]
        %v313 = vmul.f32 %v308, %v311
        %v314 = vmul.f32 %v309, %v312
        %v315 = vmul.f32 %v308, %v308
        %v316 = vmul.f32 %v309, %v309
        %v317 = vmul.f32 %v311, %v311
        %v318 = vmul.f32 %v312, %v312
        %s319 = scalar_lea.vmem %s246, 32 [#allocation6]
        %v320 = vld [vmem:[%s319] sm:$0xff]
        %v321 = vld [vmem:[%s319 + $0x8] sm:$0xff]
        %s322 = scalar_lea.vmem %s256, 32 [#allocation7]
        %v323 = vld [vmem:[%s322] sm:$0xff]
        %v324 = vld [vmem:[%s322 + $0x8] sm:$0xff]
        %v325 = vmul.f32 %v320, %v323
        %v326 = vmul.f32 %v321, %v324
        %v327 = vmul.f32 %v320, %v320
        %v328 = vmul.f32 %v321, %v321
        %v329 = vmul.f32 %v323, %v323
        %v330 = vmul.f32 %v324, %v324
        %s331 = scalar_lea.vmem %s246, 48 [#allocation6]
        %v332 = vld [vmem:[%s331] sm:$0xff]
        %v333 = vld [vmem:[%s331 + $0x8] sm:$0xff]
        %s334 = scalar_lea.vmem %s256, 48 [#allocation7]
        %v335 = vld [vmem:[%s334] sm:$0xff]
        %v336 = vld [vmem:[%s334 + $0x8] sm:$0xff]
        %v337 = vmul.f32 %v332, %v335
        %v338 = vmul.f32 %v333, %v336
        %v339 = vmul.f32 %v332, %v332
        %v340 = vmul.f32 %v333, %v333
        %v341 = vmul.f32 %v335, %v335
        %v342 = vmul.f32 %v336, %v336
        %vm343 = vcmask 130048
        %v345 = vsel %vm343, %v297, 0
        %v348 = vsel %vm343, %v298, 0
        %v351 = vsel %vm343, %v299, 0
        %v354 = vsel %vm343, %v300, 0
        %v357 = vsel %vm343, %v301, 0
        %v360 = vsel %vm343, %v302, 0
        %v363 = vsel %vm343, %v303, 0
        %v366 = vsel %vm343, %v304, 0
        %v369 = vsel %vm343, %v305, 0
        %v372 = vsel %vm343, %v306, 0
        %v375 = vsel %vm343, %v308, 0
        %v378 = vsel %vm343, %v309, 0
        %v381 = vsel %vm343, %v311, 0
        %v384 = vsel %vm343, %v312, 0
        %v387 = vsel %vm343, %v313, 0
        %v390 = vsel %vm343, %v314, 0
        %v393 = vsel %vm343, %v315, 0
        %v396 = vsel %vm343, %v316, 0
        %v399 = vsel %vm343, %v317, 0
        %v402 = vsel %vm343, %v318, 0
        %v405 = vsel %vm343, %v320, 0
        %v408 = vsel %vm343, %v321, 0
        %v411 = vsel %vm343, %v323, 0
        %v414 = vsel %vm343, %v324, 0
        %v417 = vsel %vm343, %v325, 0
        %v420 = vsel %vm343, %v326, 0
        %v423 = vsel %vm343, %v327, 0
        %v426 = vsel %vm343, %v328, 0
        %v429 = vsel %vm343, %v329, 0
        %v432 = vsel %vm343, %v330, 0
        %v435 = vsel %vm343, %v332, 0
        %v438 = vsel %vm343, %v333, 0
        %v441 = vsel %vm343, %v335, 0
        %v444 = vsel %vm343, %v336, 0
        %v447 = vsel %vm343, %v337, 0
        %v450 = vsel %vm343, %v338, 0
        %v453 = vsel %vm343, %v339, 0
        %v456 = vsel %vm343, %v340, 0
        %v459 = vsel %vm343, %v341, 0
        %v462 = vsel %vm343, %v342, 0
        %464 = vmatpush.msra.mxu0 0.0
        %465 = vmatpush.msra.mxu0 0.0
        %466 = vmatpush.msra.mxu0 0.0
        %467 = vmatpush.msra.mxu0 0.0
        %468 = vmatpush.msra.mxu0 0.0
        %469 = vmatpush.msra.mxu0 0.0
        %470 = vmatpush.msra.mxu0 0.0
        %471 = vmatpush.msra.mxu0 0.0
        %472 = vmatpush.msra.mxu0 0.0
        %473 = vmatpush.msra.mxu0 0.0
        %474 = vmatpush.msra.mxu0 0.0
        %475 = vmatpush.msra.mxu0 0.0
        %476 = vmatpush.msra.mxu0 0.0
        %477 = vmatpush.msra.mxu0 0.0
        %v478 = vand.u32 %v296, 4294901760
        %479 = vmatpush.msra.mxu0 %v478
        %v480 = vand.u32 %v295, 4294901760
        %481 = vmatpush.msra.mxu0 %v480
        %v482 = vand.u32 %v345, 4294901760
        %v483 = vsub.f32 %v345, %v482
        %v484 = vand.u32 %v483, 4294901760
        %v485 = vsub.f32 %v483, %v484
        %v486 = vand.u32 %v485, 4294901760
        %487 = vmatmul.f32.gmra.mxu0 %v486
        %v488 = vpop.f32.mrf.mxu0
        %v489 = vadd.f32 0.0, %v488
        %v490 = vand.u32 %v348, 4294901760
        %v491 = vsub.f32 %v348, %v490
        %v492 = vand.u32 %v491, 4294901760
        %v493 = vsub.f32 %v491, %v492
        %v494 = vand.u32 %v493, 4294901760
        %495 = vmatmul.f32.gmra.mxu0 %v494
        %v496 = vpop.f32.mrf.mxu0
        %v497 = vadd.f32 0.0, %v496
        %v498 = vand.u32 %v351, 4294901760
        %v499 = vsub.f32 %v351, %v498
        %v500 = vand.u32 %v499, 4294901760
        %v501 = vsub.f32 %v499, %v500
        %v502 = vand.u32 %v501, 4294901760
        %503 = vmatmul.f32.gmra.mxu0 %v502
        %v504 = vpop.f32.mrf.mxu0
        %v505 = vadd.f32 0.0, %v504
        %v506 = vand.u32 %v354, 4294901760
        %v507 = vsub.f32 %v354, %v506
        %v508 = vand.u32 %v507, 4294901760
        %v509 = vsub.f32 %v507, %v508
        %v510 = vand.u32 %v509, 4294901760
        %511 = vmatmul.f32.gmra.mxu0 %v510
        %v512 = vpop.f32.mrf.mxu0
        %v513 = vadd.f32 0.0, %v512
        %v514 = vand.u32 %v357, 4294901760
        %v515 = vsub.f32 %v357, %v514
        %v516 = vand.u32 %v515, 4294901760
        %v517 = vsub.f32 %v515, %v516
        %v518 = vand.u32 %v517, 4294901760
        %519 = vmatmul.f32.gmra.mxu0 %v518
        %v520 = vpop.f32.mrf.mxu0
        %v521 = vadd.f32 0.0, %v520
        %v522 = vand.u32 %v360, 4294901760
        %v523 = vsub.f32 %v360, %v522
        %v524 = vand.u32 %v523, 4294901760
        %v525 = vsub.f32 %v523, %v524
        %v526 = vand.u32 %v525, 4294901760
        %527 = vmatmul.f32.gmra.mxu0 %v526
        %v528 = vpop.f32.mrf.mxu0
        %v529 = vadd.f32 0.0, %v528
        %v530 = vand.u32 %v363, 4294901760
        %v531 = vsub.f32 %v363, %v530
        %v532 = vand.u32 %v531, 4294901760
        %v533 = vsub.f32 %v531, %v532
        %v534 = vand.u32 %v533, 4294901760
        %535 = vmatmul.f32.gmra.mxu0 %v534
        %v536 = vpop.f32.mrf.mxu0
        %v537 = vadd.f32 0.0, %v536
        %v538 = vand.u32 %v366, 4294901760
        %v539 = vsub.f32 %v366, %v538
        %v540 = vand.u32 %v539, 4294901760
        %v541 = vsub.f32 %v539, %v540
        %v542 = vand.u32 %v541, 4294901760
        %543 = vmatmul.f32.gmra.mxu0 %v542
        %v544 = vpop.f32.mrf.mxu0
        %v545 = vadd.f32 0.0, %v544
        %v546 = vand.u32 %v369, 4294901760
        %v547 = vsub.f32 %v369, %v546
        %v548 = vand.u32 %v547, 4294901760
        %v549 = vsub.f32 %v547, %v548
        %v550 = vand.u32 %v549, 4294901760
        %551 = vmatmul.f32.gmra.mxu0 %v550
        %v552 = vpop.f32.mrf.mxu0
        %v553 = vadd.f32 0.0, %v552
        %v554 = vand.u32 %v372, 4294901760
        %v555 = vsub.f32 %v372, %v554
        %v556 = vand.u32 %v555, 4294901760
        %v557 = vsub.f32 %v555, %v556
        %v558 = vand.u32 %v557, 4294901760
        %559 = vmatmul.f32.gmra.mxu0 %v558
        %v560 = vpop.f32.mrf.mxu0
        %v561 = vadd.f32 0.0, %v560
        %v562 = vand.u32 %v375, 4294901760
        %v563 = vsub.f32 %v375, %v562
        %v564 = vand.u32 %v563, 4294901760
        %v565 = vsub.f32 %v563, %v564
        %v566 = vand.u32 %v565, 4294901760
        %567 = vmatmul.f32.gmra.mxu0 %v566
        %v568 = vpop.f32.mrf.mxu0
        %v569 = vadd.f32 0.0, %v568
        %v570 = vand.u32 %v378, 4294901760
        %v571 = vsub.f32 %v378, %v570
        %v572 = vand.u32 %v571, 4294901760
        %v573 = vsub.f32 %v571, %v572
        %v574 = vand.u32 %v573, 4294901760
        %575 = vmatmul.f32.gmra.mxu0 %v574
        %v576 = vpop.f32.mrf.mxu0
        %v577 = vadd.f32 0.0, %v576
        %v578 = vand.u32 %v381, 4294901760
        %v579 = vsub.f32 %v381, %v578
        %v580 = vand.u32 %v579, 4294901760
        %v581 = vsub.f32 %v579, %v580
        %v582 = vand.u32 %v581, 4294901760
        %583 = vmatmul.f32.gmra.mxu0 %v582
        %v584 = vpop.f32.mrf.mxu0
        %v585 = vadd.f32 0.0, %v584
        %v586 = vand.u32 %v384, 4294901760
        %v587 = vsub.f32 %v384, %v586
        %v588 = vand.u32 %v587, 4294901760
        %v589 = vsub.f32 %v587, %v588
        %v590 = vand.u32 %v589, 4294901760
        %591 = vmatmul.f32.gmra.mxu0 %v590
        %v592 = vpop.f32.mrf.mxu0
        %v593 = vadd.f32 0.0, %v592
        %v594 = vand.u32 %v387, 4294901760
        %v595 = vsub.f32 %v387, %v594
        %v596 = vand.u32 %v595, 4294901760
        %v597 = vsub.f32 %v595, %v596
        %v598 = vand.u32 %v597, 4294901760
        %599 = vmatmul.f32.gmra.mxu0 %v598
        %v600 = vpop.f32.mrf.mxu0
        %v601 = vadd.f32 0.0, %v600
        %v602 = vand.u32 %v390, 4294901760
        %v603 = vsub.f32 %v390, %v602
        %v604 = vand.u32 %v603, 4294901760
        %v605 = vsub.f32 %v603, %v604
        %v606 = vand.u32 %v605, 4294901760
        %607 = vmatmul.f32.gmra.mxu0 %v606
        %v608 = vpop.f32.mrf.mxu0
        %v609 = vadd.f32 0.0, %v608
        %v610 = vand.u32 %v393, 4294901760
        %v611 = vsub.f32 %v393, %v610
        %v612 = vand.u32 %v611, 4294901760
        %v613 = vsub.f32 %v611, %v612
        %v614 = vand.u32 %v613, 4294901760
        %615 = vmatmul.f32.gmra.mxu0 %v614
        %v616 = vpop.f32.mrf.mxu0
        %v617 = vadd.f32 0.0, %v616
        %v618 = vand.u32 %v396, 4294901760
        %v619 = vsub.f32 %v396, %v618
        %v620 = vand.u32 %v619, 4294901760
        %v621 = vsub.f32 %v619, %v620
        %v622 = vand.u32 %v621, 4294901760
        %623 = vmatmul.f32.gmra.mxu0 %v622
        %v624 = vpop.f32.mrf.mxu0
        %v625 = vadd.f32 0.0, %v624
        %v626 = vand.u32 %v399, 4294901760
        %v627 = vsub.f32 %v399, %v626
        %v628 = vand.u32 %v627, 4294901760
        %v629 = vsub.f32 %v627, %v628
        %v630 = vand.u32 %v629, 4294901760
        %631 = vmatmul.f32.gmra.mxu0 %v630
        %v632 = vpop.f32.mrf.mxu0
        %v633 = vadd.f32 0.0, %v632
        %v634 = vand.u32 %v402, 4294901760
        %v635 = vsub.f32 %v402, %v634
        %v636 = vand.u32 %v635, 4294901760
        %v637 = vsub.f32 %v635, %v636
        %v638 = vand.u32 %v637, 4294901760
        %639 = vmatmul.f32.gmra.mxu0 %v638
        %v640 = vpop.f32.mrf.mxu0
        %v641 = vadd.f32 0.0, %v640
        %v642 = vand.u32 %v405, 4294901760
        %v643 = vsub.f32 %v405, %v642
        %v644 = vand.u32 %v643, 4294901760
        %v645 = vsub.f32 %v643, %v644
        %v646 = vand.u32 %v645, 4294901760
        %647 = vmatmul.f32.gmra.mxu0 %v646
        %v648 = vpop.f32.mrf.mxu0
        %v649 = vadd.f32 0.0, %v648
        %v650 = vand.u32 %v408, 4294901760
        %v651 = vsub.f32 %v408, %v650
        %v652 = vand.u32 %v651, 4294901760
        %v653 = vsub.f32 %v651, %v652
        %v654 = vand.u32 %v653, 4294901760
        %655 = vmatmul.f32.gmra.mxu0 %v654
        %v656 = vpop.f32.mrf.mxu0
        %v657 = vadd.f32 0.0, %v656
        %v658 = vand.u32 %v411, 4294901760
        %v659 = vsub.f32 %v411, %v658
        %v660 = vand.u32 %v659, 4294901760
        %v661 = vsub.f32 %v659, %v660
        %v662 = vand.u32 %v661, 4294901760
        %663 = vmatmul.f32.gmra.mxu0 %v662
        %v664 = vpop.f32.mrf.mxu0
        %v665 = vadd.f32 0.0, %v664
        %v666 = vand.u32 %v414, 4294901760
        %v667 = vsub.f32 %v414, %v666
        %v668 = vand.u32 %v667, 4294901760
        %v669 = vsub.f32 %v667, %v668
        %v670 = vand.u32 %v669, 4294901760
        %671 = vmatmul.f32.gmra.mxu0 %v670
        %v672 = vpop.f32.mrf.mxu0
        %v673 = vadd.f32 0.0, %v672
        %v674 = vand.u32 %v417, 4294901760
        %v675 = vsub.f32 %v417, %v674
        %v676 = vand.u32 %v675, 4294901760
        %v677 = vsub.f32 %v675, %v676
        %v678 = vand.u32 %v677, 4294901760
        %679 = vmatmul.f32.gmra.mxu0 %v678
        %v680 = vpop.f32.mrf.mxu0
        %v681 = vadd.f32 0.0, %v680
        %v682 = vand.u32 %v420, 4294901760
        %v683 = vsub.f32 %v420, %v682
        %v684 = vand.u32 %v683, 4294901760
        %v685 = vsub.f32 %v683, %v684
        %v686 = vand.u32 %v685, 4294901760
        %687 = vmatmul.f32.gmra.mxu0 %v686
        %v688 = vpop.f32.mrf.mxu0
        %v689 = vadd.f32 0.0, %v688
        %v690 = vand.u32 %v423, 4294901760
        %v691 = vsub.f32 %v423, %v690
        %v692 = vand.u32 %v691, 4294901760
        %v693 = vsub.f32 %v691, %v692
        %v694 = vand.u32 %v693, 4294901760
        %695 = vmatmul.f32.gmra.mxu0 %v694
        %v696 = vpop.f32.mrf.mxu0
        %v697 = vadd.f32 0.0, %v696
        %v698 = vand.u32 %v426, 4294901760
        %v699 = vsub.f32 %v426, %v698
        %v700 = vand.u32 %v699, 4294901760
        %v701 = vsub.f32 %v699, %v700
        %v702 = vand.u32 %v701, 4294901760
        %703 = vmatmul.f32.gmra.mxu0 %v702
        %v704 = vpop.f32.mrf.mxu0
        %v705 = vadd.f32 0.0, %v704
        %v706 = vand.u32 %v429, 4294901760
        %v707 = vsub.f32 %v429, %v706
        %v708 = vand.u32 %v707, 4294901760
        %v709 = vsub.f32 %v707, %v708
        %v710 = vand.u32 %v709, 4294901760
        %711 = vmatmul.f32.gmra.mxu0 %v710
        %v712 = vpop.f32.mrf.mxu0
        %v713 = vadd.f32 0.0, %v712
        %v714 = vand.u32 %v432, 4294901760
        %v715 = vsub.f32 %v432, %v714
        %v716 = vand.u32 %v715, 4294901760
        %v717 = vsub.f32 %v715, %v716
        %v718 = vand.u32 %v717, 4294901760
        %719 = vmatmul.f32.gmra.mxu0 %v718
        %v720 = vpop.f32.mrf.mxu0
        %v721 = vadd.f32 0.0, %v720
        %v722 = vand.u32 %v435, 4294901760
        %v723 = vsub.f32 %v435, %v722
        %v724 = vand.u32 %v723, 4294901760
        %v725 = vsub.f32 %v723, %v724
        %v726 = vand.u32 %v725, 4294901760
        %727 = vmatmul.f32.gmra.mxu0 %v726
        %v728 = vpop.f32.mrf.mxu0
        %v729 = vadd.f32 0.0, %v728
        %v730 = vand.u32 %v438, 4294901760
        %v731 = vsub.f32 %v438, %v730
        %v732 = vand.u32 %v731, 4294901760
        %v733 = vsub.f32 %v731, %v732
        %v734 = vand.u32 %v733, 4294901760
        %735 = vmatmul.f32.gmra.mxu0 %v734
        %v736 = vpop.f32.mrf.mxu0
        %v737 = vadd.f32 0.0, %v736
        %v738 = vand.u32 %v441, 4294901760
        %v739 = vsub.f32 %v441, %v738
        %v740 = vand.u32 %v739, 4294901760
        %v741 = vsub.f32 %v739, %v740
        %v742 = vand.u32 %v741, 4294901760
        %743 = vmatmul.f32.gmra.mxu0 %v742
        %v744 = vpop.f32.mrf.mxu0
        %v745 = vadd.f32 0.0, %v744
        %v746 = vand.u32 %v444, 4294901760
        %v747 = vsub.f32 %v444, %v746
        %v748 = vand.u32 %v747, 4294901760
        %v749 = vsub.f32 %v747, %v748
        %v750 = vand.u32 %v749, 4294901760
        %751 = vmatmul.f32.gmra.mxu0 %v750
        %v752 = vpop.f32.mrf.mxu0
        %v753 = vadd.f32 0.0, %v752
        %v754 = vand.u32 %v447, 4294901760
        %v755 = vsub.f32 %v447, %v754
        %v756 = vand.u32 %v755, 4294901760
        %v757 = vsub.f32 %v755, %v756
        %v758 = vand.u32 %v757, 4294901760
        %759 = vmatmul.f32.gmra.mxu0 %v758
        %v760 = vpop.f32.mrf.mxu0
        %v761 = vadd.f32 0.0, %v760
        %v762 = vand.u32 %v450, 4294901760
        %v763 = vsub.f32 %v450, %v762
        %v764 = vand.u32 %v763, 4294901760
        %v765 = vsub.f32 %v763, %v764
        %v766 = vand.u32 %v765, 4294901760
        %767 = vmatmul.f32.gmra.mxu0 %v766
        %v768 = vpop.f32.mrf.mxu0
        %v769 = vadd.f32 0.0, %v768
        %v770 = vand.u32 %v453, 4294901760
        %v771 = vsub.f32 %v453, %v770
        %v772 = vand.u32 %v771, 4294901760
        %v773 = vsub.f32 %v771, %v772
        %v774 = vand.u32 %v773, 4294901760
        %775 = vmatmul.f32.gmra.mxu0 %v774
        %v776 = vpop.f32.mrf.mxu0
        %v777 = vadd.f32 0.0, %v776
        %v778 = vand.u32 %v456, 4294901760
        %v779 = vsub.f32 %v456, %v778
        %v780 = vand.u32 %v779, 4294901760
        %v781 = vsub.f32 %v779, %v780
        %v782 = vand.u32 %v781, 4294901760
        %783 = vmatmul.f32.gmra.mxu0 %v782
        %v784 = vpop.f32.mrf.mxu0
        %v785 = vadd.f32 0.0, %v784
        %v786 = vand.u32 %v459, 4294901760
        %v787 = vsub.f32 %v459, %v786
        %v788 = vand.u32 %v787, 4294901760
        %v789 = vsub.f32 %v787, %v788
        %v790 = vand.u32 %v789, 4294901760
        %791 = vmatmul.f32.gmra.mxu0 %v790
        %v792 = vpop.f32.mrf.mxu0
        %v793 = vadd.f32 0.0, %v792
        %v794 = vand.u32 %v462, 4294901760
        %v795 = vsub.f32 %v462, %v794
        %v796 = vand.u32 %v795, 4294901760
        %v797 = vsub.f32 %v795, %v796
        %v798 = vand.u32 %v797, 4294901760
        %799 = vmatmul.f32.gmra.mxu0 %v798
        %v800 = vpop.f32.mrf.mxu0
        %v801 = vadd.f32 0.0, %v800
        %802 = vdwg.mxu0
        %803 = vmatpush.msra.mxu0 0.0
        %804 = vmatpush.msra.mxu0 0.0
        %805 = vmatpush.msra.mxu0 0.0
        %806 = vmatpush.msra.mxu0 0.0
        %807 = vmatpush.msra.mxu0 0.0
        %808 = vmatpush.msra.mxu0 0.0
        %809 = vmatpush.msra.mxu0 0.0
        %810 = vmatpush.msra.mxu0 0.0
        %811 = vmatpush.msra.mxu0 0.0
        %812 = vmatpush.msra.mxu0 0.0
        %813 = vmatpush.msra.mxu0 0.0
        %814 = vmatpush.msra.mxu0 0.0
        %815 = vmatpush.msra.mxu0 0.0
        %816 = vmatpush.msra.mxu0 0.0
        %v817 = vand.u32 %v296, 4294901760
        %v818 = vsub.f32 %v296, %v817
        %v819 = vand.u32 %v818, 4294901760
        %v820 = vsub.f32 %v818, %v819
        %v821 = vand.u32 %v820, 4294901760
        %822 = vmatpush.msra.mxu0 %v821
        %v823 = vand.u32 %v295, 4294901760
        %v824 = vsub.f32 %v295, %v823
        %v825 = vand.u32 %v824, 4294901760
        %v826 = vsub.f32 %v824, %v825
        %v827 = vand.u32 %v826, 4294901760
        %828 = vmatpush.msra.mxu0 %v827
        %v829 = vand.u32 %v345, 4294901760
        %830 = vmatmul.f32.gmra.mxu0 %v829
        %v831 = vpop.f32.mrf.mxu0
        %v832 = vadd.f32 %v489, %v831
        %v833 = vand.u32 %v348, 4294901760
        %834 = vmatmul.f32.gmra.mxu0 %v833
        %v835 = vpop.f32.mrf.mxu0
        %v836 = vadd.f32 %v497, %v835
        %v837 = vand.u32 %v351, 4294901760
        %838 = vmatmul.f32.gmra.mxu0 %v837
        %v839 = vpop.f32.mrf.mxu0
        %v840 = vadd.f32 %v505, %v839
        %v841 = vand.u32 %v354, 4294901760
        %842 = vmatmul.f32.gmra.mxu0 %v841
        %v843 = vpop.f32.mrf.mxu0
        %v844 = vadd.f32 %v513, %v843
        %v845 = vand.u32 %v357, 4294901760
        %846 = vmatmul.f32.gmra.mxu0 %v845
        %v847 = vpop.f32.mrf.mxu0
        %v848 = vadd.f32 %v521, %v847
        %v849 = vand.u32 %v360, 4294901760
        %850 = vmatmul.f32.gmra.mxu0 %v849
        %v851 = vpop.f32.mrf.mxu0
        %v852 = vadd.f32 %v529, %v851
        %v853 = vand.u32 %v363, 4294901760
        %854 = vmatmul.f32.gmra.mxu0 %v853
        %v855 = vpop.f32.mrf.mxu0
        %v856 = vadd.f32 %v537, %v855
        %v857 = vand.u32 %v366, 4294901760
        %858 = vmatmul.f32.gmra.mxu0 %v857
        %v859 = vpop.f32.mrf.mxu0
        %v860 = vadd.f32 %v545, %v859
        %v861 = vand.u32 %v369, 4294901760
        %862 = vmatmul.f32.gmra.mxu0 %v861
        %v863 = vpop.f32.mrf.mxu0
        %v864 = vadd.f32 %v553, %v863
        %v865 = vand.u32 %v372, 4294901760
        %866 = vmatmul.f32.gmra.mxu0 %v865
        %v867 = vpop.f32.mrf.mxu0
        %v868 = vadd.f32 %v561, %v867
        %v869 = vand.u32 %v375, 4294901760
        %870 = vmatmul.f32.gmra.mxu0 %v869
        %v871 = vpop.f32.mrf.mxu0
        %v872 = vadd.f32 %v569, %v871
        %v873 = vand.u32 %v378, 4294901760
        %874 = vmatmul.f32.gmra.mxu0 %v873
        %v875 = vpop.f32.mrf.mxu0
        %v876 = vadd.f32 %v577, %v875
        %v877 = vand.u32 %v381, 4294901760
        %878 = vmatmul.f32.gmra.mxu0 %v877
        %v879 = vpop.f32.mrf.mxu0
        %v880 = vadd.f32 %v585, %v879
        %v881 = vand.u32 %v384, 4294901760
        %882 = vmatmul.f32.gmra.mxu0 %v881
        %v883 = vpop.f32.mrf.mxu0
        %v884 = vadd.f32 %v593, %v883
        %v885 = vand.u32 %v387, 4294901760
        %886 = vmatmul.f32.gmra.mxu0 %v885
        %v887 = vpop.f32.mrf.mxu0
        %v888 = vadd.f32 %v601, %v887
        %v889 = vand.u32 %v390, 4294901760
        %890 = vmatmul.f32.gmra.mxu0 %v889
        %v891 = vpop.f32.mrf.mxu0
        %v892 = vadd.f32 %v609, %v891
        %v893 = vand.u32 %v393, 4294901760
        %894 = vmatmul.f32.gmra.mxu0 %v893
        %v895 = vpop.f32.mrf.mxu0
        %v896 = vadd.f32 %v617, %v895
        %v897 = vand.u32 %v396, 4294901760
        %898 = vmatmul.f32.gmra.mxu0 %v897
        %v899 = vpop.f32.mrf.mxu0
        %v900 = vadd.f32 %v625, %v899
        %v901 = vand.u32 %v399, 4294901760
        %902 = vmatmul.f32.gmra.mxu0 %v901
        %v903 = vpop.f32.mrf.mxu0
        %v904 = vadd.f32 %v633, %v903
        %v905 = vand.u32 %v402, 4294901760
        %906 = vmatmul.f32.gmra.mxu0 %v905
        %v907 = vpop.f32.mrf.mxu0
        %v908 = vadd.f32 %v641, %v907
        %v909 = vand.u32 %v405, 4294901760
        %910 = vmatmul.f32.gmra.mxu0 %v909
        %v911 = vpop.f32.mrf.mxu0
        %v912 = vadd.f32 %v649, %v911
        %v913 = vand.u32 %v408, 4294901760
        %914 = vmatmul.f32.gmra.mxu0 %v913
        %v915 = vpop.f32.mrf.mxu0
        %v916 = vadd.f32 %v657, %v915
        %v917 = vand.u32 %v411, 4294901760
        %918 = vmatmul.f32.gmra.mxu0 %v917
        %v919 = vpop.f32.mrf.mxu0
        %v920 = vadd.f32 %v665, %v919
        %v921 = vand.u32 %v414, 4294901760
        %922 = vmatmul.f32.gmra.mxu0 %v921
        %v923 = vpop.f32.mrf.mxu0
        %v924 = vadd.f32 %v673, %v923
        %v925 = vand.u32 %v417, 4294901760
        %926 = vmatmul.f32.gmra.mxu0 %v925
        %v927 = vpop.f32.mrf.mxu0
        %v928 = vadd.f32 %v681, %v927
        %v929 = vand.u32 %v420, 4294901760
        %930 = vmatmul.f32.gmra.mxu0 %v929
        %v931 = vpop.f32.mrf.mxu0
        %v932 = vadd.f32 %v689, %v931
        %v933 = vand.u32 %v423, 4294901760
        %934 = vmatmul.f32.gmra.mxu0 %v933
        %v935 = vpop.f32.mrf.mxu0
        %v936 = vadd.f32 %v697, %v935
        %v937 = vand.u32 %v426, 4294901760
        %938 = vmatmul.f32.gmra.mxu0 %v937
        %v939 = vpop.f32.mrf.mxu0
        %v940 = vadd.f32 %v705, %v939
        %v941 = vand.u32 %v429, 4294901760
        %942 = vmatmul.f32.gmra.mxu0 %v941
        %v943 = vpop.f32.mrf.mxu0
        %v944 = vadd.f32 %v713, %v943
        %v945 = vand.u32 %v432, 4294901760
        %946 = vmatmul.f32.gmra.mxu0 %v945
        %v947 = vpop.f32.mrf.mxu0
        %v948 = vadd.f32 %v721, %v947
        %v949 = vand.u32 %v435, 4294901760
        %950 = vmatmul.f32.gmra.mxu0 %v949
        %v951 = vpop.f32.mrf.mxu0
        %v952 = vadd.f32 %v729, %v951
        %v953 = vand.u32 %v438, 4294901760
        %954 = vmatmul.f32.gmra.mxu0 %v953
        %v955 = vpop.f32.mrf.mxu0
        %v956 = vadd.f32 %v737, %v955
        %v957 = vand.u32 %v441, 4294901760
        %958 = vmatmul.f32.gmra.mxu0 %v957
        %v959 = vpop.f32.mrf.mxu0
        %v960 = vadd.f32 %v745, %v959
        %v961 = vand.u32 %v444, 4294901760
        %962 = vmatmul.f32.gmra.mxu0 %v961
        %v963 = vpop.f32.mrf.mxu0
        %v964 = vadd.f32 %v753, %v963
        %v965 = vand.u32 %v447, 4294901760
        %966 = vmatmul.f32.gmra.mxu0 %v965
        %v967 = vpop.f32.mrf.mxu0
        %v968 = vadd.f32 %v761, %v967
        %v969 = vand.u32 %v450, 4294901760
        %970 = vmatmul.f32.gmra.mxu0 %v969
        %v971 = vpop.f32.mrf.mxu0
        %v972 = vadd.f32 %v769, %v971
        %v973 = vand.u32 %v453, 4294901760
        %974 = vmatmul.f32.gmra.mxu0 %v973
        %v975 = vpop.f32.mrf.mxu0
        %v976 = vadd.f32 %v777, %v975
        %v977 = vand.u32 %v456, 4294901760
        %978 = vmatmul.f32.gmra.mxu0 %v977
        %v979 = vpop.f32.mrf.mxu0
        %v980 = vadd.f32 %v785, %v979
        %v981 = vand.u32 %v459, 4294901760
        %982 = vmatmul.f32.gmra.mxu0 %v981
        %v983 = vpop.f32.mrf.mxu0
        %v984 = vadd.f32 %v793, %v983
        %v985 = vand.u32 %v462, 4294901760
        %986 = vmatmul.f32.gmra.mxu0 %v985
        %v987 = vpop.f32.mrf.mxu0
        %v988 = vadd.f32 %v801, %v987
        %989 = vdwg.mxu0
        %990 = vmatpush.msra.mxu0 0.0
        %991 = vmatpush.msra.mxu0 0.0
        %992 = vmatpush.msra.mxu0 0.0
        %993 = vmatpush.msra.mxu0 0.0
        %994 = vmatpush.msra.mxu0 0.0
        %995 = vmatpush.msra.mxu0 0.0
        %996 = vmatpush.msra.mxu0 0.0
        %997 = vmatpush.msra.mxu0 0.0
        %998 = vmatpush.msra.mxu0 0.0
        %999 = vmatpush.msra.mxu0 0.0
        %1000 = vmatpush.msra.mxu0 0.0
        %1001 = vmatpush.msra.mxu0 0.0
        %1002 = vmatpush.msra.mxu0 0.0
        %1003 = vmatpush.msra.mxu0 0.0
        %v1004 = vand.u32 %v296, 4294901760
        %v1005 = vsub.f32 %v296, %v1004
        %1006 = vmatpush.msra.mxu0 %v1005
        %v1007 = vand.u32 %v295, 4294901760
        %v1008 = vsub.f32 %v295, %v1007
        %1009 = vmatpush.msra.mxu0 %v1008
        %v1010 = vand.u32 %v345, 4294901760
        %v1011 = vsub.f32 %v345, %v1010
        %1012 = vmatmul.f32.gmra.mxu0 %v1011
        %v1013 = vpop.f32.mrf.mxu0
        %v1014 = vadd.f32 %v832, %v1013
        %v1015 = vand.u32 %v348, 4294901760
        %v1016 = vsub.f32 %v348, %v1015
        %1017 = vmatmul.f32.gmra.mxu0 %v1016
        %v1018 = vpop.f32.mrf.mxu0
        %v1019 = vadd.f32 %v836, %v1018
        %v1020 = vand.u32 %v351, 4294901760
        %v1021 = vsub.f32 %v351, %v1020
        %1022 = vmatmul.f32.gmra.mxu0 %v1021
        %v1023 = vpop.f32.mrf.mxu0
        %v1024 = vadd.f32 %v840, %v1023
        %v1025 = vand.u32 %v354, 4294901760
        %v1026 = vsub.f32 %v354, %v1025
        %1027 = vmatmul.f32.gmra.mxu0 %v1026
        %v1028 = vpop.f32.mrf.mxu0
        %v1029 = vadd.f32 %v844, %v1028
        %v1030 = vand.u32 %v357, 4294901760
        %v1031 = vsub.f32 %v357, %v1030
        %1032 = vmatmul.f32.gmra.mxu0 %v1031
        %v1033 = vpop.f32.mrf.mxu0
        %v1034 = vadd.f32 %v848, %v1033
        %v1035 = vand.u32 %v360, 4294901760
        %v1036 = vsub.f32 %v360, %v1035
        %1037 = vmatmul.f32.gmra.mxu0 %v1036
        %v1038 = vpop.f32.mrf.mxu0
        %v1039 = vadd.f32 %v852, %v1038
        %v1040 = vand.u32 %v363, 4294901760
        %v1041 = vsub.f32 %v363, %v1040
        %1042 = vmatmul.f32.gmra.mxu0 %v1041
        %v1043 = vpop.f32.mrf.mxu0
        %v1044 = vadd.f32 %v856, %v1043
        %v1045 = vand.u32 %v366, 4294901760
        %v1046 = vsub.f32 %v366, %v1045
        %1047 = vmatmul.f32.gmra.mxu0 %v1046
        %v1048 = vpop.f32.mrf.mxu0
        %v1049 = vadd.f32 %v860, %v1048
        %v1050 = vand.u32 %v369, 4294901760
        %v1051 = vsub.f32 %v369, %v1050
        %1052 = vmatmul.f32.gmra.mxu0 %v1051
        %v1053 = vpop.f32.mrf.mxu0
        %v1054 = vadd.f32 %v864, %v1053
        %v1055 = vand.u32 %v372, 4294901760
        %v1056 = vsub.f32 %v372, %v1055
        %1057 = vmatmul.f32.gmra.mxu0 %v1056
        %v1058 = vpop.f32.mrf.mxu0
        %v1059 = vadd.f32 %v868, %v1058
        %v1060 = vand.u32 %v375, 4294901760
        %v1061 = vsub.f32 %v375, %v1060
        %1062 = vmatmul.f32.gmra.mxu0 %v1061
        %v1063 = vpop.f32.mrf.mxu0
        %v1064 = vadd.f32 %v872, %v1063
        %v1065 = vand.u32 %v378, 4294901760
        %v1066 = vsub.f32 %v378, %v1065
        %1067 = vmatmul.f32.gmra.mxu0 %v1066
        %v1068 = vpop.f32.mrf.mxu0
        %v1069 = vadd.f32 %v876, %v1068
        %v1070 = vand.u32 %v381, 4294901760
        %v1071 = vsub.f32 %v381, %v1070
        %1072 = vmatmul.f32.gmra.mxu0 %v1071
        %v1073 = vpop.f32.mrf.mxu0
        %v1074 = vadd.f32 %v880, %v1073
        %v1075 = vand.u32 %v384, 4294901760
        %v1076 = vsub.f32 %v384, %v1075
        %1077 = vmatmul.f32.gmra.mxu0 %v1076
        %v1078 = vpop.f32.mrf.mxu0
        %v1079 = vadd.f32 %v884, %v1078
        %v1080 = vand.u32 %v387, 4294901760
        %v1081 = vsub.f32 %v387, %v1080
        %1082 = vmatmul.f32.gmra.mxu0 %v1081
        %v1083 = vpop.f32.mrf.mxu0
        %v1084 = vadd.f32 %v888, %v1083
        %v1085 = vand.u32 %v390, 4294901760
        %v1086 = vsub.f32 %v390, %v1085
        %1087 = vmatmul.f32.gmra.mxu0 %v1086
        %v1088 = vpop.f32.mrf.mxu0
        %v1089 = vadd.f32 %v892, %v1088
        %v1090 = vand.u32 %v393, 4294901760
        %v1091 = vsub.f32 %v393, %v1090
        %1092 = vmatmul.f32.gmra.mxu0 %v1091
        %v1093 = vpop.f32.mrf.mxu0
        %v1094 = vadd.f32 %v896, %v1093
        %v1095 = vand.u32 %v396, 4294901760
        %v1096 = vsub.f32 %v396, %v1095
        %1097 = vmatmul.f32.gmra.mxu0 %v1096
        %v1098 = vpop.f32.mrf.mxu0
        %v1099 = vadd.f32 %v900, %v1098
        %v1100 = vand.u32 %v399, 4294901760
        %v1101 = vsub.f32 %v399, %v1100
        %1102 = vmatmul.f32.gmra.mxu0 %v1101
        %v1103 = vpop.f32.mrf.mxu0
        %v1104 = vadd.f32 %v904, %v1103
        %v1105 = vand.u32 %v402, 4294901760
        %v1106 = vsub.f32 %v402, %v1105
        %1107 = vmatmul.f32.gmra.mxu0 %v1106
        %v1108 = vpop.f32.mrf.mxu0
        %v1109 = vadd.f32 %v908, %v1108
        %v1110 = vand.u32 %v405, 4294901760
        %v1111 = vsub.f32 %v405, %v1110
        %1112 = vmatmul.f32.gmra.mxu0 %v1111
        %v1113 = vpop.f32.mrf.mxu0
        %v1114 = vadd.f32 %v912, %v1113
        %v1115 = vand.u32 %v408, 4294901760
        %v1116 = vsub.f32 %v408, %v1115
        %1117 = vmatmul.f32.gmra.mxu0 %v1116
        %v1118 = vpop.f32.mrf.mxu0
        %v1119 = vadd.f32 %v916, %v1118
        %v1120 = vand.u32 %v411, 4294901760
        %v1121 = vsub.f32 %v411, %v1120
        %1122 = vmatmul.f32.gmra.mxu0 %v1121
        %v1123 = vpop.f32.mrf.mxu0
        %v1124 = vadd.f32 %v920, %v1123
        %v1125 = vand.u32 %v414, 4294901760
        %v1126 = vsub.f32 %v414, %v1125
        %1127 = vmatmul.f32.gmra.mxu0 %v1126
        %v1128 = vpop.f32.mrf.mxu0
        %v1129 = vadd.f32 %v924, %v1128
        %v1130 = vand.u32 %v417, 4294901760
        %v1131 = vsub.f32 %v417, %v1130
        %1132 = vmatmul.f32.gmra.mxu0 %v1131
        %v1133 = vpop.f32.mrf.mxu0
        %v1134 = vadd.f32 %v928, %v1133
        %v1135 = vand.u32 %v420, 4294901760
        %v1136 = vsub.f32 %v420, %v1135
        %1137 = vmatmul.f32.gmra.mxu0 %v1136
        %v1138 = vpop.f32.mrf.mxu0
        %v1139 = vadd.f32 %v932, %v1138
        %v1140 = vand.u32 %v423, 4294901760
        %v1141 = vsub.f32 %v423, %v1140
        %1142 = vmatmul.f32.gmra.mxu0 %v1141
        %v1143 = vpop.f32.mrf.mxu0
        %v1144 = vadd.f32 %v936, %v1143
        %v1145 = vand.u32 %v426, 4294901760
        %v1146 = vsub.f32 %v426, %v1145
        %1147 = vmatmul.f32.gmra.mxu0 %v1146
        %v1148 = vpop.f32.mrf.mxu0
        %v1149 = vadd.f32 %v940, %v1148
        %v1150 = vand.u32 %v429, 4294901760
        %v1151 = vsub.f32 %v429, %v1150
        %1152 = vmatmul.f32.gmra.mxu0 %v1151
        %v1153 = vpop.f32.mrf.mxu0
        %v1154 = vadd.f32 %v944, %v1153
        %v1155 = vand.u32 %v432, 4294901760
        %v1156 = vsub.f32 %v432, %v1155
        %1157 = vmatmul.f32.gmra.mxu0 %v1156
        %v1158 = vpop.f32.mrf.mxu0
        %v1159 = vadd.f32 %v948, %v1158
        %v1160 = vand.u32 %v435, 4294901760
        %v1161 = vsub.f32 %v435, %v1160
        %1162 = vmatmul.f32.gmra.mxu0 %v1161
        %v1163 = vpop.f32.mrf.mxu0
        %v1164 = vadd.f32 %v952, %v1163
        %v1165 = vand.u32 %v438, 4294901760
        %v1166 = vsub.f32 %v438, %v1165
        %1167 = vmatmul.f32.gmra.mxu0 %v1166
        %v1168 = vpop.f32.mrf.mxu0
        %v1169 = vadd.f32 %v956, %v1168
        %v1170 = vand.u32 %v441, 4294901760
        %v1171 = vsub.f32 %v441, %v1170
        %1172 = vmatmul.f32.gmra.mxu0 %v1171
        %v1173 = vpop.f32.mrf.mxu0
        %v1174 = vadd.f32 %v960, %v1173
        %v1175 = vand.u32 %v444, 4294901760
        %v1176 = vsub.f32 %v444, %v1175
        %1177 = vmatmul.f32.gmra.mxu0 %v1176
        %v1178 = vpop.f32.mrf.mxu0
        %v1179 = vadd.f32 %v964, %v1178
        %v1180 = vand.u32 %v447, 4294901760
        %v1181 = vsub.f32 %v447, %v1180
        %1182 = vmatmul.f32.gmra.mxu0 %v1181
        %v1183 = vpop.f32.mrf.mxu0
        %v1184 = vadd.f32 %v968, %v1183
        %v1185 = vand.u32 %v450, 4294901760
        %v1186 = vsub.f32 %v450, %v1185
        %1187 = vmatmul.f32.gmra.mxu0 %v1186
        %v1188 = vpop.f32.mrf.mxu0
        %v1189 = vadd.f32 %v972, %v1188
        %v1190 = vand.u32 %v453, 4294901760
        %v1191 = vsub.f32 %v453, %v1190
        %1192 = vmatmul.f32.gmra.mxu0 %v1191
        %v1193 = vpop.f32.mrf.mxu0
        %v1194 = vadd.f32 %v976, %v1193
        %v1195 = vand.u32 %v456, 4294901760
        %v1196 = vsub.f32 %v456, %v1195
        %1197 = vmatmul.f32.gmra.mxu0 %v1196
        %v1198 = vpop.f32.mrf.mxu0
        %v1199 = vadd.f32 %v980, %v1198
        %v1200 = vand.u32 %v459, 4294901760
        %v1201 = vsub.f32 %v459, %v1200
        %1202 = vmatmul.f32.gmra.mxu0 %v1201
        %v1203 = vpop.f32.mrf.mxu0
        %v1204 = vadd.f32 %v984, %v1203
        %v1205 = vand.u32 %v462, 4294901760
        %v1206 = vsub.f32 %v462, %v1205
        %1207 = vmatmul.f32.gmra.mxu0 %v1206
        %v1208 = vpop.f32.mrf.mxu0
        %v1209 = vadd.f32 %v988, %v1208
        %1210 = vdwg.mxu0
        %1211 = vmatpush.msra.mxu0 0.0
        %1212 = vmatpush.msra.mxu0 0.0
        %1213 = vmatpush.msra.mxu0 0.0
        %1214 = vmatpush.msra.mxu0 0.0
        %1215 = vmatpush.msra.mxu0 0.0
        %1216 = vmatpush.msra.mxu0 0.0
        %1217 = vmatpush.msra.mxu0 0.0
        %1218 = vmatpush.msra.mxu0 0.0
        %1219 = vmatpush.msra.mxu0 0.0
        %1220 = vmatpush.msra.mxu0 0.0
        %1221 = vmatpush.msra.mxu0 0.0
        %1222 = vmatpush.msra.mxu0 0.0
        %1223 = vmatpush.msra.mxu0 0.0
        %1224 = vmatpush.msra.mxu0 0.0
        %v1225 = vand.u32 %v296, 4294901760
        %1226 = vmatpush.msra.mxu0 %v1225
        %v1227 = vand.u32 %v295, 4294901760
        %1228 = vmatpush.msra.mxu0 %v1227
        %v1229 = vand.u32 %v345, 4294901760
        %v1230 = vsub.f32 %v345, %v1229
        %v1231 = vand.u32 %v1230, 4294901760
        %1232 = vmatmul.f32.gmra.mxu0 %v1231
        %v1233 = vpop.f32.mrf.mxu0
        %v1234 = vadd.f32 %v1014, %v1233
        %v1235 = vand.u32 %v348, 4294901760
        %v1236 = vsub.f32 %v348, %v1235
        %v1237 = vand.u32 %v1236, 4294901760
        %1238 = vmatmul.f32.gmra.mxu0 %v1237
        %v1239 = vpop.f32.mrf.mxu0
        %v1240 = vadd.f32 %v1019, %v1239
        %v1241 = vand.u32 %v351, 4294901760
        %v1242 = vsub.f32 %v351, %v1241
        %v1243 = vand.u32 %v1242, 4294901760
        %1244 = vmatmul.f32.gmra.mxu0 %v1243
        %v1245 = vpop.f32.mrf.mxu0
        %v1246 = vadd.f32 %v1024, %v1245
        %v1247 = vand.u32 %v354, 4294901760
        %v1248 = vsub.f32 %v354, %v1247
        %v1249 = vand.u32 %v1248, 4294901760
        %1250 = vmatmul.f32.gmra.mxu0 %v1249
        %v1251 = vpop.f32.mrf.mxu0
        %v1252 = vadd.f32 %v1029, %v1251
        %v1253 = vand.u32 %v357, 4294901760
        %v1254 = vsub.f32 %v357, %v1253
        %v1255 = vand.u32 %v1254, 4294901760
        %1256 = vmatmul.f32.gmra.mxu0 %v1255
        %v1257 = vpop.f32.mrf.mxu0
        %v1258 = vadd.f32 %v1034, %v1257
        %v1259 = vand.u32 %v360, 4294901760
        %v1260 = vsub.f32 %v360, %v1259
        %v1261 = vand.u32 %v1260, 4294901760
        %1262 = vmatmul.f32.gmra.mxu0 %v1261
        %v1263 = vpop.f32.mrf.mxu0
        %v1264 = vadd.f32 %v1039, %v1263
        %v1265 = vand.u32 %v363, 4294901760
        %v1266 = vsub.f32 %v363, %v1265
        %v1267 = vand.u32 %v1266, 4294901760
        %1268 = vmatmul.f32.gmra.mxu0 %v1267
        %v1269 = vpop.f32.mrf.mxu0
        %v1270 = vadd.f32 %v1044, %v1269
        %v1271 = vand.u32 %v366, 4294901760
        %v1272 = vsub.f32 %v366, %v1271
        %v1273 = vand.u32 %v1272, 4294901760
        %1274 = vmatmul.f32.gmra.mxu0 %v1273
        %v1275 = vpop.f32.mrf.mxu0
        %v1276 = vadd.f32 %v1049, %v1275
        %v1277 = vand.u32 %v369, 4294901760
        %v1278 = vsub.f32 %v369, %v1277
        %v1279 = vand.u32 %v1278, 4294901760
        %1280 = vmatmul.f32.gmra.mxu0 %v1279
        %v1281 = vpop.f32.mrf.mxu0
        %v1282 = vadd.f32 %v1054, %v1281
        %v1283 = vand.u32 %v372, 4294901760
        %v1284 = vsub.f32 %v372, %v1283
        %v1285 = vand.u32 %v1284, 4294901760
        %1286 = vmatmul.f32.gmra.mxu0 %v1285
        %v1287 = vpop.f32.mrf.mxu0
        %v1288 = vadd.f32 %v1059, %v1287
        %v1289 = vand.u32 %v375, 4294901760
        %v1290 = vsub.f32 %v375, %v1289
        %v1291 = vand.u32 %v1290, 4294901760
        %1292 = vmatmul.f32.gmra.mxu0 %v1291
        %v1293 = vpop.f32.mrf.mxu0
        %v1294 = vadd.f32 %v1064, %v1293
        %v1295 = vand.u32 %v378, 4294901760
        %v1296 = vsub.f32 %v378, %v1295
        %v1297 = vand.u32 %v1296, 4294901760
        %1298 = vmatmul.f32.gmra.mxu0 %v1297
        %v1299 = vpop.f32.mrf.mxu0
        %v1300 = vadd.f32 %v1069, %v1299
        %v1301 = vand.u32 %v381, 4294901760
        %v1302 = vsub.f32 %v381, %v1301
        %v1303 = vand.u32 %v1302, 4294901760
        %1304 = vmatmul.f32.gmra.mxu0 %v1303
        %v1305 = vpop.f32.mrf.mxu0
        %v1306 = vadd.f32 %v1074, %v1305
        %v1307 = vand.u32 %v384, 4294901760
        %v1308 = vsub.f32 %v384, %v1307
        %v1309 = vand.u32 %v1308, 4294901760
        %1310 = vmatmul.f32.gmra.mxu0 %v1309
        %v1311 = vpop.f32.mrf.mxu0
        %v1312 = vadd.f32 %v1079, %v1311
        %v1313 = vand.u32 %v387, 4294901760
        %v1314 = vsub.f32 %v387, %v1313
        %v1315 = vand.u32 %v1314, 4294901760
        %1316 = vmatmul.f32.gmra.mxu0 %v1315
        %v1317 = vpop.f32.mrf.mxu0
        %v1318 = vadd.f32 %v1084, %v1317
        %v1319 = vand.u32 %v390, 4294901760
        %v1320 = vsub.f32 %v390, %v1319
        %v1321 = vand.u32 %v1320, 4294901760
        %1322 = vmatmul.f32.gmra.mxu0 %v1321
        %v1323 = vpop.f32.mrf.mxu0
        %v1324 = vadd.f32 %v1089, %v1323
        %v1325 = vand.u32 %v393, 4294901760
        %v1326 = vsub.f32 %v393, %v1325
        %v1327 = vand.u32 %v1326, 4294901760
        %1328 = vmatmul.f32.gmra.mxu0 %v1327
        %v1329 = vpop.f32.mrf.mxu0
        %v1330 = vadd.f32 %v1094, %v1329
        %v1331 = vand.u32 %v396, 4294901760
        %v1332 = vsub.f32 %v396, %v1331
        %v1333 = vand.u32 %v1332, 4294901760
        %1334 = vmatmul.f32.gmra.mxu0 %v1333
        %v1335 = vpop.f32.mrf.mxu0
        %v1336 = vadd.f32 %v1099, %v1335
        %v1337 = vand.u32 %v399, 4294901760
        %v1338 = vsub.f32 %v399, %v1337
        %v1339 = vand.u32 %v1338, 4294901760
        %1340 = vmatmul.f32.gmra.mxu0 %v1339
        %v1341 = vpop.f32.mrf.mxu0
        %v1342 = vadd.f32 %v1104, %v1341
        %v1343 = vand.u32 %v402, 4294901760
        %v1344 = vsub.f32 %v402, %v1343
        %v1345 = vand.u32 %v1344, 4294901760
        %1346 = vmatmul.f32.gmra.mxu0 %v1345
        %v1347 = vpop.f32.mrf.mxu0
        %v1348 = vadd.f32 %v1109, %v1347
        %v1349 = vand.u32 %v405, 4294901760
        %v1350 = vsub.f32 %v405, %v1349
        %v1351 = vand.u32 %v1350, 4294901760
        %1352 = vmatmul.f32.gmra.mxu0 %v1351
        %v1353 = vpop.f32.mrf.mxu0
        %v1354 = vadd.f32 %v1114, %v1353
        %v1355 = vand.u32 %v408, 4294901760
        %v1356 = vsub.f32 %v408, %v1355
        %v1357 = vand.u32 %v1356, 4294901760
        %1358 = vmatmul.f32.gmra.mxu0 %v1357
        %v1359 = vpop.f32.mrf.mxu0
        %v1360 = vadd.f32 %v1119, %v1359
        %v1361 = vand.u32 %v411, 4294901760
        %v1362 = vsub.f32 %v411, %v1361
        %v1363 = vand.u32 %v1362, 4294901760
        %1364 = vmatmul.f32.gmra.mxu0 %v1363
        %v1365 = vpop.f32.mrf.mxu0
        %v1366 = vadd.f32 %v1124, %v1365
        %v1367 = vand.u32 %v414, 4294901760
        %v1368 = vsub.f32 %v414, %v1367
        %v1369 = vand.u32 %v1368, 4294901760
        %1370 = vmatmul.f32.gmra.mxu0 %v1369
        %v1371 = vpop.f32.mrf.mxu0
        %v1372 = vadd.f32 %v1129, %v1371
        %v1373 = vand.u32 %v417, 4294901760
        %v1374 = vsub.f32 %v417, %v1373
        %v1375 = vand.u32 %v1374, 4294901760
        %1376 = vmatmul.f32.gmra.mxu0 %v1375
        %v1377 = vpop.f32.mrf.mxu0
        %v1378 = vadd.f32 %v1134, %v1377
        %v1379 = vand.u32 %v420, 4294901760
        %v1380 = vsub.f32 %v420, %v1379
        %v1381 = vand.u32 %v1380, 4294901760
        %1382 = vmatmul.f32.gmra.mxu0 %v1381
        %v1383 = vpop.f32.mrf.mxu0
        %v1384 = vadd.f32 %v1139, %v1383
        %v1385 = vand.u32 %v423, 4294901760
        %v1386 = vsub.f32 %v423, %v1385
        %v1387 = vand.u32 %v1386, 4294901760
        %1388 = vmatmul.f32.gmra.mxu0 %v1387
        %v1389 = vpop.f32.mrf.mxu0
        %v1390 = vadd.f32 %v1144, %v1389
        %v1391 = vand.u32 %v426, 4294901760
        %v1392 = vsub.f32 %v426, %v1391
        %v1393 = vand.u32 %v1392, 4294901760
        %1394 = vmatmul.f32.gmra.mxu0 %v1393
        %v1395 = vpop.f32.mrf.mxu0
        %v1396 = vadd.f32 %v1149, %v1395
        %v1397 = vand.u32 %v429, 4294901760
        %v1398 = vsub.f32 %v429, %v1397
        %v1399 = vand.u32 %v1398, 4294901760
        %1400 = vmatmul.f32.gmra.mxu0 %v1399
        %v1401 = vpop.f32.mrf.mxu0
        %v1402 = vadd.f32 %v1154, %v1401
        %v1403 = vand.u32 %v432, 4294901760
        %v1404 = vsub.f32 %v432, %v1403
        %v1405 = vand.u32 %v1404, 4294901760
        %1406 = vmatmul.f32.gmra.mxu0 %v1405
        %v1407 = vpop.f32.mrf.mxu0
        %v1408 = vadd.f32 %v1159, %v1407
        %v1409 = vand.u32 %v435, 4294901760
        %v1410 = vsub.f32 %v435, %v1409
        %v1411 = vand.u32 %v1410, 4294901760
        %1412 = vmatmul.f32.gmra.mxu0 %v1411
        %v1413 = vpop.f32.mrf.mxu0
        %v1414 = vadd.f32 %v1164, %v1413
        %v1415 = vand.u32 %v438, 4294901760
        %v1416 = vsub.f32 %v438, %v1415
        %v1417 = vand.u32 %v1416, 4294901760
        %1418 = vmatmul.f32.gmra.mxu0 %v1417
        %v1419 = vpop.f32.mrf.mxu0
        %v1420 = vadd.f32 %v1169, %v1419
        %v1421 = vand.u32 %v441, 4294901760
        %v1422 = vsub.f32 %v441, %v1421
        %v1423 = vand.u32 %v1422, 4294901760
        %1424 = vmatmul.f32.gmra.mxu0 %v1423
        %v1425 = vpop.f32.mrf.mxu0
        %v1426 = vadd.f32 %v1174, %v1425
        %v1427 = vand.u32 %v444, 4294901760
        %v1428 = vsub.f32 %v444, %v1427
        %v1429 = vand.u32 %v1428, 4294901760
        %1430 = vmatmul.f32.gmra.mxu0 %v1429
        %v1431 = vpop.f32.mrf.mxu0
        %v1432 = vadd.f32 %v1179, %v1431
        %v1433 = vand.u32 %v447, 4294901760
        %v1434 = vsub.f32 %v447, %v1433
        %v1435 = vand.u32 %v1434, 4294901760
        %1436 = vmatmul.f32.gmra.mxu0 %v1435
        %v1437 = vpop.f32.mrf.mxu0
        %v1438 = vadd.f32 %v1184, %v1437
        %v1439 = vand.u32 %v450, 4294901760
        %v1440 = vsub.f32 %v450, %v1439
        %v1441 = vand.u32 %v1440, 4294901760
        %1442 = vmatmul.f32.gmra.mxu0 %v1441
        %v1443 = vpop.f32.mrf.mxu0
        %v1444 = vadd.f32 %v1189, %v1443
        %v1445 = vand.u32 %v453, 4294901760
        %v1446 = vsub.f32 %v453, %v1445
        %v1447 = vand.u32 %v1446, 4294901760
        %1448 = vmatmul.f32.gmra.mxu0 %v1447
        %v1449 = vpop.f32.mrf.mxu0
        %v1450 = vadd.f32 %v1194, %v1449
        %v1451 = vand.u32 %v456, 4294901760
        %v1452 = vsub.f32 %v456, %v1451
        %v1453 = vand.u32 %v1452, 4294901760
        %1454 = vmatmul.f32.gmra.mxu0 %v1453
        %v1455 = vpop.f32.mrf.mxu0
        %v1456 = vadd.f32 %v1199, %v1455
        %v1457 = vand.u32 %v459, 4294901760
        %v1458 = vsub.f32 %v459, %v1457
        %v1459 = vand.u32 %v1458, 4294901760
        %1460 = vmatmul.f32.gmra.mxu0 %v1459
        %v1461 = vpop.f32.mrf.mxu0
        %v1462 = vadd.f32 %v1204, %v1461
        %v1463 = vand.u32 %v462, 4294901760
        %v1464 = vsub.f32 %v462, %v1463
        %v1465 = vand.u32 %v1464, 4294901760
        %1466 = vmatmul.f32.gmra.mxu0 %v1465
        %v1467 = vpop.f32.mrf.mxu0
        %v1468 = vadd.f32 %v1209, %v1467
        %1469 = vdwg.mxu0
        %1470 = vmatpush.msra.mxu0 0.0
        %1471 = vmatpush.msra.mxu0 0.0
        %1472 = vmatpush.msra.mxu0 0.0
        %1473 = vmatpush.msra.mxu0 0.0
        %1474 = vmatpush.msra.mxu0 0.0
        %1475 = vmatpush.msra.mxu0 0.0
        %1476 = vmatpush.msra.mxu0 0.0
        %1477 = vmatpush.msra.mxu0 0.0
        %1478 = vmatpush.msra.mxu0 0.0
        %1479 = vmatpush.msra.mxu0 0.0
        %1480 = vmatpush.msra.mxu0 0.0
        %1481 = vmatpush.msra.mxu0 0.0
        %1482 = vmatpush.msra.mxu0 0.0
        %1483 = vmatpush.msra.mxu0 0.0
        %v1484 = vand.u32 %v296, 4294901760
        %v1485 = vsub.f32 %v296, %v1484
        %v1486 = vand.u32 %v1485, 4294901760
        %1487 = vmatpush.msra.mxu0 %v1486
        %v1488 = vand.u32 %v295, 4294901760
        %v1489 = vsub.f32 %v295, %v1488
        %v1490 = vand.u32 %v1489, 4294901760
        %1491 = vmatpush.msra.mxu0 %v1490
        %v1492 = vand.u32 %v345, 4294901760
        %1493 = vmatmul.f32.gmra.mxu0 %v1492
        %v1494 = vpop.f32.mrf.mxu0
        %v1495 = vadd.f32 %v1234, %v1494
        %v1496 = vand.u32 %v348, 4294901760
        %1497 = vmatmul.f32.gmra.mxu0 %v1496
        %v1498 = vpop.f32.mrf.mxu0
        %v1499 = vadd.f32 %v1240, %v1498
        %v1500 = vand.u32 %v351, 4294901760
        %1501 = vmatmul.f32.gmra.mxu0 %v1500
        %v1502 = vpop.f32.mrf.mxu0
        %v1503 = vadd.f32 %v1246, %v1502
        %v1504 = vand.u32 %v354, 4294901760
        %1505 = vmatmul.f32.gmra.mxu0 %v1504
        %v1506 = vpop.f32.mrf.mxu0
        %v1507 = vadd.f32 %v1252, %v1506
        %v1508 = vand.u32 %v357, 4294901760
        %1509 = vmatmul.f32.gmra.mxu0 %v1508
        %v1510 = vpop.f32.mrf.mxu0
        %v1511 = vadd.f32 %v1258, %v1510
        %v1512 = vand.u32 %v360, 4294901760
        %1513 = vmatmul.f32.gmra.mxu0 %v1512
        %v1514 = vpop.f32.mrf.mxu0
        %v1515 = vadd.f32 %v1264, %v1514
        %v1516 = vand.u32 %v363, 4294901760
        %1517 = vmatmul.f32.gmra.mxu0 %v1516
        %v1518 = vpop.f32.mrf.mxu0
        %v1519 = vadd.f32 %v1270, %v1518
        %v1520 = vand.u32 %v366, 4294901760
        %1521 = vmatmul.f32.gmra.mxu0 %v1520
        %v1522 = vpop.f32.mrf.mxu0
        %v1523 = vadd.f32 %v1276, %v1522
        %v1524 = vand.u32 %v369, 4294901760
        %1525 = vmatmul.f32.gmra.mxu0 %v1524
        %v1526 = vpop.f32.mrf.mxu0
        %v1527 = vadd.f32 %v1282, %v1526
        %v1528 = vand.u32 %v372, 4294901760
        %1529 = vmatmul.f32.gmra.mxu0 %v1528
        %v1530 = vpop.f32.mrf.mxu0
        %v1531 = vadd.f32 %v1288, %v1530
        %v1532 = vand.u32 %v375, 4294901760
        %1533 = vmatmul.f32.gmra.mxu0 %v1532
        %v1534 = vpop.f32.mrf.mxu0
        %v1535 = vadd.f32 %v1294, %v1534
        %v1536 = vand.u32 %v378, 4294901760
        %1537 = vmatmul.f32.gmra.mxu0 %v1536
        %v1538 = vpop.f32.mrf.mxu0
        %v1539 = vadd.f32 %v1300, %v1538
        %v1540 = vand.u32 %v381, 4294901760
        %1541 = vmatmul.f32.gmra.mxu0 %v1540
        %v1542 = vpop.f32.mrf.mxu0
        %v1543 = vadd.f32 %v1306, %v1542
        %v1544 = vand.u32 %v384, 4294901760
        %1545 = vmatmul.f32.gmra.mxu0 %v1544
        %v1546 = vpop.f32.mrf.mxu0
        %v1547 = vadd.f32 %v1312, %v1546
        %v1548 = vand.u32 %v387, 4294901760
        %1549 = vmatmul.f32.gmra.mxu0 %v1548
        %v1550 = vpop.f32.mrf.mxu0
        %v1551 = vadd.f32 %v1318, %v1550
        %v1552 = vand.u32 %v390, 4294901760
        %1553 = vmatmul.f32.gmra.mxu0 %v1552
        %v1554 = vpop.f32.mrf.mxu0
        %v1555 = vadd.f32 %v1324, %v1554
        %v1556 = vand.u32 %v393, 4294901760
        %1557 = vmatmul.f32.gmra.mxu0 %v1556
        %v1558 = vpop.f32.mrf.mxu0
        %v1559 = vadd.f32 %v1330, %v1558
        %v1560 = vand.u32 %v396, 4294901760
        %1561 = vmatmul.f32.gmra.mxu0 %v1560
        %v1562 = vpop.f32.mrf.mxu0
        %v1563 = vadd.f32 %v1336, %v1562
        %v1564 = vand.u32 %v399, 4294901760
        %1565 = vmatmul.f32.gmra.mxu0 %v1564
        %v1566 = vpop.f32.mrf.mxu0
        %v1567 = vadd.f32 %v1342, %v1566
        %v1568 = vand.u32 %v402, 4294901760
        %1569 = vmatmul.f32.gmra.mxu0 %v1568
        %v1570 = vpop.f32.mrf.mxu0
        %v1571 = vadd.f32 %v1348, %v1570
        %v1572 = vand.u32 %v405, 4294901760
        %1573 = vmatmul.f32.gmra.mxu0 %v1572
        %v1574 = vpop.f32.mrf.mxu0
        %v1575 = vadd.f32 %v1354, %v1574
        %v1576 = vand.u32 %v408, 4294901760
        %1577 = vmatmul.f32.gmra.mxu0 %v1576
        %v1578 = vpop.f32.mrf.mxu0
        %v1579 = vadd.f32 %v1360, %v1578
        %v1580 = vand.u32 %v411, 4294901760
        %1581 = vmatmul.f32.gmra.mxu0 %v1580
        %v1582 = vpop.f32.mrf.mxu0
        %v1583 = vadd.f32 %v1366, %v1582
        %v1584 = vand.u32 %v414, 4294901760
        %1585 = vmatmul.f32.gmra.mxu0 %v1584
        %v1586 = vpop.f32.mrf.mxu0
        %v1587 = vadd.f32 %v1372, %v1586
        %v1588 = vand.u32 %v417, 4294901760
        %1589 = vmatmul.f32.gmra.mxu0 %v1588
        %v1590 = vpop.f32.mrf.mxu0
        %v1591 = vadd.f32 %v1378, %v1590
        %v1592 = vand.u32 %v420, 4294901760
        %1593 = vmatmul.f32.gmra.mxu0 %v1592
        %v1594 = vpop.f32.mrf.mxu0
        %v1595 = vadd.f32 %v1384, %v1594
        %v1596 = vand.u32 %v423, 4294901760
        %1597 = vmatmul.f32.gmra.mxu0 %v1596
        %v1598 = vpop.f32.mrf.mxu0
        %v1599 = vadd.f32 %v1390, %v1598
        %v1600 = vand.u32 %v426, 4294901760
        %1601 = vmatmul.f32.gmra.mxu0 %v1600
        %v1602 = vpop.f32.mrf.mxu0
        %v1603 = vadd.f32 %v1396, %v1602
        %v1604 = vand.u32 %v429, 4294901760
        %1605 = vmatmul.f32.gmra.mxu0 %v1604
        %v1606 = vpop.f32.mrf.mxu0
        %v1607 = vadd.f32 %v1402, %v1606
        %v1608 = vand.u32 %v432, 4294901760
        %1609 = vmatmul.f32.gmra.mxu0 %v1608
        %v1610 = vpop.f32.mrf.mxu0
        %v1611 = vadd.f32 %v1408, %v1610
        %v1612 = vand.u32 %v435, 4294901760
        %1613 = vmatmul.f32.gmra.mxu0 %v1612
        %v1614 = vpop.f32.mrf.mxu0
        %v1615 = vadd.f32 %v1414, %v1614
        %v1616 = vand.u32 %v438, 4294901760
        %1617 = vmatmul.f32.gmra.mxu0 %v1616
        %v1618 = vpop.f32.mrf.mxu0
        %v1619 = vadd.f32 %v1420, %v1618
        %v1620 = vand.u32 %v441, 4294901760
        %1621 = vmatmul.f32.gmra.mxu0 %v1620
        %v1622 = vpop.f32.mrf.mxu0
        %v1623 = vadd.f32 %v1426, %v1622
        %v1624 = vand.u32 %v444, 4294901760
        %1625 = vmatmul.f32.gmra.mxu0 %v1624
        %v1626 = vpop.f32.mrf.mxu0
        %v1627 = vadd.f32 %v1432, %v1626
        %v1628 = vand.u32 %v447, 4294901760
        %1629 = vmatmul.f32.gmra.mxu0 %v1628
        %v1630 = vpop.f32.mrf.mxu0
        %v1631 = vadd.f32 %v1438, %v1630
        %v1632 = vand.u32 %v450, 4294901760
        %1633 = vmatmul.f32.gmra.mxu0 %v1632
        %v1634 = vpop.f32.mrf.mxu0
        %v1635 = vadd.f32 %v1444, %v1634
        %v1636 = vand.u32 %v453, 4294901760
        %1637 = vmatmul.f32.gmra.mxu0 %v1636
        %v1638 = vpop.f32.mrf.mxu0
        %v1639 = vadd.f32 %v1450, %v1638
        %v1640 = vand.u32 %v456, 4294901760
        %1641 = vmatmul.f32.gmra.mxu0 %v1640
        %v1642 = vpop.f32.mrf.mxu0
        %v1643 = vadd.f32 %v1456, %v1642
        %v1644 = vand.u32 %v459, 4294901760
        %1645 = vmatmul.f32.gmra.mxu0 %v1644
        %v1646 = vpop.f32.mrf.mxu0
        %v1647 = vadd.f32 %v1462, %v1646
        %v1648 = vand.u32 %v462, 4294901760
        %1649 = vmatmul.f32.gmra.mxu0 %v1648
        %v1650 = vpop.f32.mrf.mxu0
        %v1651 = vadd.f32 %v1468, %v1650
        %1652 = vdwg.mxu0
        %1653 = vmatpush.msra.mxu0 0.0
        %1654 = vmatpush.msra.mxu0 0.0
        %1655 = vmatpush.msra.mxu0 0.0
        %1656 = vmatpush.msra.mxu0 0.0
        %1657 = vmatpush.msra.mxu0 0.0
        %1658 = vmatpush.msra.mxu0 0.0
        %1659 = vmatpush.msra.mxu0 0.0
        %1660 = vmatpush.msra.mxu0 0.0
        %1661 = vmatpush.msra.mxu0 0.0
        %1662 = vmatpush.msra.mxu0 0.0
        %1663 = vmatpush.msra.mxu0 0.0
        %1664 = vmatpush.msra.mxu0 0.0
        %1665 = vmatpush.msra.mxu0 0.0
        %1666 = vmatpush.msra.mxu0 0.0
        %v1667 = vand.u32 %v296, 4294901760
        %1668 = vmatpush.msra.mxu0 %v1667
        %v1669 = vand.u32 %v295, 4294901760
        %1670 = vmatpush.msra.mxu0 %v1669
        %v1671 = vand.u32 %v345, 4294901760
        %1672 = vmatmul.f32.gmra.mxu0 %v1671
        %v1673 = vpop.f32.mrf.mxu0
        %v1674 = vadd.f32 %v1495, %v1673
        %v1675 = vand.u32 %v348, 4294901760
        %1676 = vmatmul.f32.gmra.mxu0 %v1675
        %v1677 = vpop.f32.mrf.mxu0
        %v1678 = vadd.f32 %v1499, %v1677
        %v1679 = vand.u32 %v351, 4294901760
        %1680 = vmatmul.f32.gmra.mxu0 %v1679
        %v1681 = vpop.f32.mrf.mxu0
        %v1682 = vadd.f32 %v1503, %v1681
        %v1683 = vand.u32 %v354, 4294901760
        %1684 = vmatmul.f32.gmra.mxu0 %v1683
        %v1685 = vpop.f32.mrf.mxu0
        %v1686 = vadd.f32 %v1507, %v1685
        %v1687 = vand.u32 %v357, 4294901760
        %1688 = vmatmul.f32.gmra.mxu0 %v1687
        %v1689 = vpop.f32.mrf.mxu0
        %v1690 = vadd.f32 %v1511, %v1689
        %v1691 = vand.u32 %v360, 4294901760
        %1692 = vmatmul.f32.gmra.mxu0 %v1691
        %v1693 = vpop.f32.mrf.mxu0
        %v1694 = vadd.f32 %v1515, %v1693
        %v1695 = vand.u32 %v363, 4294901760
        %1696 = vmatmul.f32.gmra.mxu0 %v1695
        %v1697 = vpop.f32.mrf.mxu0
        %v1698 = vadd.f32 %v1519, %v1697
        %v1699 = vand.u32 %v366, 4294901760
        %1700 = vmatmul.f32.gmra.mxu0 %v1699
        %v1701 = vpop.f32.mrf.mxu0
        %v1702 = vadd.f32 %v1523, %v1701
        %v1703 = vand.u32 %v369, 4294901760
        %1704 = vmatmul.f32.gmra.mxu0 %v1703
        %v1705 = vpop.f32.mrf.mxu0
        %v1706 = vadd.f32 %v1527, %v1705
        %v1707 = vand.u32 %v372, 4294901760
        %1708 = vmatmul.f32.gmra.mxu0 %v1707
        %v1709 = vpop.f32.mrf.mxu0
        %v1710 = vadd.f32 %v1531, %v1709
        %v1711 = vand.u32 %v375, 4294901760
        %1712 = vmatmul.f32.gmra.mxu0 %v1711
        %v1713 = vpop.f32.mrf.mxu0
        %v1714 = vadd.f32 %v1535, %v1713
        %v1715 = vand.u32 %v378, 4294901760
        %1716 = vmatmul.f32.gmra.mxu0 %v1715
        %v1717 = vpop.f32.mrf.mxu0
        %v1718 = vadd.f32 %v1539, %v1717
        %v1719 = vand.u32 %v381, 4294901760
        %1720 = vmatmul.f32.gmra.mxu0 %v1719
        %v1721 = vpop.f32.mrf.mxu0
        %v1722 = vadd.f32 %v1543, %v1721
        %v1723 = vand.u32 %v384, 4294901760
        %1724 = vmatmul.f32.gmra.mxu0 %v1723
        %v1725 = vpop.f32.mrf.mxu0
        %v1726 = vadd.f32 %v1547, %v1725
        %v1727 = vand.u32 %v387, 4294901760
        %1728 = vmatmul.f32.gmra.mxu0 %v1727
        %v1729 = vpop.f32.mrf.mxu0
        %v1730 = vadd.f32 %v1551, %v1729
        %v1731 = vand.u32 %v390, 4294901760
        %1732 = vmatmul.f32.gmra.mxu0 %v1731
        %v1733 = vpop.f32.mrf.mxu0
        %v1734 = vadd.f32 %v1555, %v1733
        %v1735 = vand.u32 %v393, 4294901760
        %1736 = vmatmul.f32.gmra.mxu0 %v1735
        %v1737 = vpop.f32.mrf.mxu0
        %v1738 = vadd.f32 %v1559, %v1737
        %v1739 = vand.u32 %v396, 4294901760
        %1740 = vmatmul.f32.gmra.mxu0 %v1739
        %v1741 = vpop.f32.mrf.mxu0
        %v1742 = vadd.f32 %v1563, %v1741
        %v1743 = vand.u32 %v399, 4294901760
        %1744 = vmatmul.f32.gmra.mxu0 %v1743
        %v1745 = vpop.f32.mrf.mxu0
        %v1746 = vadd.f32 %v1567, %v1745
        %v1747 = vand.u32 %v402, 4294901760
        %1748 = vmatmul.f32.gmra.mxu0 %v1747
        %v1749 = vpop.f32.mrf.mxu0
        %v1750 = vadd.f32 %v1571, %v1749
        %v1751 = vand.u32 %v405, 4294901760
        %1752 = vmatmul.f32.gmra.mxu0 %v1751
        %v1753 = vpop.f32.mrf.mxu0
        %v1754 = vadd.f32 %v1575, %v1753
        %v1755 = vand.u32 %v408, 4294901760
        %1756 = vmatmul.f32.gmra.mxu0 %v1755
        %v1757 = vpop.f32.mrf.mxu0
        %v1758 = vadd.f32 %v1579, %v1757
        %v1759 = vand.u32 %v411, 4294901760
        %1760 = vmatmul.f32.gmra.mxu0 %v1759
        %v1761 = vpop.f32.mrf.mxu0
        %v1762 = vadd.f32 %v1583, %v1761
        %v1763 = vand.u32 %v414, 4294901760
        %1764 = vmatmul.f32.gmra.mxu0 %v1763
        %v1765 = vpop.f32.mrf.mxu0
        %v1766 = vadd.f32 %v1587, %v1765
        %v1767 = vand.u32 %v417, 4294901760
        %1768 = vmatmul.f32.gmra.mxu0 %v1767
        %v1769 = vpop.f32.mrf.mxu0
        %v1770 = vadd.f32 %v1591, %v1769
        %v1771 = vand.u32 %v420, 4294901760
        %1772 = vmatmul.f32.gmra.mxu0 %v1771
        %v1773 = vpop.f32.mrf.mxu0
        %v1774 = vadd.f32 %v1595, %v1773
        %v1775 = vand.u32 %v423, 4294901760
        %1776 = vmatmul.f32.gmra.mxu0 %v1775
        %v1777 = vpop.f32.mrf.mxu0
        %v1778 = vadd.f32 %v1599, %v1777
        %v1779 = vand.u32 %v426, 4294901760
        %1780 = vmatmul.f32.gmra.mxu0 %v1779
        %v1781 = vpop.f32.mrf.mxu0
        %v1782 = vadd.f32 %v1603, %v1781
        %v1783 = vand.u32 %v429, 4294901760
        %1784 = vmatmul.f32.gmra.mxu0 %v1783
        %v1785 = vpop.f32.mrf.mxu0
        %v1786 = vadd.f32 %v1607, %v1785
        %v1787 = vand.u32 %v432, 4294901760
        %1788 = vmatmul.f32.gmra.mxu0 %v1787
        %v1789 = vpop.f32.mrf.mxu0
        %v1790 = vadd.f32 %v1611, %v1789
        %v1791 = vand.u32 %v435, 4294901760
        %1792 = vmatmul.f32.gmra.mxu0 %v1791
        %v1793 = vpop.f32.mrf.mxu0
        %v1794 = vadd.f32 %v1615, %v1793
        %v1795 = vand.u32 %v438, 4294901760
        %1796 = vmatmul.f32.gmra.mxu0 %v1795
        %v1797 = vpop.f32.mrf.mxu0
        %v1798 = vadd.f32 %v1619, %v1797
        %v1799 = vand.u32 %v441, 4294901760
        %1800 = vmatmul.f32.gmra.mxu0 %v1799
        %v1801 = vpop.f32.mrf.mxu0
        %v1802 = vadd.f32 %v1623, %v1801
        %v1803 = vand.u32 %v444, 4294901760
        %1804 = vmatmul.f32.gmra.mxu0 %v1803
        %v1805 = vpop.f32.mrf.mxu0
        %v1806 = vadd.f32 %v1627, %v1805
        %v1807 = vand.u32 %v447, 4294901760
        %1808 = vmatmul.f32.gmra.mxu0 %v1807
        %v1809 = vpop.f32.mrf.mxu0
        %v1810 = vadd.f32 %v1631, %v1809
        %v1811 = vand.u32 %v450, 4294901760
        %1812 = vmatmul.f32.gmra.mxu0 %v1811
        %v1813 = vpop.f32.mrf.mxu0
        %v1814 = vadd.f32 %v1635, %v1813
        %v1815 = vand.u32 %v453, 4294901760
        %1816 = vmatmul.f32.gmra.mxu0 %v1815
        %v1817 = vpop.f32.mrf.mxu0
        %v1818 = vadd.f32 %v1639, %v1817
        %v1819 = vand.u32 %v456, 4294901760
        %1820 = vmatmul.f32.gmra.mxu0 %v1819
        %v1821 = vpop.f32.mrf.mxu0
        %v1822 = vadd.f32 %v1643, %v1821
        %v1823 = vand.u32 %v459, 4294901760
        %1824 = vmatmul.f32.gmra.mxu0 %v1823
        %v1825 = vpop.f32.mrf.mxu0
        %v1826 = vadd.f32 %v1647, %v1825
        %v1827 = vand.u32 %v462, 4294901760
        %1828 = vmatmul.f32.gmra.mxu0 %v1827
        %v1829 = vpop.f32.mrf.mxu0
        %v1830 = vadd.f32 %v1651, %v1829
        %1831 = vdwg.mxu0
        %v1833 = vsel %vm343, %v293, 0
        %v1836 = vsel %vm343, %v294, 0
        %1838 = vmatpush.msra.mxu0 0.0
        %1839 = vmatpush.msra.mxu0 0.0
        %1840 = vmatpush.msra.mxu0 0.0
        %1841 = vmatpush.msra.mxu0 0.0
        %1842 = vmatpush.msra.mxu0 0.0
        %1843 = vmatpush.msra.mxu0 0.0
        %1844 = vmatpush.msra.mxu0 0.0
        %1845 = vmatpush.msra.mxu0 0.0
        %1846 = vmatpush.msra.mxu0 0.0
        %1847 = vmatpush.msra.mxu0 0.0
        %1848 = vmatpush.msra.mxu0 0.0
        %1849 = vmatpush.msra.mxu0 0.0
        %1850 = vmatpush.msra.mxu0 0.0
        %1851 = vmatpush.msra.mxu0 0.0
        %v1852 = vand.u32 %v1678, 4294901760
        %1853 = vmatpush.msra.mxu0 %v1852
        %v1854 = vand.u32 %v1674, 4294901760
        %1855 = vmatpush.msra.mxu0 %v1854
        %v1856 = vand.u32 %v1833, 4294901760
        %v1857 = vsub.f32 %v1833, %v1856
        %v1858 = vand.u32 %v1857, 4294901760
        %v1859 = vsub.f32 %v1857, %v1858
        %v1860 = vand.u32 %v1859, 4294901760
        %1861 = vmatmul.f32.gmra.mxu0 %v1860
        %v1862 = vpop.f32.mrf.mxu0
        %v1863 = vadd.f32 0.0, %v1862
        %v1864 = vand.u32 %v1836, 4294901760
        %v1865 = vsub.f32 %v1836, %v1864
        %v1866 = vand.u32 %v1865, 4294901760
        %v1867 = vsub.f32 %v1865, %v1866
        %v1868 = vand.u32 %v1867, 4294901760
        %1869 = vmatmul.f32.gmra.mxu0 %v1868
        %v1870 = vpop.f32.mrf.mxu0
        %v1871 = vadd.f32 0.0, %v1870
        %1872 = vdwg.mxu0
        %1873 = vmatpush.msra.mxu0 0.0
        %1874 = vmatpush.msra.mxu0 0.0
        %1875 = vmatpush.msra.mxu0 0.0
        %1876 = vmatpush.msra.mxu0 0.0
        %1877 = vmatpush.msra.mxu0 0.0
        %1878 = vmatpush.msra.mxu0 0.0
        %1879 = vmatpush.msra.mxu0 0.0
        %1880 = vmatpush.msra.mxu0 0.0
        %1881 = vmatpush.msra.mxu0 0.0
        %1882 = vmatpush.msra.mxu0 0.0
        %1883 = vmatpush.msra.mxu0 0.0
        %1884 = vmatpush.msra.mxu0 0.0
        %1885 = vmatpush.msra.mxu0 0.0
        %1886 = vmatpush.msra.mxu0 0.0
        %v1887 = vand.u32 %v1678, 4294901760
        %v1888 = vsub.f32 %v1678, %v1887
        %v1889 = vand.u32 %v1888, 4294901760
        %v1890 = vsub.f32 %v1888, %v1889
        %v1891 = vand.u32 %v1890, 4294901760
        %1892 = vmatpush.msra.mxu0 %v1891
        %v1893 = vand.u32 %v1674, 4294901760
        %v1894 = vsub.f32 %v1674, %v1893
        %v1895 = vand.u32 %v1894, 4294901760
        %v1896 = vsub.f32 %v1894, %v1895
        %v1897 = vand.u32 %v1896, 4294901760
        %1898 = vmatpush.msra.mxu0 %v1897
        %v1899 = vand.u32 %v1833, 4294901760
        %1900 = vmatmul.f32.gmra.mxu0 %v1899
        %v1901 = vpop.f32.mrf.mxu0
        %v1902 = vadd.f32 %v1863, %v1901
        %v1903 = vand.u32 %v1836, 4294901760
        %1904 = vmatmul.f32.gmra.mxu0 %v1903
        %v1905 = vpop.f32.mrf.mxu0
        %v1906 = vadd.f32 %v1871, %v1905
        %1907 = vdwg.mxu0
        %1908 = vmatpush.msra.mxu0 0.0
        %1909 = vmatpush.msra.mxu0 0.0
        %1910 = vmatpush.msra.mxu0 0.0
        %1911 = vmatpush.msra.mxu0 0.0
        %1912 = vmatpush.msra.mxu0 0.0
        %1913 = vmatpush.msra.mxu0 0.0
        %1914 = vmatpush.msra.mxu0 0.0
        %1915 = vmatpush.msra.mxu0 0.0
        %1916 = vmatpush.msra.mxu0 0.0
        %1917 = vmatpush.msra.mxu0 0.0
        %1918 = vmatpush.msra.mxu0 0.0
        %1919 = vmatpush.msra.mxu0 0.0
        %1920 = vmatpush.msra.mxu0 0.0
        %1921 = vmatpush.msra.mxu0 0.0
        %v1922 = vand.u32 %v1678, 4294901760
        %v1923 = vsub.f32 %v1678, %v1922
        %1924 = vmatpush.msra.mxu0 %v1923
        %v1925 = vand.u32 %v1674, 4294901760
        %v1926 = vsub.f32 %v1674, %v1925
        %1927 = vmatpush.msra.mxu0 %v1926
        %v1928 = vand.u32 %v1833, 4294901760
        %v1929 = vsub.f32 %v1833, %v1928
        %1930 = vmatmul.f32.gmra.mxu0 %v1929
        %v1931 = vpop.f32.mrf.mxu0
        %v1932 = vadd.f32 %v1902, %v1931
        %v1933 = vand.u32 %v1836, 4294901760
        %v1934 = vsub.f32 %v1836, %v1933
        %1935 = vmatmul.f32.gmra.mxu0 %v1934
        %v1936 = vpop.f32.mrf.mxu0
        %v1937 = vadd.f32 %v1906, %v1936
        %1938 = vdwg.mxu0
        %1939 = vmatpush.msra.mxu0 0.0
        %1940 = vmatpush.msra.mxu0 0.0
        %1941 = vmatpush.msra.mxu0 0.0
        %1942 = vmatpush.msra.mxu0 0.0
        %1943 = vmatpush.msra.mxu0 0.0
        %1944 = vmatpush.msra.mxu0 0.0
        %1945 = vmatpush.msra.mxu0 0.0
        %1946 = vmatpush.msra.mxu0 0.0
        %1947 = vmatpush.msra.mxu0 0.0
        %1948 = vmatpush.msra.mxu0 0.0
        %1949 = vmatpush.msra.mxu0 0.0
        %1950 = vmatpush.msra.mxu0 0.0
        %1951 = vmatpush.msra.mxu0 0.0
        %1952 = vmatpush.msra.mxu0 0.0
        %v1953 = vand.u32 %v1678, 4294901760
        %1954 = vmatpush.msra.mxu0 %v1953
        %v1955 = vand.u32 %v1674, 4294901760
        %1956 = vmatpush.msra.mxu0 %v1955
        %v1957 = vand.u32 %v1833, 4294901760
        %v1958 = vsub.f32 %v1833, %v1957
        %v1959 = vand.u32 %v1958, 4294901760
        %1960 = vmatmul.f32.gmra.mxu0 %v1959
        %v1961 = vpop.f32.mrf.mxu0
        %v1962 = vadd.f32 %v1932, %v1961
        %v1963 = vand.u32 %v1836, 4294901760
        %v1964 = vsub.f32 %v1836, %v1963
        %v1965 = vand.u32 %v1964, 4294901760
        %1966 = vmatmul.f32.gmra.mxu0 %v1965
        %v1967 = vpop.f32.mrf.mxu0
        %v1968 = vadd.f32 %v1937, %v1967
        %1969 = vdwg.mxu0
        %1970 = vmatpush.msra.mxu0 0.0
        %1971 = vmatpush.msra.mxu0 0.0
        %1972 = vmatpush.msra.mxu0 0.0
        %1973 = vmatpush.msra.mxu0 0.0
        %1974 = vmatpush.msra.mxu0 0.0
        %1975 = vmatpush.msra.mxu0 0.0
        %1976 = vmatpush.msra.mxu0 0.0
        %1977 = vmatpush.msra.mxu0 0.0
        %1978 = vmatpush.msra.mxu0 0.0
        %1979 = vmatpush.msra.mxu0 0.0
        %1980 = vmatpush.msra.mxu0 0.0
        %1981 = vmatpush.msra.mxu0 0.0
        %1982 = vmatpush.msra.mxu0 0.0
        %1983 = vmatpush.msra.mxu0 0.0
        %v1984 = vand.u32 %v1678, 4294901760
        %v1985 = vsub.f32 %v1678, %v1984
        %v1986 = vand.u32 %v1985, 4294901760
        %1987 = vmatpush.msra.mxu0 %v1986
        %v1988 = vand.u32 %v1674, 4294901760
        %v1989 = vsub.f32 %v1674, %v1988
        %v1990 = vand.u32 %v1989, 4294901760
        %1991 = vmatpush.msra.mxu0 %v1990
        %v1992 = vand.u32 %v1833, 4294901760
        %1993 = vmatmul.f32.gmra.mxu0 %v1992
        %v1994 = vpop.f32.mrf.mxu0
        %v1995 = vadd.f32 %v1962, %v1994
        %v1996 = vand.u32 %v1836, 4294901760
        %1997 = vmatmul.f32.gmra.mxu0 %v1996
        %v1998 = vpop.f32.mrf.mxu0
        %v1999 = vadd.f32 %v1968, %v1998
        %2000 = vdwg.mxu0
        %2001 = vmatpush.msra.mxu0 0.0
        %2002 = vmatpush.msra.mxu0 0.0
        %2003 = vmatpush.msra.mxu0 0.0
        %2004 = vmatpush.msra.mxu0 0.0
        %2005 = vmatpush.msra.mxu0 0.0
        %2006 = vmatpush.msra.mxu0 0.0
        %2007 = vmatpush.msra.mxu0 0.0
        %2008 = vmatpush.msra.mxu0 0.0
        %2009 = vmatpush.msra.mxu0 0.0
        %2010 = vmatpush.msra.mxu0 0.0
        %2011 = vmatpush.msra.mxu0 0.0
        %2012 = vmatpush.msra.mxu0 0.0
        %2013 = vmatpush.msra.mxu0 0.0
        %2014 = vmatpush.msra.mxu0 0.0
        %v2015 = vand.u32 %v1678, 4294901760
        %2016 = vmatpush.msra.mxu0 %v2015
        %v2017 = vand.u32 %v1674, 4294901760
        %2018 = vmatpush.msra.mxu0 %v2017
        %v2019 = vand.u32 %v1833, 4294901760
        %2020 = vmatmul.f32.gmra.mxu0 %v2019
        %v2021 = vpop.f32.mrf.mxu0
        %v2022 = vadd.f32 %v1995, %v2021
        %v2023 = vand.u32 %v1836, 4294901760
        %2024 = vmatmul.f32.gmra.mxu0 %v2023
        %v2025 = vpop.f32.mrf.mxu0
        %v2026 = vadd.f32 %v1999, %v2025
        %2027 = vdwg.mxu0
        %2028 = vmatpush.msra.mxu0 0.0
        %2029 = vmatpush.msra.mxu0 0.0
        %2030 = vmatpush.msra.mxu0 0.0
        %2031 = vmatpush.msra.mxu0 0.0
        %2032 = vmatpush.msra.mxu0 0.0
        %2033 = vmatpush.msra.mxu0 0.0
        %2034 = vmatpush.msra.mxu0 0.0
        %2035 = vmatpush.msra.mxu0 0.0
        %2036 = vmatpush.msra.mxu0 0.0
        %2037 = vmatpush.msra.mxu0 0.0
        %2038 = vmatpush.msra.mxu0 0.0
        %2039 = vmatpush.msra.mxu0 0.0
        %2040 = vmatpush.msra.mxu0 0.0
        %2041 = vmatpush.msra.mxu0 0.0
        %v2042 = vand.u32 %v1686, 4294901760
        %2043 = vmatpush.msra.mxu0 %v2042
        %v2044 = vand.u32 %v1682, 4294901760
        %2045 = vmatpush.msra.mxu0 %v2044
        %v2046 = vand.u32 %v1833, 4294901760
        %v2047 = vsub.f32 %v1833, %v2046
        %v2048 = vand.u32 %v2047, 4294901760
        %v2049 = vsub.f32 %v2047, %v2048
        %v2050 = vand.u32 %v2049, 4294901760
        %2051 = vmatmul.f32.gmra.mxu0 %v2050
        %v2052 = vpop.f32.mrf.mxu0
        %v2053 = vadd.f32 0.0, %v2052
        %v2054 = vand.u32 %v1836, 4294901760
        %v2055 = vsub.f32 %v1836, %v2054
        %v2056 = vand.u32 %v2055, 4294901760
        %v2057 = vsub.f32 %v2055, %v2056
        %v2058 = vand.u32 %v2057, 4294901760
        %2059 = vmatmul.f32.gmra.mxu0 %v2058
        %v2060 = vpop.f32.mrf.mxu0
        %v2061 = vadd.f32 0.0, %v2060
        %2062 = vdwg.mxu0
        %2063 = vmatpush.msra.mxu0 0.0
        %2064 = vmatpush.msra.mxu0 0.0
        %2065 = vmatpush.msra.mxu0 0.0
        %2066 = vmatpush.msra.mxu0 0.0
        %2067 = vmatpush.msra.mxu0 0.0
        %2068 = vmatpush.msra.mxu0 0.0
        %2069 = vmatpush.msra.mxu0 0.0
        %2070 = vmatpush.msra.mxu0 0.0
        %2071 = vmatpush.msra.mxu0 0.0
        %2072 = vmatpush.msra.mxu0 0.0
        %2073 = vmatpush.msra.mxu0 0.0
        %2074 = vmatpush.msra.mxu0 0.0
        %2075 = vmatpush.msra.mxu0 0.0
        %2076 = vmatpush.msra.mxu0 0.0
        %v2077 = vand.u32 %v1686, 4294901760
        %v2078 = vsub.f32 %v1686, %v2077
        %v2079 = vand.u32 %v2078, 4294901760
        %v2080 = vsub.f32 %v2078, %v2079
        %v2081 = vand.u32 %v2080, 4294901760
        %2082 = vmatpush.msra.mxu0 %v2081
        %v2083 = vand.u32 %v1682, 4294901760
        %v2084 = vsub.f32 %v1682, %v2083
        %v2085 = vand.u32 %v2084, 4294901760
        %v2086 = vsub.f32 %v2084, %v2085
        %v2087 = vand.u32 %v2086, 4294901760
        %2088 = vmatpush.msra.mxu0 %v2087
        %v2089 = vand.u32 %v1833, 4294901760
        %2090 = vmatmul.f32.gmra.mxu0 %v2089
        %v2091 = vpop.f32.mrf.mxu0
        %v2092 = vadd.f32 %v2053, %v2091
        %v2093 = vand.u32 %v1836, 4294901760
        %2094 = vmatmul.f32.gmra.mxu0 %v2093
        %v2095 = vpop.f32.mrf.mxu0
        %v2096 = vadd.f32 %v2061, %v2095
        %2097 = vdwg.mxu0
        %2098 = vmatpush.msra.mxu0 0.0
        %2099 = vmatpush.msra.mxu0 0.0
        %2100 = vmatpush.msra.mxu0 0.0
        %2101 = vmatpush.msra.mxu0 0.0
        %2102 = vmatpush.msra.mxu0 0.0
        %2103 = vmatpush.msra.mxu0 0.0
        %2104 = vmatpush.msra.mxu0 0.0
        %2105 = vmatpush.msra.mxu0 0.0
        %2106 = vmatpush.msra.mxu0 0.0
        %2107 = vmatpush.msra.mxu0 0.0
        %2108 = vmatpush.msra.mxu0 0.0
        %2109 = vmatpush.msra.mxu0 0.0
        %2110 = vmatpush.msra.mxu0 0.0
        %2111 = vmatpush.msra.mxu0 0.0
        %v2112 = vand.u32 %v1686, 4294901760
        %v2113 = vsub.f32 %v1686, %v2112
        %2114 = vmatpush.msra.mxu0 %v2113
        %v2115 = vand.u32 %v1682, 4294901760
        %v2116 = vsub.f32 %v1682, %v2115
        %2117 = vmatpush.msra.mxu0 %v2116
        %v2118 = vand.u32 %v1833, 4294901760
        %v2119 = vsub.f32 %v1833, %v2118
        %2120 = vmatmul.f32.gmra.mxu0 %v2119
        %v2121 = vpop.f32.mrf.mxu0
        %v2122 = vadd.f32 %v2092, %v2121
        %v2123 = vand.u32 %v1836, 4294901760
        %v2124 = vsub.f32 %v1836, %v2123
        %2125 = vmatmul.f32.gmra.mxu0 %v2124
        %v2126 = vpop.f32.mrf.mxu0
        %v2127 = vadd.f32 %v2096, %v2126
        %2128 = vdwg.mxu0
        %2129 = vmatpush.msra.mxu0 0.0
        %2130 = vmatpush.msra.mxu0 0.0
        %2131 = vmatpush.msra.mxu0 0.0
        %2132 = vmatpush.msra.mxu0 0.0
        %2133 = vmatpush.msra.mxu0 0.0
        %2134 = vmatpush.msra.mxu0 0.0
        %2135 = vmatpush.msra.mxu0 0.0
        %2136 = vmatpush.msra.mxu0 0.0
        %2137 = vmatpush.msra.mxu0 0.0
        %2138 = vmatpush.msra.mxu0 0.0
        %2139 = vmatpush.msra.mxu0 0.0
        %2140 = vmatpush.msra.mxu0 0.0
        %2141 = vmatpush.msra.mxu0 0.0
        %2142 = vmatpush.msra.mxu0 0.0
        %v2143 = vand.u32 %v1686, 4294901760
        %2144 = vmatpush.msra.mxu0 %v2143
        %v2145 = vand.u32 %v1682, 4294901760
        %2146 = vmatpush.msra.mxu0 %v2145
        %v2147 = vand.u32 %v1833, 4294901760
        %v2148 = vsub.f32 %v1833, %v2147
        %v2149 = vand.u32 %v2148, 4294901760
        %2150 = vmatmul.f32.gmra.mxu0 %v2149
        %v2151 = vpop.f32.mrf.mxu0
        %v2152 = vadd.f32 %v2122, %v2151
        %v2153 = vand.u32 %v1836, 4294901760
        %v2154 = vsub.f32 %v1836, %v2153
        %v2155 = vand.u32 %v2154, 4294901760
        %2156 = vmatmul.f32.gmra.mxu0 %v2155
        %v2157 = vpop.f32.mrf.mxu0
        %v2158 = vadd.f32 %v2127, %v2157
        %2159 = vdwg.mxu0
        %2160 = vmatpush.msra.mxu0 0.0
        %2161 = vmatpush.msra.mxu0 0.0
        %2162 = vmatpush.msra.mxu0 0.0
        %2163 = vmatpush.msra.mxu0 0.0
        %2164 = vmatpush.msra.mxu0 0.0
        %2165 = vmatpush.msra.mxu0 0.0
        %2166 = vmatpush.msra.mxu0 0.0
        %2167 = vmatpush.msra.mxu0 0.0
        %2168 = vmatpush.msra.mxu0 0.0
        %2169 = vmatpush.msra.mxu0 0.0
        %2170 = vmatpush.msra.mxu0 0.0
        %2171 = vmatpush.msra.mxu0 0.0
        %2172 = vmatpush.msra.mxu0 0.0
        %2173 = vmatpush.msra.mxu0 0.0
        %v2174 = vand.u32 %v1686, 4294901760
        %v2175 = vsub.f32 %v1686, %v2174
        %v2176 = vand.u32 %v2175, 4294901760
        %2177 = vmatpush.msra.mxu0 %v2176
        %v2178 = vand.u32 %v1682, 4294901760
        %v2179 = vsub.f32 %v1682, %v2178
        %v2180 = vand.u32 %v2179, 4294901760
        %2181 = vmatpush.msra.mxu0 %v2180
        %v2182 = vand.u32 %v1833, 4294901760
        %2183 = vmatmul.f32.gmra.mxu0 %v2182
        %v2184 = vpop.f32.mrf.mxu0
        %v2185 = vadd.f32 %v2152, %v2184
        %v2186 = vand.u32 %v1836, 4294901760
        %2187 = vmatmul.f32.gmra.mxu0 %v2186
        %v2188 = vpop.f32.mrf.mxu0
        %v2189 = vadd.f32 %v2158, %v2188
        %2190 = vdwg.mxu0
        %2191 = vmatpush.msra.mxu0 0.0
        %2192 = vmatpush.msra.mxu0 0.0
        %2193 = vmatpush.msra.mxu0 0.0
        %2194 = vmatpush.msra.mxu0 0.0
        %2195 = vmatpush.msra.mxu0 0.0
        %2196 = vmatpush.msra.mxu0 0.0
        %2197 = vmatpush.msra.mxu0 0.0
        %2198 = vmatpush.msra.mxu0 0.0
        %2199 = vmatpush.msra.mxu0 0.0
        %2200 = vmatpush.msra.mxu0 0.0
        %2201 = vmatpush.msra.mxu0 0.0
        %2202 = vmatpush.msra.mxu0 0.0
        %2203 = vmatpush.msra.mxu0 0.0
        %2204 = vmatpush.msra.mxu0 0.0
        %v2205 = vand.u32 %v1686, 4294901760
        %2206 = vmatpush.msra.mxu0 %v2205
        %v2207 = vand.u32 %v1682, 4294901760
        %2208 = vmatpush.msra.mxu0 %v2207
        %v2209 = vand.u32 %v1833, 4294901760
        %2210 = vmatmul.f32.gmra.mxu0 %v2209
        %v2211 = vpop.f32.mrf.mxu0
        %v2212 = vadd.f32 %v2185, %v2211
        %v2213 = vand.u32 %v1836, 4294901760
        %2214 = vmatmul.f32.gmra.mxu0 %v2213
        %v2215 = vpop.f32.mrf.mxu0
        %v2216 = vadd.f32 %v2189, %v2215
        %2217 = vdwg.mxu0
        %2218 = vmatpush.msra.mxu0 0.0
        %2219 = vmatpush.msra.mxu0 0.0
        %2220 = vmatpush.msra.mxu0 0.0
        %2221 = vmatpush.msra.mxu0 0.0
        %2222 = vmatpush.msra.mxu0 0.0
        %2223 = vmatpush.msra.mxu0 0.0
        %2224 = vmatpush.msra.mxu0 0.0
        %2225 = vmatpush.msra.mxu0 0.0
        %2226 = vmatpush.msra.mxu0 0.0
        %2227 = vmatpush.msra.mxu0 0.0
        %2228 = vmatpush.msra.mxu0 0.0
        %2229 = vmatpush.msra.mxu0 0.0
        %2230 = vmatpush.msra.mxu0 0.0
        %2231 = vmatpush.msra.mxu0 0.0
        %v2232 = vand.u32 %v1694, 4294901760
        %2233 = vmatpush.msra.mxu0 %v2232
        %v2234 = vand.u32 %v1690, 4294901760
        %2235 = vmatpush.msra.mxu0 %v2234
        %v2236 = vand.u32 %v1833, 4294901760
        %v2237 = vsub.f32 %v1833, %v2236
        %v2238 = vand.u32 %v2237, 4294901760
        %v2239 = vsub.f32 %v2237, %v2238
        %v2240 = vand.u32 %v2239, 4294901760
        %2241 = vmatmul.f32.gmra.mxu0 %v2240
        %v2242 = vpop.f32.mrf.mxu0
        %v2243 = vadd.f32 0.0, %v2242
        %v2244 = vand.u32 %v1836, 4294901760
        %v2245 = vsub.f32 %v1836, %v2244
        %v2246 = vand.u32 %v2245, 4294901760
        %v2247 = vsub.f32 %v2245, %v2246
        %v2248 = vand.u32 %v2247, 4294901760
        %2249 = vmatmul.f32.gmra.mxu0 %v2248
        %v2250 = vpop.f32.mrf.mxu0
        %v2251 = vadd.f32 0.0, %v2250
        %2252 = vdwg.mxu0
        %2253 = vmatpush.msra.mxu0 0.0
        %2254 = vmatpush.msra.mxu0 0.0
        %2255 = vmatpush.msra.mxu0 0.0
        %2256 = vmatpush.msra.mxu0 0.0
        %2257 = vmatpush.msra.mxu0 0.0
        %2258 = vmatpush.msra.mxu0 0.0
        %2259 = vmatpush.msra.mxu0 0.0
        %2260 = vmatpush.msra.mxu0 0.0
        %2261 = vmatpush.msra.mxu0 0.0
        %2262 = vmatpush.msra.mxu0 0.0
        %2263 = vmatpush.msra.mxu0 0.0
        %2264 = vmatpush.msra.mxu0 0.0
        %2265 = vmatpush.msra.mxu0 0.0
        %2266 = vmatpush.msra.mxu0 0.0
        %v2267 = vand.u32 %v1694, 4294901760
        %v2268 = vsub.f32 %v1694, %v2267
        %v2269 = vand.u32 %v2268, 4294901760
        %v2270 = vsub.f32 %v2268, %v2269
        %v2271 = vand.u32 %v2270, 4294901760
        %2272 = vmatpush.msra.mxu0 %v2271
        %v2273 = vand.u32 %v1690, 4294901760
        %v2274 = vsub.f32 %v1690, %v2273
        %v2275 = vand.u32 %v2274, 4294901760
        %v2276 = vsub.f32 %v2274, %v2275
        %v2277 = vand.u32 %v2276, 4294901760
        %2278 = vmatpush.msra.mxu0 %v2277
        %v2279 = vand.u32 %v1833, 4294901760
        %2280 = vmatmul.f32.gmra.mxu0 %v2279
        %v2281 = vpop.f32.mrf.mxu0
        %v2282 = vadd.f32 %v2243, %v2281
        %v2283 = vand.u32 %v1836, 4294901760
        %2284 = vmatmul.f32.gmra.mxu0 %v2283
        %v2285 = vpop.f32.mrf.mxu0
        %v2286 = vadd.f32 %v2251, %v2285
        %2287 = vdwg.mxu0
        %2288 = vmatpush.msra.mxu0 0.0
        %2289 = vmatpush.msra.mxu0 0.0
        %2290 = vmatpush.msra.mxu0 0.0
        %2291 = vmatpush.msra.mxu0 0.0
        %2292 = vmatpush.msra.mxu0 0.0
        %2293 = vmatpush.msra.mxu0 0.0
        %2294 = vmatpush.msra.mxu0 0.0
        %2295 = vmatpush.msra.mxu0 0.0
        %2296 = vmatpush.msra.mxu0 0.0
        %2297 = vmatpush.msra.mxu0 0.0
        %2298 = vmatpush.msra.mxu0 0.0
        %2299 = vmatpush.msra.mxu0 0.0
        %2300 = vmatpush.msra.mxu0 0.0
        %2301 = vmatpush.msra.mxu0 0.0
        %v2302 = vand.u32 %v1694, 4294901760
        %v2303 = vsub.f32 %v1694, %v2302
        %2304 = vmatpush.msra.mxu0 %v2303
        %v2305 = vand.u32 %v1690, 4294901760
        %v2306 = vsub.f32 %v1690, %v2305
        %2307 = vmatpush.msra.mxu0 %v2306
        %v2308 = vand.u32 %v1833, 4294901760
        %v2309 = vsub.f32 %v1833, %v2308
        %2310 = vmatmul.f32.gmra.mxu0 %v2309
        %v2311 = vpop.f32.mrf.mxu0
        %v2312 = vadd.f32 %v2282, %v2311
        %v2313 = vand.u32 %v1836, 4294901760
        %v2314 = vsub.f32 %v1836, %v2313
        %2315 = vmatmul.f32.gmra.mxu0 %v2314
        %v2316 = vpop.f32.mrf.mxu0
        %v2317 = vadd.f32 %v2286, %v2316
        %2318 = vdwg.mxu0
        %2319 = vmatpush.msra.mxu0 0.0
        %2320 = vmatpush.msra.mxu0 0.0
        %2321 = vmatpush.msra.mxu0 0.0
        %2322 = vmatpush.msra.mxu0 0.0
        %2323 = vmatpush.msra.mxu0 0.0
        %2324 = vmatpush.msra.mxu0 0.0
        %2325 = vmatpush.msra.mxu0 0.0
        %2326 = vmatpush.msra.mxu0 0.0
        %2327 = vmatpush.msra.mxu0 0.0
        %2328 = vmatpush.msra.mxu0 0.0
        %2329 = vmatpush.msra.mxu0 0.0
        %2330 = vmatpush.msra.mxu0 0.0
        %2331 = vmatpush.msra.mxu0 0.0
        %2332 = vmatpush.msra.mxu0 0.0
        %v2333 = vand.u32 %v1694, 4294901760
        %2334 = vmatpush.msra.mxu0 %v2333
        %v2335 = vand.u32 %v1690, 4294901760
        %2336 = vmatpush.msra.mxu0 %v2335
        %v2337 = vand.u32 %v1833, 4294901760
        %v2338 = vsub.f32 %v1833, %v2337
        %v2339 = vand.u32 %v2338, 4294901760
        %2340 = vmatmul.f32.gmra.mxu0 %v2339
        %v2341 = vpop.f32.mrf.mxu0
        %v2342 = vadd.f32 %v2312, %v2341
        %v2343 = vand.u32 %v1836, 4294901760
        %v2344 = vsub.f32 %v1836, %v2343
        %v2345 = vand.u32 %v2344, 4294901760
        %2346 = vmatmul.f32.gmra.mxu0 %v2345
        %v2347 = vpop.f32.mrf.mxu0
        %v2348 = vadd.f32 %v2317, %v2347
        %2349 = vdwg.mxu0
        %2350 = vmatpush.msra.mxu0 0.0
        %2351 = vmatpush.msra.mxu0 0.0
        %2352 = vmatpush.msra.mxu0 0.0
        %2353 = vmatpush.msra.mxu0 0.0
        %2354 = vmatpush.msra.mxu0 0.0
        %2355 = vmatpush.msra.mxu0 0.0
        %2356 = vmatpush.msra.mxu0 0.0
        %2357 = vmatpush.msra.mxu0 0.0
        %2358 = vmatpush.msra.mxu0 0.0
        %2359 = vmatpush.msra.mxu0 0.0
        %2360 = vmatpush.msra.mxu0 0.0
        %2361 = vmatpush.msra.mxu0 0.0
        %2362 = vmatpush.msra.mxu0 0.0
        %2363 = vmatpush.msra.mxu0 0.0
        %v2364 = vand.u32 %v1694, 4294901760
        %v2365 = vsub.f32 %v1694, %v2364
        %v2366 = vand.u32 %v2365, 4294901760
        %2367 = vmatpush.msra.mxu0 %v2366
        %v2368 = vand.u32 %v1690, 4294901760
        %v2369 = vsub.f32 %v1690, %v2368
        %v2370 = vand.u32 %v2369, 4294901760
        %2371 = vmatpush.msra.mxu0 %v2370
        %v2372 = vand.u32 %v1833, 4294901760
        %2373 = vmatmul.f32.gmra.mxu0 %v2372
        %v2374 = vpop.f32.mrf.mxu0
        %v2375 = vadd.f32 %v2342, %v2374
        %v2376 = vand.u32 %v1836, 4294901760
        %2377 = vmatmul.f32.gmra.mxu0 %v2376
        %v2378 = vpop.f32.mrf.mxu0
        %v2379 = vadd.f32 %v2348, %v2378
        %2380 = vdwg.mxu0
        %2381 = vmatpush.msra.mxu0 0.0
        %2382 = vmatpush.msra.mxu0 0.0
        %2383 = vmatpush.msra.mxu0 0.0
        %2384 = vmatpush.msra.mxu0 0.0
        %2385 = vmatpush.msra.mxu0 0.0
        %2386 = vmatpush.msra.mxu0 0.0
        %2387 = vmatpush.msra.mxu0 0.0
        %2388 = vmatpush.msra.mxu0 0.0
        %2389 = vmatpush.msra.mxu0 0.0
        %2390 = vmatpush.msra.mxu0 0.0
        %2391 = vmatpush.msra.mxu0 0.0
        %2392 = vmatpush.msra.mxu0 0.0
        %2393 = vmatpush.msra.mxu0 0.0
        %2394 = vmatpush.msra.mxu0 0.0
        %v2395 = vand.u32 %v1694, 4294901760
        %2396 = vmatpush.msra.mxu0 %v2395
        %v2397 = vand.u32 %v1690, 4294901760
        %2398 = vmatpush.msra.mxu0 %v2397
        %v2399 = vand.u32 %v1833, 4294901760
        %2400 = vmatmul.f32.gmra.mxu0 %v2399
        %v2401 = vpop.f32.mrf.mxu0
        %v2402 = vadd.f32 %v2375, %v2401
        %v2403 = vand.u32 %v1836, 4294901760
        %2404 = vmatmul.f32.gmra.mxu0 %v2403
        %v2405 = vpop.f32.mrf.mxu0
        %v2406 = vadd.f32 %v2379, %v2405
        %2407 = vdwg.mxu0
        %2408 = vmatpush.msra.mxu0 0.0
        %2409 = vmatpush.msra.mxu0 0.0
        %2410 = vmatpush.msra.mxu0 0.0
        %2411 = vmatpush.msra.mxu0 0.0
        %2412 = vmatpush.msra.mxu0 0.0
        %2413 = vmatpush.msra.mxu0 0.0
        %2414 = vmatpush.msra.mxu0 0.0
        %2415 = vmatpush.msra.mxu0 0.0
        %2416 = vmatpush.msra.mxu0 0.0
        %2417 = vmatpush.msra.mxu0 0.0
        %2418 = vmatpush.msra.mxu0 0.0
        %2419 = vmatpush.msra.mxu0 0.0
        %2420 = vmatpush.msra.mxu0 0.0
        %2421 = vmatpush.msra.mxu0 0.0
        %v2422 = vand.u32 %v1710, 4294901760
        %2423 = vmatpush.msra.mxu0 %v2422
        %v2424 = vand.u32 %v1706, 4294901760
        %2425 = vmatpush.msra.mxu0 %v2424
        %v2426 = vand.u32 %v1833, 4294901760
        %v2427 = vsub.f32 %v1833, %v2426
        %v2428 = vand.u32 %v2427, 4294901760
        %v2429 = vsub.f32 %v2427, %v2428
        %v2430 = vand.u32 %v2429, 4294901760
        %2431 = vmatmul.f32.gmra.mxu0 %v2430
        %v2432 = vpop.f32.mrf.mxu0
        %v2433 = vadd.f32 0.0, %v2432
        %v2434 = vand.u32 %v1836, 4294901760
        %v2435 = vsub.f32 %v1836, %v2434
        %v2436 = vand.u32 %v2435, 4294901760
        %v2437 = vsub.f32 %v2435, %v2436
        %v2438 = vand.u32 %v2437, 4294901760
        %2439 = vmatmul.f32.gmra.mxu0 %v2438
        %v2440 = vpop.f32.mrf.mxu0
        %v2441 = vadd.f32 0.0, %v2440
        %2442 = vdwg.mxu0
        %2443 = vmatpush.msra.mxu0 0.0
        %2444 = vmatpush.msra.mxu0 0.0
        %2445 = vmatpush.msra.mxu0 0.0
        %2446 = vmatpush.msra.mxu0 0.0
        %2447 = vmatpush.msra.mxu0 0.0
        %2448 = vmatpush.msra.mxu0 0.0
        %2449 = vmatpush.msra.mxu0 0.0
        %2450 = vmatpush.msra.mxu0 0.0
        %2451 = vmatpush.msra.mxu0 0.0
        %2452 = vmatpush.msra.mxu0 0.0
        %2453 = vmatpush.msra.mxu0 0.0
        %2454 = vmatpush.msra.mxu0 0.0
        %2455 = vmatpush.msra.mxu0 0.0
        %2456 = vmatpush.msra.mxu0 0.0
        %v2457 = vand.u32 %v1710, 4294901760
        %v2458 = vsub.f32 %v1710, %v2457
        %v2459 = vand.u32 %v2458, 4294901760
        %v2460 = vsub.f32 %v2458, %v2459
        %v2461 = vand.u32 %v2460, 4294901760
        %2462 = vmatpush.msra.mxu0 %v2461
        %v2463 = vand.u32 %v1706, 4294901760
        %v2464 = vsub.f32 %v1706, %v2463
        %v2465 = vand.u32 %v2464, 4294901760
        %v2466 = vsub.f32 %v2464, %v2465
        %v2467 = vand.u32 %v2466, 4294901760
        %2468 = vmatpush.msra.mxu0 %v2467
        %v2469 = vand.u32 %v1833, 4294901760
        %2470 = vmatmul.f32.gmra.mxu0 %v2469
        %v2471 = vpop.f32.mrf.mxu0
        %v2472 = vadd.f32 %v2433, %v2471
        %v2473 = vand.u32 %v1836, 4294901760
        %2474 = vmatmul.f32.gmra.mxu0 %v2473
        %v2475 = vpop.f32.mrf.mxu0
        %v2476 = vadd.f32 %v2441, %v2475
        %2477 = vdwg.mxu0
        %2478 = vmatpush.msra.mxu0 0.0
        %2479 = vmatpush.msra.mxu0 0.0
        %2480 = vmatpush.msra.mxu0 0.0
        %2481 = vmatpush.msra.mxu0 0.0
        %2482 = vmatpush.msra.mxu0 0.0
        %2483 = vmatpush.msra.mxu0 0.0
        %2484 = vmatpush.msra.mxu0 0.0
        %2485 = vmatpush.msra.mxu0 0.0
        %2486 = vmatpush.msra.mxu0 0.0
        %2487 = vmatpush.msra.mxu0 0.0
        %2488 = vmatpush.msra.mxu0 0.0
        %2489 = vmatpush.msra.mxu0 0.0
        %2490 = vmatpush.msra.mxu0 0.0
        %2491 = vmatpush.msra.mxu0 0.0
        %v2492 = vand.u32 %v1710, 4294901760
        %v2493 = vsub.f32 %v1710, %v2492
        %2494 = vmatpush.msra.mxu0 %v2493
        %v2495 = vand.u32 %v1706, 4294901760
        %v2496 = vsub.f32 %v1706, %v2495
        %2497 = vmatpush.msra.mxu0 %v2496
        %v2498 = vand.u32 %v1833, 4294901760
        %v2499 = vsub.f32 %v1833, %v2498
        %2500 = vmatmul.f32.gmra.mxu0 %v2499
        %v2501 = vpop.f32.mrf.mxu0
        %v2502 = vadd.f32 %v2472, %v2501
        %v2503 = vand.u32 %v1836, 4294901760
        %v2504 = vsub.f32 %v1836, %v2503
        %2505 = vmatmul.f32.gmra.mxu0 %v2504
        %v2506 = vpop.f32.mrf.mxu0
        %v2507 = vadd.f32 %v2476, %v2506
        %2508 = vdwg.mxu0
        %2509 = vmatpush.msra.mxu0 0.0
        %2510 = vmatpush.msra.mxu0 0.0
        %2511 = vmatpush.msra.mxu0 0.0
        %2512 = vmatpush.msra.mxu0 0.0
        %2513 = vmatpush.msra.mxu0 0.0
        %2514 = vmatpush.msra.mxu0 0.0
        %2515 = vmatpush.msra.mxu0 0.0
        %2516 = vmatpush.msra.mxu0 0.0
        %2517 = vmatpush.msra.mxu0 0.0
        %2518 = vmatpush.msra.mxu0 0.0
        %2519 = vmatpush.msra.mxu0 0.0
        %2520 = vmatpush.msra.mxu0 0.0
        %2521 = vmatpush.msra.mxu0 0.0
        %2522 = vmatpush.msra.mxu0 0.0
        %v2523 = vand.u32 %v1710, 4294901760
        %2524 = vmatpush.msra.mxu0 %v2523
        %v2525 = vand.u32 %v1706, 4294901760
        %2526 = vmatpush.msra.mxu0 %v2525
        %v2527 = vand.u32 %v1833, 4294901760
        %v2528 = vsub.f32 %v1833, %v2527
        %v2529 = vand.u32 %v2528, 4294901760
        %2530 = vmatmul.f32.gmra.mxu0 %v2529
        %v2531 = vpop.f32.mrf.mxu0
        %v2532 = vadd.f32 %v2502, %v2531
        %v2533 = vand.u32 %v1836, 4294901760
        %v2534 = vsub.f32 %v1836, %v2533
        %v2535 = vand.u32 %v2534, 4294901760
        %2536 = vmatmul.f32.gmra.mxu0 %v2535
        %v2537 = vpop.f32.mrf.mxu0
        %v2538 = vadd.f32 %v2507, %v2537
        %2539 = vdwg.mxu0
        %2540 = vmatpush.msra.mxu0 0.0
        %2541 = vmatpush.msra.mxu0 0.0
        %2542 = vmatpush.msra.mxu0 0.0
        %2543 = vmatpush.msra.mxu0 0.0
        %2544 = vmatpush.msra.mxu0 0.0
        %2545 = vmatpush.msra.mxu0 0.0
        %2546 = vmatpush.msra.mxu0 0.0
        %2547 = vmatpush.msra.mxu0 0.0
        %2548 = vmatpush.msra.mxu0 0.0
        %2549 = vmatpush.msra.mxu0 0.0
        %2550 = vmatpush.msra.mxu0 0.0
        %2551 = vmatpush.msra.mxu0 0.0
        %2552 = vmatpush.msra.mxu0 0.0
        %2553 = vmatpush.msra.mxu0 0.0
        %v2554 = vand.u32 %v1710, 4294901760
        %v2555 = vsub.f32 %v1710, %v2554
        %v2556 = vand.u32 %v2555, 4294901760
        %2557 = vmatpush.msra.mxu0 %v2556
        %v2558 = vand.u32 %v1706, 4294901760
        %v2559 = vsub.f32 %v1706, %v2558
        %v2560 = vand.u32 %v2559, 4294901760
        %2561 = vmatpush.msra.mxu0 %v2560
        %v2562 = vand.u32 %v1833, 4294901760
        %2563 = vmatmul.f32.gmra.mxu0 %v2562
        %v2564 = vpop.f32.mrf.mxu0
        %v2565 = vadd.f32 %v2532, %v2564
        %v2566 = vand.u32 %v1836, 4294901760
        %2567 = vmatmul.f32.gmra.mxu0 %v2566
        %v2568 = vpop.f32.mrf.mxu0
        %v2569 = vadd.f32 %v2538, %v2568
        %2570 = vdwg.mxu0
        %2571 = vmatpush.msra.mxu0 0.0
        %2572 = vmatpush.msra.mxu0 0.0
        %2573 = vmatpush.msra.mxu0 0.0
        %2574 = vmatpush.msra.mxu0 0.0
        %2575 = vmatpush.msra.mxu0 0.0
        %2576 = vmatpush.msra.mxu0 0.0
        %2577 = vmatpush.msra.mxu0 0.0
        %2578 = vmatpush.msra.mxu0 0.0
        %2579 = vmatpush.msra.mxu0 0.0
        %2580 = vmatpush.msra.mxu0 0.0
        %2581 = vmatpush.msra.mxu0 0.0
        %2582 = vmatpush.msra.mxu0 0.0
        %2583 = vmatpush.msra.mxu0 0.0
        %2584 = vmatpush.msra.mxu0 0.0
        %v2585 = vand.u32 %v1710, 4294901760
        %2586 = vmatpush.msra.mxu0 %v2585
        %v2587 = vand.u32 %v1706, 4294901760
        %2588 = vmatpush.msra.mxu0 %v2587
        %v2589 = vand.u32 %v1833, 4294901760
        %2590 = vmatmul.f32.gmra.mxu0 %v2589
        %v2591 = vpop.f32.mrf.mxu0
        %v2592 = vadd.f32 %v2565, %v2591
        %v2593 = vand.u32 %v1836, 4294901760
        %2594 = vmatmul.f32.gmra.mxu0 %v2593
        %v2595 = vpop.f32.mrf.mxu0
        %v2596 = vadd.f32 %v2569, %v2595
        %2597 = vdwg.mxu0
        %v2598 = vmul.f32 %v2022, %v2212
        %v2599 = vmul.f32 %v2026, %v2216
        %v2600 = vmul.f32 %v2598, 2.0
        %v2601 = vmul.f32 %v2599, 2.0
        %v2602 = vadd.f32 %v2600, 0.0001
        %v2603 = vadd.f32 %v2601, 0.0001
        %v2604 = vmul.f32 %v2022, %v2022
        %v2605 = vmul.f32 %v2026, %v2026
        %v2606 = vmul.f32 %v2212, %v2212
        %v2607 = vmul.f32 %v2216, %v2216
        %v2608 = vadd.f32 %v2604, %v2606
        %v2609 = vadd.f32 %v2605, %v2607
        %v2610 = vadd.f32 %v2608, 0.0001
        %v2611 = vadd.f32 %v2609, 0.0001
        %v2612 = vmul.f32 %v2402, 2.0
        %v2613 = vmul.f32 %v2406, 2.0
        %v2614 = vsub.f32 %v2612, %v2602
        %v2615 = vsub.f32 %v2613, %v2603
        %v2616 = vadd.f32 %v2614, 0.001
        %v2617 = vadd.f32 %v2615, 0.001
        %2618 = vmatpush.msra.mxu0 0.0
        %2619 = vmatpush.msra.mxu0 0.0
        %2620 = vmatpush.msra.mxu0 0.0
        %2621 = vmatpush.msra.mxu0 0.0
        %2622 = vmatpush.msra.mxu0 0.0
        %2623 = vmatpush.msra.mxu0 0.0
        %2624 = vmatpush.msra.mxu0 0.0
        %2625 = vmatpush.msra.mxu0 0.0
        %2626 = vmatpush.msra.mxu0 0.0
        %2627 = vmatpush.msra.mxu0 0.0
        %2628 = vmatpush.msra.mxu0 0.0
        %2629 = vmatpush.msra.mxu0 0.0
        %2630 = vmatpush.msra.mxu0 0.0
        %2631 = vmatpush.msra.mxu0 0.0
        %v2632 = vand.u32 %v1702, 4294901760
        %2633 = vmatpush.msra.mxu0 %v2632
        %v2634 = vand.u32 %v1698, 4294901760
        %2635 = vmatpush.msra.mxu0 %v2634
        %v2636 = vand.u32 %v1833, 4294901760
        %v2637 = vsub.f32 %v1833, %v2636
        %v2638 = vand.u32 %v2637, 4294901760
        %v2639 = vsub.f32 %v2637, %v2638
        %v2640 = vand.u32 %v2639, 4294901760
        %2641 = vmatmul.f32.gmra.mxu0 %v2640
        %v2642 = vpop.f32.mrf.mxu0
        %v2643 = vadd.f32 %v2592, %v2642
        %v2644 = vand.u32 %v1836, 4294901760
        %v2645 = vsub.f32 %v1836, %v2644
        %v2646 = vand.u32 %v2645, 4294901760
        %v2647 = vsub.f32 %v2645, %v2646
        %v2648 = vand.u32 %v2647, 4294901760
        %2649 = vmatmul.f32.gmra.mxu0 %v2648
        %v2650 = vpop.f32.mrf.mxu0
        %v2651 = vadd.f32 %v2596, %v2650
        %2652 = vdwg.mxu0
        %2653 = vmatpush.msra.mxu0 0.0
        %2654 = vmatpush.msra.mxu0 0.0
        %2655 = vmatpush.msra.mxu0 0.0
        %2656 = vmatpush.msra.mxu0 0.0
        %2657 = vmatpush.msra.mxu0 0.0
        %2658 = vmatpush.msra.mxu0 0.0
        %2659 = vmatpush.msra.mxu0 0.0
        %2660 = vmatpush.msra.mxu0 0.0
        %2661 = vmatpush.msra.mxu0 0.0
        %2662 = vmatpush.msra.mxu0 0.0
        %2663 = vmatpush.msra.mxu0 0.0
        %2664 = vmatpush.msra.mxu0 0.0
        %2665 = vmatpush.msra.mxu0 0.0
        %2666 = vmatpush.msra.mxu0 0.0
        %v2667 = vand.u32 %v1702, 4294901760
        %v2668 = vsub.f32 %v1702, %v2667
        %v2669 = vand.u32 %v2668, 4294901760
        %v2670 = vsub.f32 %v2668, %v2669
        %v2671 = vand.u32 %v2670, 4294901760
        %2672 = vmatpush.msra.mxu0 %v2671
        %v2673 = vand.u32 %v1698, 4294901760
        %v2674 = vsub.f32 %v1698, %v2673
        %v2675 = vand.u32 %v2674, 4294901760
        %v2676 = vsub.f32 %v2674, %v2675
        %v2677 = vand.u32 %v2676, 4294901760
        %2678 = vmatpush.msra.mxu0 %v2677
        %v2679 = vand.u32 %v1833, 4294901760
        %2680 = vmatmul.f32.gmra.mxu0 %v2679
        %v2681 = vpop.f32.mrf.mxu0
        %v2682 = vadd.f32 %v2643, %v2681
        %v2683 = vand.u32 %v1836, 4294901760
        %2684 = vmatmul.f32.gmra.mxu0 %v2683
        %v2685 = vpop.f32.mrf.mxu0
        %v2686 = vadd.f32 %v2651, %v2685
        %2687 = vdwg.mxu0
        %2688 = vmatpush.msra.mxu0 0.0
        %2689 = vmatpush.msra.mxu0 0.0
        %2690 = vmatpush.msra.mxu0 0.0
        %2691 = vmatpush.msra.mxu0 0.0
        %2692 = vmatpush.msra.mxu0 0.0
        %2693 = vmatpush.msra.mxu0 0.0
        %2694 = vmatpush.msra.mxu0 0.0
        %2695 = vmatpush.msra.mxu0 0.0
        %2696 = vmatpush.msra.mxu0 0.0
        %2697 = vmatpush.msra.mxu0 0.0
        %2698 = vmatpush.msra.mxu0 0.0
        %2699 = vmatpush.msra.mxu0 0.0
        %2700 = vmatpush.msra.mxu0 0.0
        %2701 = vmatpush.msra.mxu0 0.0
        %v2702 = vand.u32 %v1702, 4294901760
        %v2703 = vsub.f32 %v1702, %v2702
        %2704 = vmatpush.msra.mxu0 %v2703
        %v2705 = vand.u32 %v1698, 4294901760
        %v2706 = vsub.f32 %v1698, %v2705
        %2707 = vmatpush.msra.mxu0 %v2706
        %v2708 = vand.u32 %v1833, 4294901760
        %v2709 = vsub.f32 %v1833, %v2708
        %2710 = vmatmul.f32.gmra.mxu0 %v2709
        %v2711 = vpop.f32.mrf.mxu0
        %v2712 = vadd.f32 %v2682, %v2711
        %v2713 = vand.u32 %v1836, 4294901760
        %v2714 = vsub.f32 %v1836, %v2713
        %2715 = vmatmul.f32.gmra.mxu0 %v2714
        %v2716 = vpop.f32.mrf.mxu0
        %v2717 = vadd.f32 %v2686, %v2716
        %2718 = vdwg.mxu0
        %2719 = vmatpush.msra.mxu0 0.0
        %2720 = vmatpush.msra.mxu0 0.0
        %2721 = vmatpush.msra.mxu0 0.0
        %2722 = vmatpush.msra.mxu0 0.0
        %2723 = vmatpush.msra.mxu0 0.0
        %2724 = vmatpush.msra.mxu0 0.0
        %2725 = vmatpush.msra.mxu0 0.0
        %2726 = vmatpush.msra.mxu0 0.0
        %2727 = vmatpush.msra.mxu0 0.0
        %2728 = vmatpush.msra.mxu0 0.0
        %2729 = vmatpush.msra.mxu0 0.0
        %2730 = vmatpush.msra.mxu0 0.0
        %2731 = vmatpush.msra.mxu0 0.0
        %2732 = vmatpush.msra.mxu0 0.0
        %v2733 = vand.u32 %v1702, 4294901760
        %2734 = vmatpush.msra.mxu0 %v2733
        %v2735 = vand.u32 %v1698, 4294901760
        %2736 = vmatpush.msra.mxu0 %v2735
        %v2737 = vand.u32 %v1833, 4294901760
        %v2738 = vsub.f32 %v1833, %v2737
        %v2739 = vand.u32 %v2738, 4294901760
        %2740 = vmatmul.f32.gmra.mxu0 %v2739
        %v2741 = vpop.f32.mrf.mxu0
        %v2742 = vadd.f32 %v2712, %v2741
        %v2743 = vand.u32 %v1836, 4294901760
        %v2744 = vsub.f32 %v1836, %v2743
        %v2745 = vand.u32 %v2744, 4294901760
        %2746 = vmatmul.f32.gmra.mxu0 %v2745
        %v2747 = vpop.f32.mrf.mxu0
        %v2748 = vadd.f32 %v2717, %v2747
        %2749 = vdwg.mxu0
        %2750 = vmatpush.msra.mxu0 0.0
        %2751 = vmatpush.msra.mxu0 0.0
        %2752 = vmatpush.msra.mxu0 0.0
        %2753 = vmatpush.msra.mxu0 0.0
        %2754 = vmatpush.msra.mxu0 0.0
        %2755 = vmatpush.msra.mxu0 0.0
        %2756 = vmatpush.msra.mxu0 0.0
        %2757 = vmatpush.msra.mxu0 0.0
        %2758 = vmatpush.msra.mxu0 0.0
        %2759 = vmatpush.msra.mxu0 0.0
        %2760 = vmatpush.msra.mxu0 0.0
        %2761 = vmatpush.msra.mxu0 0.0
        %2762 = vmatpush.msra.mxu0 0.0
        %2763 = vmatpush.msra.mxu0 0.0
        %v2764 = vand.u32 %v1702, 4294901760
        %v2765 = vsub.f32 %v1702, %v2764
        %v2766 = vand.u32 %v2765, 4294901760
        %2767 = vmatpush.msra.mxu0 %v2766
        %v2768 = vand.u32 %v1698, 4294901760
        %v2769 = vsub.f32 %v1698, %v2768
        %v2770 = vand.u32 %v2769, 4294901760
        %2771 = vmatpush.msra.mxu0 %v2770
        %v2772 = vand.u32 %v1833, 4294901760
        %2773 = vmatmul.f32.gmra.mxu0 %v2772
        %v2774 = vpop.f32.mrf.mxu0
        %v2775 = vadd.f32 %v2742, %v2774
        %v2776 = vand.u32 %v1836, 4294901760
        %2777 = vmatmul.f32.gmra.mxu0 %v2776
        %v2778 = vpop.f32.mrf.mxu0
        %v2779 = vadd.f32 %v2748, %v2778
        %2780 = vdwg.mxu0
        %2781 = vmatpush.msra.mxu0 0.0
        %2782 = vmatpush.msra.mxu0 0.0
        %2783 = vmatpush.msra.mxu0 0.0
        %2784 = vmatpush.msra.mxu0 0.0
        %2785 = vmatpush.msra.mxu0 0.0
        %2786 = vmatpush.msra.mxu0 0.0
        %2787 = vmatpush.msra.mxu0 0.0
        %2788 = vmatpush.msra.mxu0 0.0
        %2789 = vmatpush.msra.mxu0 0.0
        %2790 = vmatpush.msra.mxu0 0.0
        %2791 = vmatpush.msra.mxu0 0.0
        %2792 = vmatpush.msra.mxu0 0.0
        %2793 = vmatpush.msra.mxu0 0.0
        %2794 = vmatpush.msra.mxu0 0.0
        %v2795 = vand.u32 %v1702, 4294901760
        %2796 = vmatpush.msra.mxu0 %v2795
        %v2797 = vand.u32 %v1698, 4294901760
        %2798 = vmatpush.msra.mxu0 %v2797
        %v2799 = vand.u32 %v1833, 4294901760
        %2800 = vmatmul.f32.gmra.mxu0 %v2799
        %v2801 = vpop.f32.mrf.mxu0
        %v2802 = vadd.f32 %v2775, %v2801
        %v2803 = vand.u32 %v1836, 4294901760
        %2804 = vmatmul.f32.gmra.mxu0 %v2803
        %v2805 = vpop.f32.mrf.mxu0
        %v2806 = vadd.f32 %v2779, %v2805
        %2807 = vdwg.mxu0
        %v2808 = vsub.f32 %v2802, %v2610
        %v2809 = vsub.f32 %v2806, %v2611
        %v2810 = vadd.f32 %v2808, 0.001
        %v2811 = vadd.f32 %v2809, 0.001
        %v2812 = vmul.f32 %v2602, %v2616
        %v2813 = vmul.f32 %v2603, %v2617
        %v2814 = vmul.f32 %v2610, %v2810
        %v2815 = vmul.f32 %v2611, %v2811
        %v2816 = vrcp.pop %v2814
        %v2817 = vmul.f32 %v2814, %v2816
        %v2818 = vsub.f32 1.0, %v2817
        %v2819 = vmul.f32 %v2816, %v2818
        %v2820 = vadd.f32 %v2816, %v2819
        %vm2821 = vweird.f32 %v2814
        %vm2822 = vweird.f32 %v2816
        %vm2823 = vmor %vm2821, %vm2822
        %v2824 = vsel %vm2823, %v2816, %v2820
        %v2825 = vand.u32 2147483647, %v2814
        %vm2826 = vcmp.eq.f32.partialorder %v2825, 8.507059e+37
        %v2827 = vand.u32 %v2814, 2147483648
        %v2828 = vor.u32 1.1754944e-38, %v2827
        %v2829 = vsel %vm2826, %v2828, %v2824
        %v2830 = vmul.f32 %v2812, %v2829
        %v2831 = vrcp.pop %v2815
        %v2832 = vmul.f32 %v2815, %v2831
        %v2833 = vsub.f32 1.0, %v2832
        %v2834 = vmul.f32 %v2831, %v2833
        %v2835 = vadd.f32 %v2831, %v2834
        %vm2836 = vweird.f32 %v2815
        %vm2837 = vweird.f32 %v2831
        %vm2838 = vmor %vm2836, %vm2837
        %v2839 = vsel %vm2838, %v2831, %v2835
        %v2840 = vand.u32 2147483647, %v2815
        %vm2841 = vcmp.eq.f32.partialorder %v2840, 8.507059e+37
        %v2842 = vand.u32 %v2815, 2147483648
        %v2843 = vor.u32 1.1754944e-38, %v2842
        %v2844 = vsel %vm2841, %v2843, %v2839
        %v2845 = vmul.f32 %v2813, %v2844
        %v2846 = vsel %vm343, %v2830, 0.0
        %v2847 = vsel %vm343, %v2845, 0.0
        %v2848 = vadd.f32 %v2846, %v2847
        %2849 = vadd.xlane.f32.xlu0 %v2848
        %v2850 = vpop.xlane.xlu0 %2849
        %v2851 = vrot.slane %v2850, 4
        %v2852 = vadd.f32 %v2850, %v2851
        %v2853 = vrot.slane %v2852, 2
        %v2854 = vadd.f32 %v2852, %v2853
        %v2855 = vrot.slane %v2854, 1
        %v2856 = vadd.f32 %v2854, %v2855
        %s2857 = vtos %v2856
        %v2858 = vstv %s2857
        %vm2859 = vcmask 0
        %2860 = vst.msk [vmem:[%s291] sm:$0x1] %vm2859, %v2858
        %2861 = vmatpush.msra.mxu0 0.0
        %2862 = vmatpush.msra.mxu0 0.0
        %2863 = vmatpush.msra.mxu0 0.0
        %2864 = vmatpush.msra.mxu0 0.0
        %2865 = vmatpush.msra.mxu0 0.0
        %2866 = vmatpush.msra.mxu0 0.0
        %2867 = vmatpush.msra.mxu0 0.0
        %2868 = vmatpush.msra.mxu0 0.0
        %2869 = vmatpush.msra.mxu0 0.0
        %2870 = vmatpush.msra.mxu0 0.0
        %2871 = vmatpush.msra.mxu0 0.0
        %2872 = vmatpush.msra.mxu0 0.0
        %2873 = vmatpush.msra.mxu0 0.0
        %2874 = vmatpush.msra.mxu0 0.0
        %v2875 = vand.u32 %v1718, 4294901760
        %2876 = vmatpush.msra.mxu0 %v2875
        %v2877 = vand.u32 %v1714, 4294901760
        %2878 = vmatpush.msra.mxu0 %v2877
        %v2879 = vand.u32 %v1833, 4294901760
        %v2880 = vsub.f32 %v1833, %v2879
        %v2881 = vand.u32 %v2880, 4294901760
        %v2882 = vsub.f32 %v2880, %v2881
        %v2883 = vand.u32 %v2882, 4294901760
        %2884 = vmatmul.f32.gmra.mxu0 %v2883
        %v2885 = vpop.f32.mrf.mxu0
        %v2886 = vadd.f32 0.0, %v2885
        %v2887 = vand.u32 %v1836, 4294901760
        %v2888 = vsub.f32 %v1836, %v2887
        %v2889 = vand.u32 %v2888, 4294901760
        %v2890 = vsub.f32 %v2888, %v2889
        %v2891 = vand.u32 %v2890, 4294901760
        %2892 = vmatmul.f32.gmra.mxu0 %v2891
        %v2893 = vpop.f32.mrf.mxu0
        %v2894 = vadd.f32 0.0, %v2893
        %2895 = vdwg.mxu0
        %2896 = vmatpush.msra.mxu0 0.0
        %2897 = vmatpush.msra.mxu0 0.0
        %2898 = vmatpush.msra.mxu0 0.0
        %2899 = vmatpush.msra.mxu0 0.0
        %2900 = vmatpush.msra.mxu0 0.0
        %2901 = vmatpush.msra.mxu0 0.0
        %2902 = vmatpush.msra.mxu0 0.0
        %2903 = vmatpush.msra.mxu0 0.0
        %2904 = vmatpush.msra.mxu0 0.0
        %2905 = vmatpush.msra.mxu0 0.0
        %2906 = vmatpush.msra.mxu0 0.0
        %2907 = vmatpush.msra.mxu0 0.0
        %2908 = vmatpush.msra.mxu0 0.0
        %2909 = vmatpush.msra.mxu0 0.0
        %v2910 = vand.u32 %v1718, 4294901760
        %v2911 = vsub.f32 %v1718, %v2910
        %v2912 = vand.u32 %v2911, 4294901760
        %v2913 = vsub.f32 %v2911, %v2912
        %v2914 = vand.u32 %v2913, 4294901760
        %2915 = vmatpush.msra.mxu0 %v2914
        %v2916 = vand.u32 %v1714, 4294901760
        %v2917 = vsub.f32 %v1714, %v2916
        %v2918 = vand.u32 %v2917, 4294901760
        %v2919 = vsub.f32 %v2917, %v2918
        %v2920 = vand.u32 %v2919, 4294901760
        %2921 = vmatpush.msra.mxu0 %v2920
        %v2922 = vand.u32 %v1833, 4294901760
        %2923 = vmatmul.f32.gmra.mxu0 %v2922
        %v2924 = vpop.f32.mrf.mxu0
        %v2925 = vadd.f32 %v2886, %v2924
        %v2926 = vand.u32 %v1836, 4294901760
        %2927 = vmatmul.f32.gmra.mxu0 %v2926
        %v2928 = vpop.f32.mrf.mxu0
        %v2929 = vadd.f32 %v2894, %v2928
        %2930 = vdwg.mxu0
        %2931 = vmatpush.msra.mxu0 0.0
        %2932 = vmatpush.msra.mxu0 0.0
        %2933 = vmatpush.msra.mxu0 0.0
        %2934 = vmatpush.msra.mxu0 0.0
        %2935 = vmatpush.msra.mxu0 0.0
        %2936 = vmatpush.msra.mxu0 0.0
        %2937 = vmatpush.msra.mxu0 0.0
        %2938 = vmatpush.msra.mxu0 0.0
        %2939 = vmatpush.msra.mxu0 0.0
        %2940 = vmatpush.msra.mxu0 0.0
        %2941 = vmatpush.msra.mxu0 0.0
        %2942 = vmatpush.msra.mxu0 0.0
        %2943 = vmatpush.msra.mxu0 0.0
        %2944 = vmatpush.msra.mxu0 0.0
        %v2945 = vand.u32 %v1718, 4294901760
        %v2946 = vsub.f32 %v1718, %v2945
        %2947 = vmatpush.msra.mxu0 %v2946
        %v2948 = vand.u32 %v1714, 4294901760
        %v2949 = vsub.f32 %v1714, %v2948
        %2950 = vmatpush.msra.mxu0 %v2949
        %v2951 = vand.u32 %v1833, 4294901760
        %v2952 = vsub.f32 %v1833, %v2951
        %2953 = vmatmul.f32.gmra.mxu0 %v2952
        %v2954 = vpop.f32.mrf.mxu0
        %v2955 = vadd.f32 %v2925, %v2954
        %v2956 = vand.u32 %v1836, 4294901760
        %v2957 = vsub.f32 %v1836, %v2956
        %2958 = vmatmul.f32.gmra.mxu0 %v2957
        %v2959 = vpop.f32.mrf.mxu0
        %v2960 = vadd.f32 %v2929, %v2959
        %2961 = vdwg.mxu0
        %2962 = vmatpush.msra.mxu0 0.0
        %2963 = vmatpush.msra.mxu0 0.0
        %2964 = vmatpush.msra.mxu0 0.0
        %2965 = vmatpush.msra.mxu0 0.0
        %2966 = vmatpush.msra.mxu0 0.0
        %2967 = vmatpush.msra.mxu0 0.0
        %2968 = vmatpush.msra.mxu0 0.0
        %2969 = vmatpush.msra.mxu0 0.0
        %2970 = vmatpush.msra.mxu0 0.0
        %2971 = vmatpush.msra.mxu0 0.0
        %2972 = vmatpush.msra.mxu0 0.0
        %2973 = vmatpush.msra.mxu0 0.0
        %2974 = vmatpush.msra.mxu0 0.0
        %2975 = vmatpush.msra.mxu0 0.0
        %v2976 = vand.u32 %v1718, 4294901760
        %2977 = vmatpush.msra.mxu0 %v2976
        %v2978 = vand.u32 %v1714, 4294901760
        %2979 = vmatpush.msra.mxu0 %v2978
        %v2980 = vand.u32 %v1833, 4294901760
        %v2981 = vsub.f32 %v1833, %v2980
        %v2982 = vand.u32 %v2981, 4294901760
        %2983 = vmatmul.f32.gmra.mxu0 %v2982
        %v2984 = vpop.f32.mrf.mxu0
        %v2985 = vadd.f32 %v2955, %v2984
        %v2986 = vand.u32 %v1836, 4294901760
        %v2987 = vsub.f32 %v1836, %v2986
        %v2988 = vand.u32 %v2987, 4294901760
        %2989 = vmatmul.f32.gmra.mxu0 %v2988
        %v2990 = vpop.f32.mrf.mxu0
        %v2991 = vadd.f32 %v2960, %v2990
        %2992 = vdwg.mxu0
        %2993 = vmatpush.msra.mxu0 0.0
        %2994 = vmatpush.msra.mxu0 0.0
        %2995 = vmatpush.msra.mxu0 0.0
        %2996 = vmatpush.msra.mxu0 0.0
        %2997 = vmatpush.msra.mxu0 0.0
        %2998 = vmatpush.msra.mxu0 0.0
        %2999 = vmatpush.msra.mxu0 0.0
        %3000 = vmatpush.msra.mxu0 0.0
        %3001 = vmatpush.msra.mxu0 0.0
        %3002 = vmatpush.msra.mxu0 0.0
        %3003 = vmatpush.msra.mxu0 0.0
        %3004 = vmatpush.msra.mxu0 0.0
        %3005 = vmatpush.msra.mxu0 0.0
        %3006 = vmatpush.msra.mxu0 0.0
        %v3007 = vand.u32 %v1718, 4294901760
        %v3008 = vsub.f32 %v1718, %v3007
        %v3009 = vand.u32 %v3008, 4294901760
        %3010 = vmatpush.msra.mxu0 %v3009
        %v3011 = vand.u32 %v1714, 4294901760
        %v3012 = vsub.f32 %v1714, %v3011
        %v3013 = vand.u32 %v3012, 4294901760
        %3014 = vmatpush.msra.mxu0 %v3013
        %v3015 = vand.u32 %v1833, 4294901760
        %3016 = vmatmul.f32.gmra.mxu0 %v3015
        %v3017 = vpop.f32.mrf.mxu0
        %v3018 = vadd.f32 %v2985, %v3017
        %v3019 = vand.u32 %v1836, 4294901760
        %3020 = vmatmul.f32.gmra.mxu0 %v3019
        %v3021 = vpop.f32.mrf.mxu0
        %v3022 = vadd.f32 %v2991, %v3021
        %3023 = vdwg.mxu0
        %3024 = vmatpush.msra.mxu0 0.0
        %3025 = vmatpush.msra.mxu0 0.0
        %3026 = vmatpush.msra.mxu0 0.0
        %3027 = vmatpush.msra.mxu0 0.0
        %3028 = vmatpush.msra.mxu0 0.0
        %3029 = vmatpush.msra.mxu0 0.0
        %3030 = vmatpush.msra.mxu0 0.0
        %3031 = vmatpush.msra.mxu0 0.0
        %3032 = vmatpush.msra.mxu0 0.0
        %3033 = vmatpush.msra.mxu0 0.0
        %3034 = vmatpush.msra.mxu0 0.0
        %3035 = vmatpush.msra.mxu0 0.0
        %3036 = vmatpush.msra.mxu0 0.0
        %3037 = vmatpush.msra.mxu0 0.0
        %v3038 = vand.u32 %v1718, 4294901760
        %3039 = vmatpush.msra.mxu0 %v3038
        %v3040 = vand.u32 %v1714, 4294901760
        %3041 = vmatpush.msra.mxu0 %v3040
        %v3042 = vand.u32 %v1833, 4294901760
        %3043 = vmatmul.f32.gmra.mxu0 %v3042
        %v3044 = vpop.f32.mrf.mxu0
        %v3045 = vadd.f32 %v3018, %v3044
        %v3046 = vand.u32 %v1836, 4294901760
        %3047 = vmatmul.f32.gmra.mxu0 %v3046
        %v3048 = vpop.f32.mrf.mxu0
        %v3049 = vadd.f32 %v3022, %v3048
        %3050 = vdwg.mxu0
        %3051 = vmatpush.msra.mxu0 0.0
        %3052 = vmatpush.msra.mxu0 0.0
        %3053 = vmatpush.msra.mxu0 0.0
        %3054 = vmatpush.msra.mxu0 0.0
        %3055 = vmatpush.msra.mxu0 0.0
        %3056 = vmatpush.msra.mxu0 0.0
        %3057 = vmatpush.msra.mxu0 0.0
        %3058 = vmatpush.msra.mxu0 0.0
        %3059 = vmatpush.msra.mxu0 0.0
        %3060 = vmatpush.msra.mxu0 0.0
        %3061 = vmatpush.msra.mxu0 0.0
        %3062 = vmatpush.msra.mxu0 0.0
        %3063 = vmatpush.msra.mxu0 0.0
        %3064 = vmatpush.msra.mxu0 0.0
        %v3065 = vand.u32 %v1726, 4294901760
        %3066 = vmatpush.msra.mxu0 %v3065
        %v3067 = vand.u32 %v1722, 4294901760
        %3068 = vmatpush.msra.mxu0 %v3067
        %v3069 = vand.u32 %v1833, 4294901760
        %v3070 = vsub.f32 %v1833, %v3069
        %v3071 = vand.u32 %v3070, 4294901760
        %v3072 = vsub.f32 %v3070, %v3071
        %v3073 = vand.u32 %v3072, 4294901760
        %3074 = vmatmul.f32.gmra.mxu0 %v3073
        %v3075 = vpop.f32.mrf.mxu0
        %v3076 = vadd.f32 0.0, %v3075
        %v3077 = vand.u32 %v1836, 4294901760
        %v3078 = vsub.f32 %v1836, %v3077
        %v3079 = vand.u32 %v3078, 4294901760
        %v3080 = vsub.f32 %v3078, %v3079
        %v3081 = vand.u32 %v3080, 4294901760
        %3082 = vmatmul.f32.gmra.mxu0 %v3081
        %v3083 = vpop.f32.mrf.mxu0
        %v3084 = vadd.f32 0.0, %v3083
        %3085 = vdwg.mxu0
        %3086 = vmatpush.msra.mxu0 0.0
        %3087 = vmatpush.msra.mxu0 0.0
        %3088 = vmatpush.msra.mxu0 0.0
        %3089 = vmatpush.msra.mxu0 0.0
        %3090 = vmatpush.msra.mxu0 0.0
        %3091 = vmatpush.msra.mxu0 0.0
        %3092 = vmatpush.msra.mxu0 0.0
        %3093 = vmatpush.msra.mxu0 0.0
        %3094 = vmatpush.msra.mxu0 0.0
        %3095 = vmatpush.msra.mxu0 0.0
        %3096 = vmatpush.msra.mxu0 0.0
        %3097 = vmatpush.msra.mxu0 0.0
        %3098 = vmatpush.msra.mxu0 0.0
        %3099 = vmatpush.msra.mxu0 0.0
        %v3100 = vand.u32 %v1726, 4294901760
        %v3101 = vsub.f32 %v1726, %v3100
        %v3102 = vand.u32 %v3101, 4294901760
        %v3103 = vsub.f32 %v3101, %v3102
        %v3104 = vand.u32 %v3103, 4294901760
        %3105 = vmatpush.msra.mxu0 %v3104
        %v3106 = vand.u32 %v1722, 4294901760
        %v3107 = vsub.f32 %v1722, %v3106
        %v3108 = vand.u32 %v3107, 4294901760
        %v3109 = vsub.f32 %v3107, %v3108
        %v3110 = vand.u32 %v3109, 4294901760
        %3111 = vmatpush.msra.mxu0 %v3110
        %v3112 = vand.u32 %v1833, 4294901760
        %3113 = vmatmul.f32.gmra.mxu0 %v3112
        %v3114 = vpop.f32.mrf.mxu0
        %v3115 = vadd.f32 %v3076, %v3114
        %v3116 = vand.u32 %v1836, 4294901760
        %3117 = vmatmul.f32.gmra.mxu0 %v3116
        %v3118 = vpop.f32.mrf.mxu0
        %v3119 = vadd.f32 %v3084, %v3118
        %3120 = vdwg.mxu0
        %3121 = vmatpush.msra.mxu0 0.0
        %3122 = vmatpush.msra.mxu0 0.0
        %3123 = vmatpush.msra.mxu0 0.0
        %3124 = vmatpush.msra.mxu0 0.0
        %3125 = vmatpush.msra.mxu0 0.0
        %3126 = vmatpush.msra.mxu0 0.0
        %3127 = vmatpush.msra.mxu0 0.0
        %3128 = vmatpush.msra.mxu0 0.0
        %3129 = vmatpush.msra.mxu0 0.0
        %3130 = vmatpush.msra.mxu0 0.0
        %3131 = vmatpush.msra.mxu0 0.0
        %3132 = vmatpush.msra.mxu0 0.0
        %3133 = vmatpush.msra.mxu0 0.0
        %3134 = vmatpush.msra.mxu0 0.0
        %v3135 = vand.u32 %v1726, 4294901760
        %v3136 = vsub.f32 %v1726, %v3135
        %3137 = vmatpush.msra.mxu0 %v3136
        %v3138 = vand.u32 %v1722, 4294901760
        %v3139 = vsub.f32 %v1722, %v3138
        %3140 = vmatpush.msra.mxu0 %v3139
        %v3141 = vand.u32 %v1833, 4294901760
        %v3142 = vsub.f32 %v1833, %v3141
        %3143 = vmatmul.f32.gmra.mxu0 %v3142
        %v3144 = vpop.f32.mrf.mxu0
        %v3145 = vadd.f32 %v3115, %v3144
        %v3146 = vand.u32 %v1836, 4294901760
        %v3147 = vsub.f32 %v1836, %v3146
        %3148 = vmatmul.f32.gmra.mxu0 %v3147
        %v3149 = vpop.f32.mrf.mxu0
        %v3150 = vadd.f32 %v3119, %v3149
        %3151 = vdwg.mxu0
        %3152 = vmatpush.msra.mxu0 0.0
        %3153 = vmatpush.msra.mxu0 0.0
        %3154 = vmatpush.msra.mxu0 0.0
        %3155 = vmatpush.msra.mxu0 0.0
        %3156 = vmatpush.msra.mxu0 0.0
        %3157 = vmatpush.msra.mxu0 0.0
        %3158 = vmatpush.msra.mxu0 0.0
        %3159 = vmatpush.msra.mxu0 0.0
        %3160 = vmatpush.msra.mxu0 0.0
        %3161 = vmatpush.msra.mxu0 0.0
        %3162 = vmatpush.msra.mxu0 0.0
        %3163 = vmatpush.msra.mxu0 0.0
        %3164 = vmatpush.msra.mxu0 0.0
        %3165 = vmatpush.msra.mxu0 0.0
        %v3166 = vand.u32 %v1726, 4294901760
        %3167 = vmatpush.msra.mxu0 %v3166
        %v3168 = vand.u32 %v1722, 4294901760
        %3169 = vmatpush.msra.mxu0 %v3168
        %v3170 = vand.u32 %v1833, 4294901760
        %v3171 = vsub.f32 %v1833, %v3170
        %v3172 = vand.u32 %v3171, 4294901760
        %3173 = vmatmul.f32.gmra.mxu0 %v3172
        %v3174 = vpop.f32.mrf.mxu0
        %v3175 = vadd.f32 %v3145, %v3174
        %v3176 = vand.u32 %v1836, 4294901760
        %v3177 = vsub.f32 %v1836, %v3176
        %v3178 = vand.u32 %v3177, 4294901760
        %3179 = vmatmul.f32.gmra.mxu0 %v3178
        %v3180 = vpop.f32.mrf.mxu0
        %v3181 = vadd.f32 %v3150, %v3180
        %3182 = vdwg.mxu0
        %3183 = vmatpush.msra.mxu0 0.0
        %3184 = vmatpush.msra.mxu0 0.0
        %3185 = vmatpush.msra.mxu0 0.0
        %3186 = vmatpush.msra.mxu0 0.0
        %3187 = vmatpush.msra.mxu0 0.0
        %3188 = vmatpush.msra.mxu0 0.0
        %3189 = vmatpush.msra.mxu0 0.0
        %3190 = vmatpush.msra.mxu0 0.0
        %3191 = vmatpush.msra.mxu0 0.0
        %3192 = vmatpush.msra.mxu0 0.0
        %3193 = vmatpush.msra.mxu0 0.0
        %3194 = vmatpush.msra.mxu0 0.0
        %3195 = vmatpush.msra.mxu0 0.0
        %3196 = vmatpush.msra.mxu0 0.0
        %v3197 = vand.u32 %v1726, 4294901760
        %v3198 = vsub.f32 %v1726, %v3197
        %v3199 = vand.u32 %v3198, 4294901760
        %3200 = vmatpush.msra.mxu0 %v3199
        %v3201 = vand.u32 %v1722, 4294901760
        %v3202 = vsub.f32 %v1722, %v3201
        %v3203 = vand.u32 %v3202, 4294901760
        %3204 = vmatpush.msra.mxu0 %v3203
        %v3205 = vand.u32 %v1833, 4294901760
        %3206 = vmatmul.f32.gmra.mxu0 %v3205
        %v3207 = vpop.f32.mrf.mxu0
        %v3208 = vadd.f32 %v3175, %v3207
        %v3209 = vand.u32 %v1836, 4294901760
        %3210 = vmatmul.f32.gmra.mxu0 %v3209
        %v3211 = vpop.f32.mrf.mxu0
        %v3212 = vadd.f32 %v3181, %v3211
        %3213 = vdwg.mxu0
        %3214 = vmatpush.msra.mxu0 0.0
        %3215 = vmatpush.msra.mxu0 0.0
        %3216 = vmatpush.msra.mxu0 0.0
        %3217 = vmatpush.msra.mxu0 0.0
        %3218 = vmatpush.msra.mxu0 0.0
        %3219 = vmatpush.msra.mxu0 0.0
        %3220 = vmatpush.msra.mxu0 0.0
        %3221 = vmatpush.msra.mxu0 0.0
        %3222 = vmatpush.msra.mxu0 0.0
        %3223 = vmatpush.msra.mxu0 0.0
        %3224 = vmatpush.msra.mxu0 0.0
        %3225 = vmatpush.msra.mxu0 0.0
        %3226 = vmatpush.msra.mxu0 0.0
        %3227 = vmatpush.msra.mxu0 0.0
        %v3228 = vand.u32 %v1726, 4294901760
        %3229 = vmatpush.msra.mxu0 %v3228
        %v3230 = vand.u32 %v1722, 4294901760
        %3231 = vmatpush.msra.mxu0 %v3230
        %v3232 = vand.u32 %v1833, 4294901760
        %3233 = vmatmul.f32.gmra.mxu0 %v3232
        %v3234 = vpop.f32.mrf.mxu0
        %v3235 = vadd.f32 %v3208, %v3234
        %v3236 = vand.u32 %v1836, 4294901760
        %3237 = vmatmul.f32.gmra.mxu0 %v3236
        %v3238 = vpop.f32.mrf.mxu0
        %v3239 = vadd.f32 %v3212, %v3238
        %3240 = vdwg.mxu0
        %3241 = vmatpush.msra.mxu0 0.0
        %3242 = vmatpush.msra.mxu0 0.0
        %3243 = vmatpush.msra.mxu0 0.0
        %3244 = vmatpush.msra.mxu0 0.0
        %3245 = vmatpush.msra.mxu0 0.0
        %3246 = vmatpush.msra.mxu0 0.0
        %3247 = vmatpush.msra.mxu0 0.0
        %3248 = vmatpush.msra.mxu0 0.0
        %3249 = vmatpush.msra.mxu0 0.0
        %3250 = vmatpush.msra.mxu0 0.0
        %3251 = vmatpush.msra.mxu0 0.0
        %3252 = vmatpush.msra.mxu0 0.0
        %3253 = vmatpush.msra.mxu0 0.0
        %3254 = vmatpush.msra.mxu0 0.0
        %v3255 = vand.u32 %v1734, 4294901760
        %3256 = vmatpush.msra.mxu0 %v3255
        %v3257 = vand.u32 %v1730, 4294901760
        %3258 = vmatpush.msra.mxu0 %v3257
        %v3259 = vand.u32 %v1833, 4294901760
        %v3260 = vsub.f32 %v1833, %v3259
        %v3261 = vand.u32 %v3260, 4294901760
        %v3262 = vsub.f32 %v3260, %v3261
        %v3263 = vand.u32 %v3262, 4294901760
        %3264 = vmatmul.f32.gmra.mxu0 %v3263
        %v3265 = vpop.f32.mrf.mxu0
        %v3266 = vadd.f32 0.0, %v3265
        %v3267 = vand.u32 %v1836, 4294901760
        %v3268 = vsub.f32 %v1836, %v3267
        %v3269 = vand.u32 %v3268, 4294901760
        %v3270 = vsub.f32 %v3268, %v3269
        %v3271 = vand.u32 %v3270, 4294901760
        %3272 = vmatmul.f32.gmra.mxu0 %v3271
        %v3273 = vpop.f32.mrf.mxu0
        %v3274 = vadd.f32 0.0, %v3273
        %3275 = vdwg.mxu0
        %3276 = vmatpush.msra.mxu0 0.0
        %3277 = vmatpush.msra.mxu0 0.0
        %3278 = vmatpush.msra.mxu0 0.0
        %3279 = vmatpush.msra.mxu0 0.0
        %3280 = vmatpush.msra.mxu0 0.0
        %3281 = vmatpush.msra.mxu0 0.0
        %3282 = vmatpush.msra.mxu0 0.0
        %3283 = vmatpush.msra.mxu0 0.0
        %3284 = vmatpush.msra.mxu0 0.0
        %3285 = vmatpush.msra.mxu0 0.0
        %3286 = vmatpush.msra.mxu0 0.0
        %3287 = vmatpush.msra.mxu0 0.0
        %3288 = vmatpush.msra.mxu0 0.0
        %3289 = vmatpush.msra.mxu0 0.0
        %v3290 = vand.u32 %v1734, 4294901760
        %v3291 = vsub.f32 %v1734, %v3290
        %v3292 = vand.u32 %v3291, 4294901760
        %v3293 = vsub.f32 %v3291, %v3292
        %v3294 = vand.u32 %v3293, 4294901760
        %3295 = vmatpush.msra.mxu0 %v3294
        %v3296 = vand.u32 %v1730, 4294901760
        %v3297 = vsub.f32 %v1730, %v3296
        %v3298 = vand.u32 %v3297, 4294901760
        %v3299 = vsub.f32 %v3297, %v3298
        %v3300 = vand.u32 %v3299, 4294901760
        %3301 = vmatpush.msra.mxu0 %v3300
        %v3302 = vand.u32 %v1833, 4294901760
        %3303 = vmatmul.f32.gmra.mxu0 %v3302
        %v3304 = vpop.f32.mrf.mxu0
        %v3305 = vadd.f32 %v3266, %v3304
        %v3306 = vand.u32 %v1836, 4294901760
        %3307 = vmatmul.f32.gmra.mxu0 %v3306
        %v3308 = vpop.f32.mrf.mxu0
        %v3309 = vadd.f32 %v3274, %v3308
        %3310 = vdwg.mxu0
        %3311 = vmatpush.msra.mxu0 0.0
        %3312 = vmatpush.msra.mxu0 0.0
        %3313 = vmatpush.msra.mxu0 0.0
        %3314 = vmatpush.msra.mxu0 0.0
        %3315 = vmatpush.msra.mxu0 0.0
        %3316 = vmatpush.msra.mxu0 0.0
        %3317 = vmatpush.msra.mxu0 0.0
        %3318 = vmatpush.msra.mxu0 0.0
        %3319 = vmatpush.msra.mxu0 0.0
        %3320 = vmatpush.msra.mxu0 0.0
        %3321 = vmatpush.msra.mxu0 0.0
        %3322 = vmatpush.msra.mxu0 0.0
        %3323 = vmatpush.msra.mxu0 0.0
        %3324 = vmatpush.msra.mxu0 0.0
        %v3325 = vand.u32 %v1734, 4294901760
        %v3326 = vsub.f32 %v1734, %v3325
        %3327 = vmatpush.msra.mxu0 %v3326
        %v3328 = vand.u32 %v1730, 4294901760
        %v3329 = vsub.f32 %v1730, %v3328
        %3330 = vmatpush.msra.mxu0 %v3329
        %v3331 = vand.u32 %v1833, 4294901760
        %v3332 = vsub.f32 %v1833, %v3331
        %3333 = vmatmul.f32.gmra.mxu0 %v3332
        %v3334 = vpop.f32.mrf.mxu0
        %v3335 = vadd.f32 %v3305, %v3334
        %v3336 = vand.u32 %v1836, 4294901760
        %v3337 = vsub.f32 %v1836, %v3336
        %3338 = vmatmul.f32.gmra.mxu0 %v3337
        %v3339 = vpop.f32.mrf.mxu0
        %v3340 = vadd.f32 %v3309, %v3339
        %3341 = vdwg.mxu0
        %3342 = vmatpush.msra.mxu0 0.0
        %3343 = vmatpush.msra.mxu0 0.0
        %3344 = vmatpush.msra.mxu0 0.0
        %3345 = vmatpush.msra.mxu0 0.0
        %3346 = vmatpush.msra.mxu0 0.0
        %3347 = vmatpush.msra.mxu0 0.0
        %3348 = vmatpush.msra.mxu0 0.0
        %3349 = vmatpush.msra.mxu0 0.0
        %3350 = vmatpush.msra.mxu0 0.0
        %3351 = vmatpush.msra.mxu0 0.0
        %3352 = vmatpush.msra.mxu0 0.0
        %3353 = vmatpush.msra.mxu0 0.0
        %3354 = vmatpush.msra.mxu0 0.0
        %3355 = vmatpush.msra.mxu0 0.0
        %v3356 = vand.u32 %v1734, 4294901760
        %3357 = vmatpush.msra.mxu0 %v3356
        %v3358 = vand.u32 %v1730, 4294901760
        %3359 = vmatpush.msra.mxu0 %v3358
        %v3360 = vand.u32 %v1833, 4294901760
        %v3361 = vsub.f32 %v1833, %v3360
        %v3362 = vand.u32 %v3361, 4294901760
        %3363 = vmatmul.f32.gmra.mxu0 %v3362
        %v3364 = vpop.f32.mrf.mxu0
        %v3365 = vadd.f32 %v3335, %v3364
        %v3366 = vand.u32 %v1836, 4294901760
        %v3367 = vsub.f32 %v1836, %v3366
        %v3368 = vand.u32 %v3367, 4294901760
        %3369 = vmatmul.f32.gmra.mxu0 %v3368
        %v3370 = vpop.f32.mrf.mxu0
        %v3371 = vadd.f32 %v3340, %v3370
        %3372 = vdwg.mxu0
        %3373 = vmatpush.msra.mxu0 0.0
        %3374 = vmatpush.msra.mxu0 0.0
        %3375 = vmatpush.msra.mxu0 0.0
        %3376 = vmatpush.msra.mxu0 0.0
        %3377 = vmatpush.msra.mxu0 0.0
        %3378 = vmatpush.msra.mxu0 0.0
        %3379 = vmatpush.msra.mxu0 0.0
        %3380 = vmatpush.msra.mxu0 0.0
        %3381 = vmatpush.msra.mxu0 0.0
        %3382 = vmatpush.msra.mxu0 0.0
        %3383 = vmatpush.msra.mxu0 0.0
        %3384 = vmatpush.msra.mxu0 0.0
        %3385 = vmatpush.msra.mxu0 0.0
        %3386 = vmatpush.msra.mxu0 0.0
        %v3387 = vand.u32 %v1734, 4294901760
        %v3388 = vsub.f32 %v1734, %v3387
        %v3389 = vand.u32 %v3388, 4294901760
        %3390 = vmatpush.msra.mxu0 %v3389
        %v3391 = vand.u32 %v1730, 4294901760
        %v3392 = vsub.f32 %v1730, %v3391
        %v3393 = vand.u32 %v3392, 4294901760
        %3394 = vmatpush.msra.mxu0 %v3393
        %v3395 = vand.u32 %v1833, 4294901760
        %3396 = vmatmul.f32.gmra.mxu0 %v3395
        %v3397 = vpop.f32.mrf.mxu0
        %v3398 = vadd.f32 %v3365, %v3397
        %v3399 = vand.u32 %v1836, 4294901760
        %3400 = vmatmul.f32.gmra.mxu0 %v3399
        %v3401 = vpop.f32.mrf.mxu0
        %v3402 = vadd.f32 %v3371, %v3401
        %3403 = vdwg.mxu0
        %3404 = vmatpush.msra.mxu0 0.0
        %3405 = vmatpush.msra.mxu0 0.0
        %3406 = vmatpush.msra.mxu0 0.0
        %3407 = vmatpush.msra.mxu0 0.0
        %3408 = vmatpush.msra.mxu0 0.0
        %3409 = vmatpush.msra.mxu0 0.0
        %3410 = vmatpush.msra.mxu0 0.0
        %3411 = vmatpush.msra.mxu0 0.0
        %3412 = vmatpush.msra.mxu0 0.0
        %3413 = vmatpush.msra.mxu0 0.0
        %3414 = vmatpush.msra.mxu0 0.0
        %3415 = vmatpush.msra.mxu0 0.0
        %3416 = vmatpush.msra.mxu0 0.0
        %3417 = vmatpush.msra.mxu0 0.0
        %v3418 = vand.u32 %v1734, 4294901760
        %3419 = vmatpush.msra.mxu0 %v3418
        %v3420 = vand.u32 %v1730, 4294901760
        %3421 = vmatpush.msra.mxu0 %v3420
        %v3422 = vand.u32 %v1833, 4294901760
        %3423 = vmatmul.f32.gmra.mxu0 %v3422
        %v3424 = vpop.f32.mrf.mxu0
        %v3425 = vadd.f32 %v3398, %v3424
        %v3426 = vand.u32 %v1836, 4294901760
        %3427 = vmatmul.f32.gmra.mxu0 %v3426
        %v3428 = vpop.f32.mrf.mxu0
        %v3429 = vadd.f32 %v3402, %v3428
        %3430 = vdwg.mxu0
        %3431 = vmatpush.msra.mxu0 0.0
        %3432 = vmatpush.msra.mxu0 0.0
        %3433 = vmatpush.msra.mxu0 0.0
        %3434 = vmatpush.msra.mxu0 0.0
        %3435 = vmatpush.msra.mxu0 0.0
        %3436 = vmatpush.msra.mxu0 0.0
        %3437 = vmatpush.msra.mxu0 0.0
        %3438 = vmatpush.msra.mxu0 0.0
        %3439 = vmatpush.msra.mxu0 0.0
        %3440 = vmatpush.msra.mxu0 0.0
        %3441 = vmatpush.msra.mxu0 0.0
        %3442 = vmatpush.msra.mxu0 0.0
        %3443 = vmatpush.msra.mxu0 0.0
        %3444 = vmatpush.msra.mxu0 0.0
        %v3445 = vand.u32 %v1750, 4294901760
        %3446 = vmatpush.msra.mxu0 %v3445
        %v3447 = vand.u32 %v1746, 4294901760
        %3448 = vmatpush.msra.mxu0 %v3447
        %v3449 = vand.u32 %v1833, 4294901760
        %v3450 = vsub.f32 %v1833, %v3449
        %v3451 = vand.u32 %v3450, 4294901760
        %v3452 = vsub.f32 %v3450, %v3451
        %v3453 = vand.u32 %v3452, 4294901760
        %3454 = vmatmul.f32.gmra.mxu0 %v3453
        %v3455 = vpop.f32.mrf.mxu0
        %v3456 = vadd.f32 0.0, %v3455
        %v3457 = vand.u32 %v1836, 4294901760
        %v3458 = vsub.f32 %v1836, %v3457
        %v3459 = vand.u32 %v3458, 4294901760
        %v3460 = vsub.f32 %v3458, %v3459
        %v3461 = vand.u32 %v3460, 4294901760
        %3462 = vmatmul.f32.gmra.mxu0 %v3461
        %v3463 = vpop.f32.mrf.mxu0
        %v3464 = vadd.f32 0.0, %v3463
        %3465 = vdwg.mxu0
        %3466 = vmatpush.msra.mxu0 0.0
        %3467 = vmatpush.msra.mxu0 0.0
        %3468 = vmatpush.msra.mxu0 0.0
        %3469 = vmatpush.msra.mxu0 0.0
        %3470 = vmatpush.msra.mxu0 0.0
        %3471 = vmatpush.msra.mxu0 0.0
        %3472 = vmatpush.msra.mxu0 0.0
        %3473 = vmatpush.msra.mxu0 0.0
        %3474 = vmatpush.msra.mxu0 0.0
        %3475 = vmatpush.msra.mxu0 0.0
        %3476 = vmatpush.msra.mxu0 0.0
        %3477 = vmatpush.msra.mxu0 0.0
        %3478 = vmatpush.msra.mxu0 0.0
        %3479 = vmatpush.msra.mxu0 0.0
        %v3480 = vand.u32 %v1750, 4294901760
        %v3481 = vsub.f32 %v1750, %v3480
        %v3482 = vand.u32 %v3481, 4294901760
        %v3483 = vsub.f32 %v3481, %v3482
        %v3484 = vand.u32 %v3483, 4294901760
        %3485 = vmatpush.msra.mxu0 %v3484
        %v3486 = vand.u32 %v1746, 4294901760
        %v3487 = vsub.f32 %v1746, %v3486
        %v3488 = vand.u32 %v3487, 4294901760
        %v3489 = vsub.f32 %v3487, %v3488
        %v3490 = vand.u32 %v3489, 4294901760
        %3491 = vmatpush.msra.mxu0 %v3490
        %v3492 = vand.u32 %v1833, 4294901760
        %3493 = vmatmul.f32.gmra.mxu0 %v3492
        %v3494 = vpop.f32.mrf.mxu0
        %v3495 = vadd.f32 %v3456, %v3494
        %v3496 = vand.u32 %v1836, 4294901760
        %3497 = vmatmul.f32.gmra.mxu0 %v3496
        %v3498 = vpop.f32.mrf.mxu0
        %v3499 = vadd.f32 %v3464, %v3498
        %3500 = vdwg.mxu0
        %3501 = vmatpush.msra.mxu0 0.0
        %3502 = vmatpush.msra.mxu0 0.0
        %3503 = vmatpush.msra.mxu0 0.0
        %3504 = vmatpush.msra.mxu0 0.0
        %3505 = vmatpush.msra.mxu0 0.0
        %3506 = vmatpush.msra.mxu0 0.0
        %3507 = vmatpush.msra.mxu0 0.0
        %3508 = vmatpush.msra.mxu0 0.0
        %3509 = vmatpush.msra.mxu0 0.0
        %3510 = vmatpush.msra.mxu0 0.0
        %3511 = vmatpush.msra.mxu0 0.0
        %3512 = vmatpush.msra.mxu0 0.0
        %3513 = vmatpush.msra.mxu0 0.0
        %3514 = vmatpush.msra.mxu0 0.0
        %v3515 = vand.u32 %v1750, 4294901760
        %v3516 = vsub.f32 %v1750, %v3515
        %3517 = vmatpush.msra.mxu0 %v3516
        %v3518 = vand.u32 %v1746, 4294901760
        %v3519 = vsub.f32 %v1746, %v3518
        %3520 = vmatpush.msra.mxu0 %v3519
        %v3521 = vand.u32 %v1833, 4294901760
        %v3522 = vsub.f32 %v1833, %v3521
        %3523 = vmatmul.f32.gmra.mxu0 %v3522
        %v3524 = vpop.f32.mrf.mxu0
        %v3525 = vadd.f32 %v3495, %v3524
        %v3526 = vand.u32 %v1836, 4294901760
        %v3527 = vsub.f32 %v1836, %v3526
        %3528 = vmatmul.f32.gmra.mxu0 %v3527
        %v3529 = vpop.f32.mrf.mxu0
        %v3530 = vadd.f32 %v3499, %v3529
        %3531 = vdwg.mxu0
        %3532 = vmatpush.msra.mxu0 0.0
        %3533 = vmatpush.msra.mxu0 0.0
        %3534 = vmatpush.msra.mxu0 0.0
        %3535 = vmatpush.msra.mxu0 0.0
        %3536 = vmatpush.msra.mxu0 0.0
        %3537 = vmatpush.msra.mxu0 0.0
        %3538 = vmatpush.msra.mxu0 0.0
        %3539 = vmatpush.msra.mxu0 0.0
        %3540 = vmatpush.msra.mxu0 0.0
        %3541 = vmatpush.msra.mxu0 0.0
        %3542 = vmatpush.msra.mxu0 0.0
        %3543 = vmatpush.msra.mxu0 0.0
        %3544 = vmatpush.msra.mxu0 0.0
        %3545 = vmatpush.msra.mxu0 0.0
        %v3546 = vand.u32 %v1750, 4294901760
        %3547 = vmatpush.msra.mxu0 %v3546
        %v3548 = vand.u32 %v1746, 4294901760
        %3549 = vmatpush.msra.mxu0 %v3548
        %v3550 = vand.u32 %v1833, 4294901760
        %v3551 = vsub.f32 %v1833, %v3550
        %v3552 = vand.u32 %v3551, 4294901760
        %3553 = vmatmul.f32.gmra.mxu0 %v3552
        %v3554 = vpop.f32.mrf.mxu0
        %v3555 = vadd.f32 %v3525, %v3554
        %v3556 = vand.u32 %v1836, 4294901760
        %v3557 = vsub.f32 %v1836, %v3556
        %v3558 = vand.u32 %v3557, 4294901760
        %3559 = vmatmul.f32.gmra.mxu0 %v3558
        %v3560 = vpop.f32.mrf.mxu0
        %v3561 = vadd.f32 %v3530, %v3560
        %3562 = vdwg.mxu0
        %3563 = vmatpush.msra.mxu0 0.0
        %3564 = vmatpush.msra.mxu0 0.0
        %3565 = vmatpush.msra.mxu0 0.0
        %3566 = vmatpush.msra.mxu0 0.0
        %3567 = vmatpush.msra.mxu0 0.0
        %3568 = vmatpush.msra.mxu0 0.0
        %3569 = vmatpush.msra.mxu0 0.0
        %3570 = vmatpush.msra.mxu0 0.0
        %3571 = vmatpush.msra.mxu0 0.0
        %3572 = vmatpush.msra.mxu0 0.0
        %3573 = vmatpush.msra.mxu0 0.0
        %3574 = vmatpush.msra.mxu0 0.0
        %3575 = vmatpush.msra.mxu0 0.0
        %3576 = vmatpush.msra.mxu0 0.0
        %v3577 = vand.u32 %v1750, 4294901760
        %v3578 = vsub.f32 %v1750, %v3577
        %v3579 = vand.u32 %v3578, 4294901760
        %3580 = vmatpush.msra.mxu0 %v3579
        %v3581 = vand.u32 %v1746, 4294901760
        %v3582 = vsub.f32 %v1746, %v3581
        %v3583 = vand.u32 %v3582, 4294901760
        %3584 = vmatpush.msra.mxu0 %v3583
        %v3585 = vand.u32 %v1833, 4294901760
        %3586 = vmatmul.f32.gmra.mxu0 %v3585
        %v3587 = vpop.f32.mrf.mxu0
        %v3588 = vadd.f32 %v3555, %v3587
        %v3589 = vand.u32 %v1836, 4294901760
        %3590 = vmatmul.f32.gmra.mxu0 %v3589
        %v3591 = vpop.f32.mrf.mxu0
        %v3592 = vadd.f32 %v3561, %v3591
        %3593 = vdwg.mxu0
        %3594 = vmatpush.msra.mxu0 0.0
        %3595 = vmatpush.msra.mxu0 0.0
        %3596 = vmatpush.msra.mxu0 0.0
        %3597 = vmatpush.msra.mxu0 0.0
        %3598 = vmatpush.msra.mxu0 0.0
        %3599 = vmatpush.msra.mxu0 0.0
        %3600 = vmatpush.msra.mxu0 0.0
        %3601 = vmatpush.msra.mxu0 0.0
        %3602 = vmatpush.msra.mxu0 0.0
        %3603 = vmatpush.msra.mxu0 0.0
        %3604 = vmatpush.msra.mxu0 0.0
        %3605 = vmatpush.msra.mxu0 0.0
        %3606 = vmatpush.msra.mxu0 0.0
        %3607 = vmatpush.msra.mxu0 0.0
        %v3608 = vand.u32 %v1750, 4294901760
        %3609 = vmatpush.msra.mxu0 %v3608
        %v3610 = vand.u32 %v1746, 4294901760
        %3611 = vmatpush.msra.mxu0 %v3610
        %v3612 = vand.u32 %v1833, 4294901760
        %3613 = vmatmul.f32.gmra.mxu0 %v3612
        %v3614 = vpop.f32.mrf.mxu0
        %v3615 = vadd.f32 %v3588, %v3614
        %v3616 = vand.u32 %v1836, 4294901760
        %3617 = vmatmul.f32.gmra.mxu0 %v3616
        %v3618 = vpop.f32.mrf.mxu0
        %v3619 = vadd.f32 %v3592, %v3618
        %3620 = vdwg.mxu0
        %v3621 = vmul.f32 %v3045, %v3235
        %v3622 = vmul.f32 %v3049, %v3239
        %v3623 = vmul.f32 %v3621, 2.0
        %v3624 = vmul.f32 %v3622, 2.0
        %v3625 = vadd.f32 %v3623, 0.0001
        %v3626 = vadd.f32 %v3624, 0.0001
        %v3627 = vmul.f32 %v3045, %v3045
        %v3628 = vmul.f32 %v3049, %v3049
        %v3629 = vmul.f32 %v3235, %v3235
        %v3630 = vmul.f32 %v3239, %v3239
        %v3631 = vadd.f32 %v3627, %v3629
        %v3632 = vadd.f32 %v3628, %v3630
        %v3633 = vadd.f32 %v3631, 0.0001
        %v3634 = vadd.f32 %v3632, 0.0001
        %v3635 = vmul.f32 %v3425, 2.0
        %v3636 = vmul.f32 %v3429, 2.0
        %v3637 = vsub.f32 %v3635, %v3625
        %v3638 = vsub.f32 %v3636, %v3626
        %v3639 = vadd.f32 %v3637, 0.001
        %v3640 = vadd.f32 %v3638, 0.001
        %3641 = vmatpush.msra.mxu0 0.0
        %3642 = vmatpush.msra.mxu0 0.0
        %3643 = vmatpush.msra.mxu0 0.0
        %3644 = vmatpush.msra.mxu0 0.0
        %3645 = vmatpush.msra.mxu0 0.0
        %3646 = vmatpush.msra.mxu0 0.0
        %3647 = vmatpush.msra.mxu0 0.0
        %3648 = vmatpush.msra.mxu0 0.0
        %3649 = vmatpush.msra.mxu0 0.0
        %3650 = vmatpush.msra.mxu0 0.0
        %3651 = vmatpush.msra.mxu0 0.0
        %3652 = vmatpush.msra.mxu0 0.0
        %3653 = vmatpush.msra.mxu0 0.0
        %3654 = vmatpush.msra.mxu0 0.0
        %v3655 = vand.u32 %v1742, 4294901760
        %3656 = vmatpush.msra.mxu0 %v3655
        %v3657 = vand.u32 %v1738, 4294901760
        %3658 = vmatpush.msra.mxu0 %v3657
        %v3659 = vand.u32 %v1833, 4294901760
        %v3660 = vsub.f32 %v1833, %v3659
        %v3661 = vand.u32 %v3660, 4294901760
        %v3662 = vsub.f32 %v3660, %v3661
        %v3663 = vand.u32 %v3662, 4294901760
        %3664 = vmatmul.f32.gmra.mxu0 %v3663
        %v3665 = vpop.f32.mrf.mxu0
        %v3666 = vadd.f32 %v3615, %v3665
        %v3667 = vand.u32 %v1836, 4294901760
        %v3668 = vsub.f32 %v1836, %v3667
        %v3669 = vand.u32 %v3668, 4294901760
        %v3670 = vsub.f32 %v3668, %v3669
        %v3671 = vand.u32 %v3670, 4294901760
        %3672 = vmatmul.f32.gmra.mxu0 %v3671
        %v3673 = vpop.f32.mrf.mxu0
        %v3674 = vadd.f32 %v3619, %v3673
        %3675 = vdwg.mxu0
        %3676 = vmatpush.msra.mxu0 0.0
        %3677 = vmatpush.msra.mxu0 0.0
        %3678 = vmatpush.msra.mxu0 0.0
        %3679 = vmatpush.msra.mxu0 0.0
        %3680 = vmatpush.msra.mxu0 0.0
        %3681 = vmatpush.msra.mxu0 0.0
        %3682 = vmatpush.msra.mxu0 0.0
        %3683 = vmatpush.msra.mxu0 0.0
        %3684 = vmatpush.msra.mxu0 0.0
        %3685 = vmatpush.msra.mxu0 0.0
        %3686 = vmatpush.msra.mxu0 0.0
        %3687 = vmatpush.msra.mxu0 0.0
        %3688 = vmatpush.msra.mxu0 0.0
        %3689 = vmatpush.msra.mxu0 0.0
        %v3690 = vand.u32 %v1742, 4294901760
        %v3691 = vsub.f32 %v1742, %v3690
        %v3692 = vand.u32 %v3691, 4294901760
        %v3693 = vsub.f32 %v3691, %v3692
        %v3694 = vand.u32 %v3693, 4294901760
        %3695 = vmatpush.msra.mxu0 %v3694
        %v3696 = vand.u32 %v1738, 4294901760
        %v3697 = vsub.f32 %v1738, %v3696
        %v3698 = vand.u32 %v3697, 4294901760
        %v3699 = vsub.f32 %v3697, %v3698
        %v3700 = vand.u32 %v3699, 4294901760
        %3701 = vmatpush.msra.mxu0 %v3700
        %v3702 = vand.u32 %v1833, 4294901760
        %3703 = vmatmul.f32.gmra.mxu0 %v3702
        %v3704 = vpop.f32.mrf.mxu0
        %v3705 = vadd.f32 %v3666, %v3704
        %v3706 = vand.u32 %v1836, 4294901760
        %3707 = vmatmul.f32.gmra.mxu0 %v3706
        %v3708 = vpop.f32.mrf.mxu0
        %v3709 = vadd.f32 %v3674, %v3708
        %3710 = vdwg.mxu0
        %3711 = vmatpush.msra.mxu0 0.0
        %3712 = vmatpush.msra.mxu0 0.0
        %3713 = vmatpush.msra.mxu0 0.0
        %3714 = vmatpush.msra.mxu0 0.0
        %3715 = vmatpush.msra.mxu0 0.0
        %3716 = vmatpush.msra.mxu0 0.0
        %3717 = vmatpush.msra.mxu0 0.0
        %3718 = vmatpush.msra.mxu0 0.0
        %3719 = vmatpush.msra.mxu0 0.0
        %3720 = vmatpush.msra.mxu0 0.0
        %3721 = vmatpush.msra.mxu0 0.0
        %3722 = vmatpush.msra.mxu0 0.0
        %3723 = vmatpush.msra.mxu0 0.0
        %3724 = vmatpush.msra.mxu0 0.0
        %v3725 = vand.u32 %v1742, 4294901760
        %v3726 = vsub.f32 %v1742, %v3725
        %3727 = vmatpush.msra.mxu0 %v3726
        %v3728 = vand.u32 %v1738, 4294901760
        %v3729 = vsub.f32 %v1738, %v3728
        %3730 = vmatpush.msra.mxu0 %v3729
        %v3731 = vand.u32 %v1833, 4294901760
        %v3732 = vsub.f32 %v1833, %v3731
        %3733 = vmatmul.f32.gmra.mxu0 %v3732
        %v3734 = vpop.f32.mrf.mxu0
        %v3735 = vadd.f32 %v3705, %v3734
        %v3736 = vand.u32 %v1836, 4294901760
        %v3737 = vsub.f32 %v1836, %v3736
        %3738 = vmatmul.f32.gmra.mxu0 %v3737
        %v3739 = vpop.f32.mrf.mxu0
        %v3740 = vadd.f32 %v3709, %v3739
        %3741 = vdwg.mxu0
        %3742 = vmatpush.msra.mxu0 0.0
        %3743 = vmatpush.msra.mxu0 0.0
        %3744 = vmatpush.msra.mxu0 0.0
        %3745 = vmatpush.msra.mxu0 0.0
        %3746 = vmatpush.msra.mxu0 0.0
        %3747 = vmatpush.msra.mxu0 0.0
        %3748 = vmatpush.msra.mxu0 0.0
        %3749 = vmatpush.msra.mxu0 0.0
        %3750 = vmatpush.msra.mxu0 0.0
        %3751 = vmatpush.msra.mxu0 0.0
        %3752 = vmatpush.msra.mxu0 0.0
        %3753 = vmatpush.msra.mxu0 0.0
        %3754 = vmatpush.msra.mxu0 0.0
        %3755 = vmatpush.msra.mxu0 0.0
        %v3756 = vand.u32 %v1742, 4294901760
        %3757 = vmatpush.msra.mxu0 %v3756
        %v3758 = vand.u32 %v1738, 4294901760
        %3759 = vmatpush.msra.mxu0 %v3758
        %v3760 = vand.u32 %v1833, 4294901760
        %v3761 = vsub.f32 %v1833, %v3760
        %v3762 = vand.u32 %v3761, 4294901760
        %3763 = vmatmul.f32.gmra.mxu0 %v3762
        %v3764 = vpop.f32.mrf.mxu0
        %v3765 = vadd.f32 %v3735, %v3764
        %v3766 = vand.u32 %v1836, 4294901760
        %v3767 = vsub.f32 %v1836, %v3766
        %v3768 = vand.u32 %v3767, 4294901760
        %3769 = vmatmul.f32.gmra.mxu0 %v3768
        %v3770 = vpop.f32.mrf.mxu0
        %v3771 = vadd.f32 %v3740, %v3770
        %3772 = vdwg.mxu0
        %3773 = vmatpush.msra.mxu0 0.0
        %3774 = vmatpush.msra.mxu0 0.0
        %3775 = vmatpush.msra.mxu0 0.0
        %3776 = vmatpush.msra.mxu0 0.0
        %3777 = vmatpush.msra.mxu0 0.0
        %3778 = vmatpush.msra.mxu0 0.0
        %3779 = vmatpush.msra.mxu0 0.0
        %3780 = vmatpush.msra.mxu0 0.0
        %3781 = vmatpush.msra.mxu0 0.0
        %3782 = vmatpush.msra.mxu0 0.0
        %3783 = vmatpush.msra.mxu0 0.0
        %3784 = vmatpush.msra.mxu0 0.0
        %3785 = vmatpush.msra.mxu0 0.0
        %3786 = vmatpush.msra.mxu0 0.0
        %v3787 = vand.u32 %v1742, 4294901760
        %v3788 = vsub.f32 %v1742, %v3787
        %v3789 = vand.u32 %v3788, 4294901760
        %3790 = vmatpush.msra.mxu0 %v3789
        %v3791 = vand.u32 %v1738, 4294901760
        %v3792 = vsub.f32 %v1738, %v3791
        %v3793 = vand.u32 %v3792, 4294901760
        %3794 = vmatpush.msra.mxu0 %v3793
        %v3795 = vand.u32 %v1833, 4294901760
        %3796 = vmatmul.f32.gmra.mxu0 %v3795
        %v3797 = vpop.f32.mrf.mxu0
        %v3798 = vadd.f32 %v3765, %v3797
        %v3799 = vand.u32 %v1836, 4294901760
        %3800 = vmatmul.f32.gmra.mxu0 %v3799
        %v3801 = vpop.f32.mrf.mxu0
        %v3802 = vadd.f32 %v3771, %v3801
        %3803 = vdwg.mxu0
        %3804 = vmatpush.msra.mxu0 0.0
        %3805 = vmatpush.msra.mxu0 0.0
        %3806 = vmatpush.msra.mxu0 0.0
        %3807 = vmatpush.msra.mxu0 0.0
        %3808 = vmatpush.msra.mxu0 0.0
        %3809 = vmatpush.msra.mxu0 0.0
        %3810 = vmatpush.msra.mxu0 0.0
        %3811 = vmatpush.msra.mxu0 0.0
        %3812 = vmatpush.msra.mxu0 0.0
        %3813 = vmatpush.msra.mxu0 0.0
        %3814 = vmatpush.msra.mxu0 0.0
        %3815 = vmatpush.msra.mxu0 0.0
        %3816 = vmatpush.msra.mxu0 0.0
        %3817 = vmatpush.msra.mxu0 0.0
        %v3818 = vand.u32 %v1742, 4294901760
        %3819 = vmatpush.msra.mxu0 %v3818
        %v3820 = vand.u32 %v1738, 4294901760
        %3821 = vmatpush.msra.mxu0 %v3820
        %v3822 = vand.u32 %v1833, 4294901760
        %3823 = vmatmul.f32.gmra.mxu0 %v3822
        %v3824 = vpop.f32.mrf.mxu0
        %v3825 = vadd.f32 %v3798, %v3824
        %v3826 = vand.u32 %v1836, 4294901760
        %3827 = vmatmul.f32.gmra.mxu0 %v3826
        %v3828 = vpop.f32.mrf.mxu0
        %v3829 = vadd.f32 %v3802, %v3828
        %3830 = vdwg.mxu0
        %v3831 = vsub.f32 %v3825, %v3633
        %v3832 = vsub.f32 %v3829, %v3634
        %v3833 = vadd.f32 %v3831, 0.001
        %v3834 = vadd.f32 %v3832, 0.001
        %v3835 = vmul.f32 %v3625, %v3639
        %v3836 = vmul.f32 %v3626, %v3640
        %v3837 = vmul.f32 %v3633, %v3833
        %v3838 = vmul.f32 %v3634, %v3834
        %v3839 = vrcp.pop %v3837
        %v3840 = vmul.f32 %v3837, %v3839
        %v3841 = vsub.f32 1.0, %v3840
        %v3842 = vmul.f32 %v3839, %v3841
        %v3843 = vadd.f32 %v3839, %v3842
        %vm3844 = vweird.f32 %v3837
        %vm3845 = vweird.f32 %v3839
        %vm3846 = vmor %vm3844, %vm3845
        %v3847 = vsel %vm3846, %v3839, %v3843
        %v3848 = vand.u32 2147483647, %v3837
        %vm3849 = vcmp.eq.f32.partialorder %v3848, 8.507059e+37
        %v3850 = vand.u32 %v3837, 2147483648
        %v3851 = vor.u32 1.1754944e-38, %v3850
        %v3852 = vsel %vm3849, %v3851, %v3847
        %v3853 = vmul.f32 %v3835, %v3852
        %v3854 = vrcp.pop %v3838
        %v3855 = vmul.f32 %v3838, %v3854
        %v3856 = vsub.f32 1.0, %v3855
        %v3857 = vmul.f32 %v3854, %v3856
        %v3858 = vadd.f32 %v3854, %v3857
        %vm3859 = vweird.f32 %v3838
        %vm3860 = vweird.f32 %v3854
        %vm3861 = vmor %vm3859, %vm3860
        %v3862 = vsel %vm3861, %v3854, %v3858
        %v3863 = vand.u32 2147483647, %v3838
        %vm3864 = vcmp.eq.f32.partialorder %v3863, 8.507059e+37
        %v3865 = vand.u32 %v3838, 2147483648
        %v3866 = vor.u32 1.1754944e-38, %v3865
        %v3867 = vsel %vm3864, %v3866, %v3862
        %v3868 = vmul.f32 %v3836, %v3867
        %v3869 = vsel %vm343, %v3853, 0.0
        %v3870 = vsel %vm343, %v3868, 0.0
        %v3871 = vadd.f32 %v3869, %v3870
        %3872 = vadd.xlane.f32.xlu0 %v3871
        %v3873 = vpop.xlane.xlu0 %3872
        %v3874 = vrot.slane %v3873, 4
        %v3875 = vadd.f32 %v3873, %v3874
        %v3876 = vrot.slane %v3875, 2
        %v3877 = vadd.f32 %v3875, %v3876
        %v3878 = vrot.slane %v3877, 1
        %v3879 = vadd.f32 %v3877, %v3878
        %s3880 = vtos %v3879
        %v3881 = vstv %s3880
        %s3882 = scalar_lea.vmem %s291, 1
        %3883 = vst.msk [vmem:[%s3882] sm:$0x1] %vm2859, %v3881
        %3884 = vmatpush.msra.mxu0 0.0
        %3885 = vmatpush.msra.mxu0 0.0
        %3886 = vmatpush.msra.mxu0 0.0
        %3887 = vmatpush.msra.mxu0 0.0
        %3888 = vmatpush.msra.mxu0 0.0
        %3889 = vmatpush.msra.mxu0 0.0
        %3890 = vmatpush.msra.mxu0 0.0
        %3891 = vmatpush.msra.mxu0 0.0
        %3892 = vmatpush.msra.mxu0 0.0
        %3893 = vmatpush.msra.mxu0 0.0
        %3894 = vmatpush.msra.mxu0 0.0
        %3895 = vmatpush.msra.mxu0 0.0
        %3896 = vmatpush.msra.mxu0 0.0
        %3897 = vmatpush.msra.mxu0 0.0
        %v3898 = vand.u32 %v1758, 4294901760
        %3899 = vmatpush.msra.mxu0 %v3898
        %v3900 = vand.u32 %v1754, 4294901760
        %3901 = vmatpush.msra.mxu0 %v3900
        %v3902 = vand.u32 %v1833, 4294901760
        %v3903 = vsub.f32 %v1833, %v3902
        %v3904 = vand.u32 %v3903, 4294901760
        %v3905 = vsub.f32 %v3903, %v3904
        %v3906 = vand.u32 %v3905, 4294901760
        %3907 = vmatmul.f32.gmra.mxu0 %v3906
        %v3908 = vpop.f32.mrf.mxu0
        %v3909 = vadd.f32 0.0, %v3908
        %v3910 = vand.u32 %v1836, 4294901760
        %v3911 = vsub.f32 %v1836, %v3910
        %v3912 = vand.u32 %v3911, 4294901760
        %v3913 = vsub.f32 %v3911, %v3912
        %v3914 = vand.u32 %v3913, 4294901760
        %3915 = vmatmul.f32.gmra.mxu0 %v3914
        %v3916 = vpop.f32.mrf.mxu0
        %v3917 = vadd.f32 0.0, %v3916
        %3918 = vdwg.mxu0
        %3919 = vmatpush.msra.mxu0 0.0
        %3920 = vmatpush.msra.mxu0 0.0
        %3921 = vmatpush.msra.mxu0 0.0
        %3922 = vmatpush.msra.mxu0 0.0
        %3923 = vmatpush.msra.mxu0 0.0
        %3924 = vmatpush.msra.mxu0 0.0
        %3925 = vmatpush.msra.mxu0 0.0
        %3926 = vmatpush.msra.mxu0 0.0
        %3927 = vmatpush.msra.mxu0 0.0
        %3928 = vmatpush.msra.mxu0 0.0
        %3929 = vmatpush.msra.mxu0 0.0
        %3930 = vmatpush.msra.mxu0 0.0
        %3931 = vmatpush.msra.mxu0 0.0
        %3932 = vmatpush.msra.mxu0 0.0
        %v3933 = vand.u32 %v1758, 4294901760
        %v3934 = vsub.f32 %v1758, %v3933
        %v3935 = vand.u32 %v3934, 4294901760
        %v3936 = vsub.f32 %v3934, %v3935
        %v3937 = vand.u32 %v3936, 4294901760
        %3938 = vmatpush.msra.mxu0 %v3937
        %v3939 = vand.u32 %v1754, 4294901760
        %v3940 = vsub.f32 %v1754, %v3939
        %v3941 = vand.u32 %v3940, 4294901760
        %v3942 = vsub.f32 %v3940, %v3941
        %v3943 = vand.u32 %v3942, 4294901760
        %3944 = vmatpush.msra.mxu0 %v3943
        %v3945 = vand.u32 %v1833, 4294901760
        %3946 = vmatmul.f32.gmra.mxu0 %v3945
        %v3947 = vpop.f32.mrf.mxu0
        %v3948 = vadd.f32 %v3909, %v3947
        %v3949 = vand.u32 %v1836, 4294901760
        %3950 = vmatmul.f32.gmra.mxu0 %v3949
        %v3951 = vpop.f32.mrf.mxu0
        %v3952 = vadd.f32 %v3917, %v3951
        %3953 = vdwg.mxu0
        %3954 = vmatpush.msra.mxu0 0.0
        %3955 = vmatpush.msra.mxu0 0.0
        %3956 = vmatpush.msra.mxu0 0.0
        %3957 = vmatpush.msra.mxu0 0.0
        %3958 = vmatpush.msra.mxu0 0.0
        %3959 = vmatpush.msra.mxu0 0.0
        %3960 = vmatpush.msra.mxu0 0.0
        %3961 = vmatpush.msra.mxu0 0.0
        %3962 = vmatpush.msra.mxu0 0.0
        %3963 = vmatpush.msra.mxu0 0.0
        %3964 = vmatpush.msra.mxu0 0.0
        %3965 = vmatpush.msra.mxu0 0.0
        %3966 = vmatpush.msra.mxu0 0.0
        %3967 = vmatpush.msra.mxu0 0.0
        %v3968 = vand.u32 %v1758, 4294901760
        %v3969 = vsub.f32 %v1758, %v3968
        %3970 = vmatpush.msra.mxu0 %v3969
        %v3971 = vand.u32 %v1754, 4294901760
        %v3972 = vsub.f32 %v1754, %v3971
        %3973 = vmatpush.msra.mxu0 %v3972
        %v3974 = vand.u32 %v1833, 4294901760
        %v3975 = vsub.f32 %v1833, %v3974
        %3976 = vmatmul.f32.gmra.mxu0 %v3975
        %v3977 = vpop.f32.mrf.mxu0
        %v3978 = vadd.f32 %v3948, %v3977
        %v3979 = vand.u32 %v1836, 4294901760
        %v3980 = vsub.f32 %v1836, %v3979
        %3981 = vmatmul.f32.gmra.mxu0 %v3980
        %v3982 = vpop.f32.mrf.mxu0
        %v3983 = vadd.f32 %v3952, %v3982
        %3984 = vdwg.mxu0
        %3985 = vmatpush.msra.mxu0 0.0
        %3986 = vmatpush.msra.mxu0 0.0
        %3987 = vmatpush.msra.mxu0 0.0
        %3988 = vmatpush.msra.mxu0 0.0
        %3989 = vmatpush.msra.mxu0 0.0
        %3990 = vmatpush.msra.mxu0 0.0
        %3991 = vmatpush.msra.mxu0 0.0
        %3992 = vmatpush.msra.mxu0 0.0
        %3993 = vmatpush.msra.mxu0 0.0
        %3994 = vmatpush.msra.mxu0 0.0
        %3995 = vmatpush.msra.mxu0 0.0
        %3996 = vmatpush.msra.mxu0 0.0
        %3997 = vmatpush.msra.mxu0 0.0
        %3998 = vmatpush.msra.mxu0 0.0
        %v3999 = vand.u32 %v1758, 4294901760
        %4000 = vmatpush.msra.mxu0 %v3999
        %v4001 = vand.u32 %v1754, 4294901760
        %4002 = vmatpush.msra.mxu0 %v4001
        %v4003 = vand.u32 %v1833, 4294901760
        %v4004 = vsub.f32 %v1833, %v4003
        %v4005 = vand.u32 %v4004, 4294901760
        %4006 = vmatmul.f32.gmra.mxu0 %v4005
        %v4007 = vpop.f32.mrf.mxu0
        %v4008 = vadd.f32 %v3978, %v4007
        %v4009 = vand.u32 %v1836, 4294901760
        %v4010 = vsub.f32 %v1836, %v4009
        %v4011 = vand.u32 %v4010, 4294901760
        %4012 = vmatmul.f32.gmra.mxu0 %v4011
        %v4013 = vpop.f32.mrf.mxu0
        %v4014 = vadd.f32 %v3983, %v4013
        %4015 = vdwg.mxu0
        %4016 = vmatpush.msra.mxu0 0.0
        %4017 = vmatpush.msra.mxu0 0.0
        %4018 = vmatpush.msra.mxu0 0.0
        %4019 = vmatpush.msra.mxu0 0.0
        %4020 = vmatpush.msra.mxu0 0.0
        %4021 = vmatpush.msra.mxu0 0.0
        %4022 = vmatpush.msra.mxu0 0.0
        %4023 = vmatpush.msra.mxu0 0.0
        %4024 = vmatpush.msra.mxu0 0.0
        %4025 = vmatpush.msra.mxu0 0.0
        %4026 = vmatpush.msra.mxu0 0.0
        %4027 = vmatpush.msra.mxu0 0.0
        %4028 = vmatpush.msra.mxu0 0.0
        %4029 = vmatpush.msra.mxu0 0.0
        %v4030 = vand.u32 %v1758, 4294901760
        %v4031 = vsub.f32 %v1758, %v4030
        %v4032 = vand.u32 %v4031, 4294901760
        %4033 = vmatpush.msra.mxu0 %v4032
        %v4034 = vand.u32 %v1754, 4294901760
        %v4035 = vsub.f32 %v1754, %v4034
        %v4036 = vand.u32 %v4035, 4294901760
        %4037 = vmatpush.msra.mxu0 %v4036
        %v4038 = vand.u32 %v1833, 4294901760
        %4039 = vmatmul.f32.gmra.mxu0 %v4038
        %v4040 = vpop.f32.mrf.mxu0
        %v4041 = vadd.f32 %v4008, %v4040
        %v4042 = vand.u32 %v1836, 4294901760
        %4043 = vmatmul.f32.gmra.mxu0 %v4042
        %v4044 = vpop.f32.mrf.mxu0
        %v4045 = vadd.f32 %v4014, %v4044
        %4046 = vdwg.mxu0
        %4047 = vmatpush.msra.mxu0 0.0
        %4048 = vmatpush.msra.mxu0 0.0
        %4049 = vmatpush.msra.mxu0 0.0
        %4050 = vmatpush.msra.mxu0 0.0
        %4051 = vmatpush.msra.mxu0 0.0
        %4052 = vmatpush.msra.mxu0 0.0
        %4053 = vmatpush.msra.mxu0 0.0
        %4054 = vmatpush.msra.mxu0 0.0
        %4055 = vmatpush.msra.mxu0 0.0
        %4056 = vmatpush.msra.mxu0 0.0
        %4057 = vmatpush.msra.mxu0 0.0
        %4058 = vmatpush.msra.mxu0 0.0
        %4059 = vmatpush.msra.mxu0 0.0
        %4060 = vmatpush.msra.mxu0 0.0
        %v4061 = vand.u32 %v1758, 4294901760
        %4062 = vmatpush.msra.mxu0 %v4061
        %v4063 = vand.u32 %v1754, 4294901760
        %4064 = vmatpush.msra.mxu0 %v4063
        %v4065 = vand.u32 %v1833, 4294901760
        %4066 = vmatmul.f32.gmra.mxu0 %v4065
        %v4067 = vpop.f32.mrf.mxu0
        %v4068 = vadd.f32 %v4041, %v4067
        %v4069 = vand.u32 %v1836, 4294901760
        %4070 = vmatmul.f32.gmra.mxu0 %v4069
        %v4071 = vpop.f32.mrf.mxu0
        %v4072 = vadd.f32 %v4045, %v4071
        %4073 = vdwg.mxu0
        %4074 = vmatpush.msra.mxu0 0.0
        %4075 = vmatpush.msra.mxu0 0.0
        %4076 = vmatpush.msra.mxu0 0.0
        %4077 = vmatpush.msra.mxu0 0.0
        %4078 = vmatpush.msra.mxu0 0.0
        %4079 = vmatpush.msra.mxu0 0.0
        %4080 = vmatpush.msra.mxu0 0.0
        %4081 = vmatpush.msra.mxu0 0.0
        %4082 = vmatpush.msra.mxu0 0.0
        %4083 = vmatpush.msra.mxu0 0.0
        %4084 = vmatpush.msra.mxu0 0.0
        %4085 = vmatpush.msra.mxu0 0.0
        %4086 = vmatpush.msra.mxu0 0.0
        %4087 = vmatpush.msra.mxu0 0.0
        %v4088 = vand.u32 %v1766, 4294901760
        %4089 = vmatpush.msra.mxu0 %v4088
        %v4090 = vand.u32 %v1762, 4294901760
        %4091 = vmatpush.msra.mxu0 %v4090
        %v4092 = vand.u32 %v1833, 4294901760
        %v4093 = vsub.f32 %v1833, %v4092
        %v4094 = vand.u32 %v4093, 4294901760
        %v4095 = vsub.f32 %v4093, %v4094
        %v4096 = vand.u32 %v4095, 4294901760
        %4097 = vmatmul.f32.gmra.mxu0 %v4096
        %v4098 = vpop.f32.mrf.mxu0
        %v4099 = vadd.f32 0.0, %v4098
        %v4100 = vand.u32 %v1836, 4294901760
        %v4101 = vsub.f32 %v1836, %v4100
        %v4102 = vand.u32 %v4101, 4294901760
        %v4103 = vsub.f32 %v4101, %v4102
        %v4104 = vand.u32 %v4103, 4294901760
        %4105 = vmatmul.f32.gmra.mxu0 %v4104
        %v4106 = vpop.f32.mrf.mxu0
        %v4107 = vadd.f32 0.0, %v4106
        %4108 = vdwg.mxu0
        %4109 = vmatpush.msra.mxu0 0.0
        %4110 = vmatpush.msra.mxu0 0.0
        %4111 = vmatpush.msra.mxu0 0.0
        %4112 = vmatpush.msra.mxu0 0.0
        %4113 = vmatpush.msra.mxu0 0.0
        %4114 = vmatpush.msra.mxu0 0.0
        %4115 = vmatpush.msra.mxu0 0.0
        %4116 = vmatpush.msra.mxu0 0.0
        %4117 = vmatpush.msra.mxu0 0.0
        %4118 = vmatpush.msra.mxu0 0.0
        %4119 = vmatpush.msra.mxu0 0.0
        %4120 = vmatpush.msra.mxu0 0.0
        %4121 = vmatpush.msra.mxu0 0.0
        %4122 = vmatpush.msra.mxu0 0.0
        %v4123 = vand.u32 %v1766, 4294901760
        %v4124 = vsub.f32 %v1766, %v4123
        %v4125 = vand.u32 %v4124, 4294901760
        %v4126 = vsub.f32 %v4124, %v4125
        %v4127 = vand.u32 %v4126, 4294901760
        %4128 = vmatpush.msra.mxu0 %v4127
        %v4129 = vand.u32 %v1762, 4294901760
        %v4130 = vsub.f32 %v1762, %v4129
        %v4131 = vand.u32 %v4130, 4294901760
        %v4132 = vsub.f32 %v4130, %v4131
        %v4133 = vand.u32 %v4132, 4294901760
        %4134 = vmatpush.msra.mxu0 %v4133
        %v4135 = vand.u32 %v1833, 4294901760
        %4136 = vmatmul.f32.gmra.mxu0 %v4135
        %v4137 = vpop.f32.mrf.mxu0
        %v4138 = vadd.f32 %v4099, %v4137
        %v4139 = vand.u32 %v1836, 4294901760
        %4140 = vmatmul.f32.gmra.mxu0 %v4139
        %v4141 = vpop.f32.mrf.mxu0
        %v4142 = vadd.f32 %v4107, %v4141
        %4143 = vdwg.mxu0
        %4144 = vmatpush.msra.mxu0 0.0
        %4145 = vmatpush.msra.mxu0 0.0
        %4146 = vmatpush.msra.mxu0 0.0
        %4147 = vmatpush.msra.mxu0 0.0
        %4148 = vmatpush.msra.mxu0 0.0
        %4149 = vmatpush.msra.mxu0 0.0
        %4150 = vmatpush.msra.mxu0 0.0
        %4151 = vmatpush.msra.mxu0 0.0
        %4152 = vmatpush.msra.mxu0 0.0
        %4153 = vmatpush.msra.mxu0 0.0
        %4154 = vmatpush.msra.mxu0 0.0
        %4155 = vmatpush.msra.mxu0 0.0
        %4156 = vmatpush.msra.mxu0 0.0
        %4157 = vmatpush.msra.mxu0 0.0
        %v4158 = vand.u32 %v1766, 4294901760
        %v4159 = vsub.f32 %v1766, %v4158
        %4160 = vmatpush.msra.mxu0 %v4159
        %v4161 = vand.u32 %v1762, 4294901760
        %v4162 = vsub.f32 %v1762, %v4161
        %4163 = vmatpush.msra.mxu0 %v4162
        %v4164 = vand.u32 %v1833, 4294901760
        %v4165 = vsub.f32 %v1833, %v4164
        %4166 = vmatmul.f32.gmra.mxu0 %v4165
        %v4167 = vpop.f32.mrf.mxu0
        %v4168 = vadd.f32 %v4138, %v4167
        %v4169 = vand.u32 %v1836, 4294901760
        %v4170 = vsub.f32 %v1836, %v4169
        %4171 = vmatmul.f32.gmra.mxu0 %v4170
        %v4172 = vpop.f32.mrf.mxu0
        %v4173 = vadd.f32 %v4142, %v4172
        %4174 = vdwg.mxu0
        %4175 = vmatpush.msra.mxu0 0.0
        %4176 = vmatpush.msra.mxu0 0.0
        %4177 = vmatpush.msra.mxu0 0.0
        %4178 = vmatpush.msra.mxu0 0.0
        %4179 = vmatpush.msra.mxu0 0.0
        %4180 = vmatpush.msra.mxu0 0.0
        %4181 = vmatpush.msra.mxu0 0.0
        %4182 = vmatpush.msra.mxu0 0.0
        %4183 = vmatpush.msra.mxu0 0.0
        %4184 = vmatpush.msra.mxu0 0.0
        %4185 = vmatpush.msra.mxu0 0.0
        %4186 = vmatpush.msra.mxu0 0.0
        %4187 = vmatpush.msra.mxu0 0.0
        %4188 = vmatpush.msra.mxu0 0.0
        %v4189 = vand.u32 %v1766, 4294901760
        %4190 = vmatpush.msra.mxu0 %v4189
        %v4191 = vand.u32 %v1762, 4294901760
        %4192 = vmatpush.msra.mxu0 %v4191
        %v4193 = vand.u32 %v1833, 4294901760
        %v4194 = vsub.f32 %v1833, %v4193
        %v4195 = vand.u32 %v4194, 4294901760
        %4196 = vmatmul.f32.gmra.mxu0 %v4195
        %v4197 = vpop.f32.mrf.mxu0
        %v4198 = vadd.f32 %v4168, %v4197
        %v4199 = vand.u32 %v1836, 4294901760
        %v4200 = vsub.f32 %v1836, %v4199
        %v4201 = vand.u32 %v4200, 4294901760
        %4202 = vmatmul.f32.gmra.mxu0 %v4201
        %v4203 = vpop.f32.mrf.mxu0
        %v4204 = vadd.f32 %v4173, %v4203
        %4205 = vdwg.mxu0
        %4206 = vmatpush.msra.mxu0 0.0
        %4207 = vmatpush.msra.mxu0 0.0
        %4208 = vmatpush.msra.mxu0 0.0
        %4209 = vmatpush.msra.mxu0 0.0
        %4210 = vmatpush.msra.mxu0 0.0
        %4211 = vmatpush.msra.mxu0 0.0
        %4212 = vmatpush.msra.mxu0 0.0
        %4213 = vmatpush.msra.mxu0 0.0
        %4214 = vmatpush.msra.mxu0 0.0
        %4215 = vmatpush.msra.mxu0 0.0
        %4216 = vmatpush.msra.mxu0 0.0
        %4217 = vmatpush.msra.mxu0 0.0
        %4218 = vmatpush.msra.mxu0 0.0
        %4219 = vmatpush.msra.mxu0 0.0
        %v4220 = vand.u32 %v1766, 4294901760
        %v4221 = vsub.f32 %v1766, %v4220
        %v4222 = vand.u32 %v4221, 4294901760
        %4223 = vmatpush.msra.mxu0 %v4222
        %v4224 = vand.u32 %v1762, 4294901760
        %v4225 = vsub.f32 %v1762, %v4224
        %v4226 = vand.u32 %v4225, 4294901760
        %4227 = vmatpush.msra.mxu0 %v4226
        %v4228 = vand.u32 %v1833, 4294901760
        %4229 = vmatmul.f32.gmra.mxu0 %v4228
        %v4230 = vpop.f32.mrf.mxu0
        %v4231 = vadd.f32 %v4198, %v4230
        %v4232 = vand.u32 %v1836, 4294901760
        %4233 = vmatmul.f32.gmra.mxu0 %v4232
        %v4234 = vpop.f32.mrf.mxu0
        %v4235 = vadd.f32 %v4204, %v4234
        %4236 = vdwg.mxu0
        %4237 = vmatpush.msra.mxu0 0.0
        %4238 = vmatpush.msra.mxu0 0.0
        %4239 = vmatpush.msra.mxu0 0.0
        %4240 = vmatpush.msra.mxu0 0.0
        %4241 = vmatpush.msra.mxu0 0.0
        %4242 = vmatpush.msra.mxu0 0.0
        %4243 = vmatpush.msra.mxu0 0.0
        %4244 = vmatpush.msra.mxu0 0.0
        %4245 = vmatpush.msra.mxu0 0.0
        %4246 = vmatpush.msra.mxu0 0.0
        %4247 = vmatpush.msra.mxu0 0.0
        %4248 = vmatpush.msra.mxu0 0.0
        %4249 = vmatpush.msra.mxu0 0.0
        %4250 = vmatpush.msra.mxu0 0.0
        %v4251 = vand.u32 %v1766, 4294901760
        %4252 = vmatpush.msra.mxu0 %v4251
        %v4253 = vand.u32 %v1762, 4294901760
        %4254 = vmatpush.msra.mxu0 %v4253
        %v4255 = vand.u32 %v1833, 4294901760
        %4256 = vmatmul.f32.gmra.mxu0 %v4255
        %v4257 = vpop.f32.mrf.mxu0
        %v4258 = vadd.f32 %v4231, %v4257
        %v4259 = vand.u32 %v1836, 4294901760
        %4260 = vmatmul.f32.gmra.mxu0 %v4259
        %v4261 = vpop.f32.mrf.mxu0
        %v4262 = vadd.f32 %v4235, %v4261
        %4263 = vdwg.mxu0
        %4264 = vmatpush.msra.mxu0 0.0
        %4265 = vmatpush.msra.mxu0 0.0
        %4266 = vmatpush.msra.mxu0 0.0
        %4267 = vmatpush.msra.mxu0 0.0
        %4268 = vmatpush.msra.mxu0 0.0
        %4269 = vmatpush.msra.mxu0 0.0
        %4270 = vmatpush.msra.mxu0 0.0
        %4271 = vmatpush.msra.mxu0 0.0
        %4272 = vmatpush.msra.mxu0 0.0
        %4273 = vmatpush.msra.mxu0 0.0
        %4274 = vmatpush.msra.mxu0 0.0
        %4275 = vmatpush.msra.mxu0 0.0
        %4276 = vmatpush.msra.mxu0 0.0
        %4277 = vmatpush.msra.mxu0 0.0
        %v4278 = vand.u32 %v1774, 4294901760
        %4279 = vmatpush.msra.mxu0 %v4278
        %v4280 = vand.u32 %v1770, 4294901760
        %4281 = vmatpush.msra.mxu0 %v4280
        %v4282 = vand.u32 %v1833, 4294901760
        %v4283 = vsub.f32 %v1833, %v4282
        %v4284 = vand.u32 %v4283, 4294901760
        %v4285 = vsub.f32 %v4283, %v4284
        %v4286 = vand.u32 %v4285, 4294901760
        %4287 = vmatmul.f32.gmra.mxu0 %v4286
        %v4288 = vpop.f32.mrf.mxu0
        %v4289 = vadd.f32 0.0, %v4288
        %v4290 = vand.u32 %v1836, 4294901760
        %v4291 = vsub.f32 %v1836, %v4290
        %v4292 = vand.u32 %v4291, 4294901760
        %v4293 = vsub.f32 %v4291, %v4292
        %v4294 = vand.u32 %v4293, 4294901760
        %4295 = vmatmul.f32.gmra.mxu0 %v4294
        %v4296 = vpop.f32.mrf.mxu0
        %v4297 = vadd.f32 0.0, %v4296
        %4298 = vdwg.mxu0
        %4299 = vmatpush.msra.mxu0 0.0
        %4300 = vmatpush.msra.mxu0 0.0
        %4301 = vmatpush.msra.mxu0 0.0
        %4302 = vmatpush.msra.mxu0 0.0
        %4303 = vmatpush.msra.mxu0 0.0
        %4304 = vmatpush.msra.mxu0 0.0
        %4305 = vmatpush.msra.mxu0 0.0
        %4306 = vmatpush.msra.mxu0 0.0
        %4307 = vmatpush.msra.mxu0 0.0
        %4308 = vmatpush.msra.mxu0 0.0
        %4309 = vmatpush.msra.mxu0 0.0
        %4310 = vmatpush.msra.mxu0 0.0
        %4311 = vmatpush.msra.mxu0 0.0
        %4312 = vmatpush.msra.mxu0 0.0
        %v4313 = vand.u32 %v1774, 4294901760
        %v4314 = vsub.f32 %v1774, %v4313
        %v4315 = vand.u32 %v4314, 4294901760
        %v4316 = vsub.f32 %v4314, %v4315
        %v4317 = vand.u32 %v4316, 4294901760
        %4318 = vmatpush.msra.mxu0 %v4317
        %v4319 = vand.u32 %v1770, 4294901760
        %v4320 = vsub.f32 %v1770, %v4319
        %v4321 = vand.u32 %v4320, 4294901760
        %v4322 = vsub.f32 %v4320, %v4321
        %v4323 = vand.u32 %v4322, 4294901760
        %4324 = vmatpush.msra.mxu0 %v4323
        %v4325 = vand.u32 %v1833, 4294901760
        %4326 = vmatmul.f32.gmra.mxu0 %v4325
        %v4327 = vpop.f32.mrf.mxu0
        %v4328 = vadd.f32 %v4289, %v4327
        %v4329 = vand.u32 %v1836, 4294901760
        %4330 = vmatmul.f32.gmra.mxu0 %v4329
        %v4331 = vpop.f32.mrf.mxu0
        %v4332 = vadd.f32 %v4297, %v4331
        %4333 = vdwg.mxu0
        %4334 = vmatpush.msra.mxu0 0.0
        %4335 = vmatpush.msra.mxu0 0.0
        %4336 = vmatpush.msra.mxu0 0.0
        %4337 = vmatpush.msra.mxu0 0.0
        %4338 = vmatpush.msra.mxu0 0.0
        %4339 = vmatpush.msra.mxu0 0.0
        %4340 = vmatpush.msra.mxu0 0.0
        %4341 = vmatpush.msra.mxu0 0.0
        %4342 = vmatpush.msra.mxu0 0.0
        %4343 = vmatpush.msra.mxu0 0.0
        %4344 = vmatpush.msra.mxu0 0.0
        %4345 = vmatpush.msra.mxu0 0.0
        %4346 = vmatpush.msra.mxu0 0.0
        %4347 = vmatpush.msra.mxu0 0.0
        %v4348 = vand.u32 %v1774, 4294901760
        %v4349 = vsub.f32 %v1774, %v4348
        %4350 = vmatpush.msra.mxu0 %v4349
        %v4351 = vand.u32 %v1770, 4294901760
        %v4352 = vsub.f32 %v1770, %v4351
        %4353 = vmatpush.msra.mxu0 %v4352
        %v4354 = vand.u32 %v1833, 4294901760
        %v4355 = vsub.f32 %v1833, %v4354
        %4356 = vmatmul.f32.gmra.mxu0 %v4355
        %v4357 = vpop.f32.mrf.mxu0
        %v4358 = vadd.f32 %v4328, %v4357
        %v4359 = vand.u32 %v1836, 4294901760
        %v4360 = vsub.f32 %v1836, %v4359
        %4361 = vmatmul.f32.gmra.mxu0 %v4360
        %v4362 = vpop.f32.mrf.mxu0
        %v4363 = vadd.f32 %v4332, %v4362
        %4364 = vdwg.mxu0
        %4365 = vmatpush.msra.mxu0 0.0
        %4366 = vmatpush.msra.mxu0 0.0
        %4367 = vmatpush.msra.mxu0 0.0
        %4368 = vmatpush.msra.mxu0 0.0
        %4369 = vmatpush.msra.mxu0 0.0
        %4370 = vmatpush.msra.mxu0 0.0
        %4371 = vmatpush.msra.mxu0 0.0
        %4372 = vmatpush.msra.mxu0 0.0
        %4373 = vmatpush.msra.mxu0 0.0
        %4374 = vmatpush.msra.mxu0 0.0
        %4375 = vmatpush.msra.mxu0 0.0
        %4376 = vmatpush.msra.mxu0 0.0
        %4377 = vmatpush.msra.mxu0 0.0
        %4378 = vmatpush.msra.mxu0 0.0
        %v4379 = vand.u32 %v1774, 4294901760
        %4380 = vmatpush.msra.mxu0 %v4379
        %v4381 = vand.u32 %v1770, 4294901760
        %4382 = vmatpush.msra.mxu0 %v4381
        %v4383 = vand.u32 %v1833, 4294901760
        %v4384 = vsub.f32 %v1833, %v4383
        %v4385 = vand.u32 %v4384, 4294901760
        %4386 = vmatmul.f32.gmra.mxu0 %v4385
        %v4387 = vpop.f32.mrf.mxu0
        %v4388 = vadd.f32 %v4358, %v4387
        %v4389 = vand.u32 %v1836, 4294901760
        %v4390 = vsub.f32 %v1836, %v4389
        %v4391 = vand.u32 %v4390, 4294901760
        %4392 = vmatmul.f32.gmra.mxu0 %v4391
        %v4393 = vpop.f32.mrf.mxu0
        %v4394 = vadd.f32 %v4363, %v4393
        %4395 = vdwg.mxu0
        %4396 = vmatpush.msra.mxu0 0.0
        %4397 = vmatpush.msra.mxu0 0.0
        %4398 = vmatpush.msra.mxu0 0.0
        %4399 = vmatpush.msra.mxu0 0.0
        %4400 = vmatpush.msra.mxu0 0.0
        %4401 = vmatpush.msra.mxu0 0.0
        %4402 = vmatpush.msra.mxu0 0.0
        %4403 = vmatpush.msra.mxu0 0.0
        %4404 = vmatpush.msra.mxu0 0.0
        %4405 = vmatpush.msra.mxu0 0.0
        %4406 = vmatpush.msra.mxu0 0.0
        %4407 = vmatpush.msra.mxu0 0.0
        %4408 = vmatpush.msra.mxu0 0.0
        %4409 = vmatpush.msra.mxu0 0.0
        %v4410 = vand.u32 %v1774, 4294901760
        %v4411 = vsub.f32 %v1774, %v4410
        %v4412 = vand.u32 %v4411, 4294901760
        %4413 = vmatpush.msra.mxu0 %v4412
        %v4414 = vand.u32 %v1770, 4294901760
        %v4415 = vsub.f32 %v1770, %v4414
        %v4416 = vand.u32 %v4415, 4294901760
        %4417 = vmatpush.msra.mxu0 %v4416
        %v4418 = vand.u32 %v1833, 4294901760
        %4419 = vmatmul.f32.gmra.mxu0 %v4418
        %v4420 = vpop.f32.mrf.mxu0
        %v4421 = vadd.f32 %v4388, %v4420
        %v4422 = vand.u32 %v1836, 4294901760
        %4423 = vmatmul.f32.gmra.mxu0 %v4422
        %v4424 = vpop.f32.mrf.mxu0
        %v4425 = vadd.f32 %v4394, %v4424
        %4426 = vdwg.mxu0
        %4427 = vmatpush.msra.mxu0 0.0
        %4428 = vmatpush.msra.mxu0 0.0
        %4429 = vmatpush.msra.mxu0 0.0
        %4430 = vmatpush.msra.mxu0 0.0
        %4431 = vmatpush.msra.mxu0 0.0
        %4432 = vmatpush.msra.mxu0 0.0
        %4433 = vmatpush.msra.mxu0 0.0
        %4434 = vmatpush.msra.mxu0 0.0
        %4435 = vmatpush.msra.mxu0 0.0
        %4436 = vmatpush.msra.mxu0 0.0
        %4437 = vmatpush.msra.mxu0 0.0
        %4438 = vmatpush.msra.mxu0 0.0
        %4439 = vmatpush.msra.mxu0 0.0
        %4440 = vmatpush.msra.mxu0 0.0
        %v4441 = vand.u32 %v1774, 4294901760
        %4442 = vmatpush.msra.mxu0 %v4441
        %v4443 = vand.u32 %v1770, 4294901760
        %4444 = vmatpush.msra.mxu0 %v4443
        %v4445 = vand.u32 %v1833, 4294901760
        %4446 = vmatmul.f32.gmra.mxu0 %v4445
        %v4447 = vpop.f32.mrf.mxu0
        %v4448 = vadd.f32 %v4421, %v4447
        %v4449 = vand.u32 %v1836, 4294901760
        %4450 = vmatmul.f32.gmra.mxu0 %v4449
        %v4451 = vpop.f32.mrf.mxu0
        %v4452 = vadd.f32 %v4425, %v4451
        %4453 = vdwg.mxu0
        %4454 = vmatpush.msra.mxu0 0.0
        %4455 = vmatpush.msra.mxu0 0.0
        %4456 = vmatpush.msra.mxu0 0.0
        %4457 = vmatpush.msra.mxu0 0.0
        %4458 = vmatpush.msra.mxu0 0.0
        %4459 = vmatpush.msra.mxu0 0.0
        %4460 = vmatpush.msra.mxu0 0.0
        %4461 = vmatpush.msra.mxu0 0.0
        %4462 = vmatpush.msra.mxu0 0.0
        %4463 = vmatpush.msra.mxu0 0.0
        %4464 = vmatpush.msra.mxu0 0.0
        %4465 = vmatpush.msra.mxu0 0.0
        %4466 = vmatpush.msra.mxu0 0.0
        %4467 = vmatpush.msra.mxu0 0.0
        %v4468 = vand.u32 %v1790, 4294901760
        %4469 = vmatpush.msra.mxu0 %v4468
        %v4470 = vand.u32 %v1786, 4294901760
        %4471 = vmatpush.msra.mxu0 %v4470
        %v4472 = vand.u32 %v1833, 4294901760
        %v4473 = vsub.f32 %v1833, %v4472
        %v4474 = vand.u32 %v4473, 4294901760
        %v4475 = vsub.f32 %v4473, %v4474
        %v4476 = vand.u32 %v4475, 4294901760
        %4477 = vmatmul.f32.gmra.mxu0 %v4476
        %v4478 = vpop.f32.mrf.mxu0
        %v4479 = vadd.f32 0.0, %v4478
        %v4480 = vand.u32 %v1836, 4294901760
        %v4481 = vsub.f32 %v1836, %v4480
        %v4482 = vand.u32 %v4481, 4294901760
        %v4483 = vsub.f32 %v4481, %v4482
        %v4484 = vand.u32 %v4483, 4294901760
        %4485 = vmatmul.f32.gmra.mxu0 %v4484
        %v4486 = vpop.f32.mrf.mxu0
        %v4487 = vadd.f32 0.0, %v4486
        %4488 = vdwg.mxu0
        %4489 = vmatpush.msra.mxu0 0.0
        %4490 = vmatpush.msra.mxu0 0.0
        %4491 = vmatpush.msra.mxu0 0.0
        %4492 = vmatpush.msra.mxu0 0.0
        %4493 = vmatpush.msra.mxu0 0.0
        %4494 = vmatpush.msra.mxu0 0.0
        %4495 = vmatpush.msra.mxu0 0.0
        %4496 = vmatpush.msra.mxu0 0.0
        %4497 = vmatpush.msra.mxu0 0.0
        %4498 = vmatpush.msra.mxu0 0.0
        %4499 = vmatpush.msra.mxu0 0.0
        %4500 = vmatpush.msra.mxu0 0.0
        %4501 = vmatpush.msra.mxu0 0.0
        %4502 = vmatpush.msra.mxu0 0.0
        %v4503 = vand.u32 %v1790, 4294901760
        %v4504 = vsub.f32 %v1790, %v4503
        %v4505 = vand.u32 %v4504, 4294901760
        %v4506 = vsub.f32 %v4504, %v4505
        %v4507 = vand.u32 %v4506, 4294901760
        %4508 = vmatpush.msra.mxu0 %v4507
        %v4509 = vand.u32 %v1786, 4294901760
        %v4510 = vsub.f32 %v1786, %v4509
        %v4511 = vand.u32 %v4510, 4294901760
        %v4512 = vsub.f32 %v4510, %v4511
        %v4513 = vand.u32 %v4512, 4294901760
        %4514 = vmatpush.msra.mxu0 %v4513
        %v4515 = vand.u32 %v1833, 4294901760
        %4516 = vmatmul.f32.gmra.mxu0 %v4515
        %v4517 = vpop.f32.mrf.mxu0
        %v4518 = vadd.f32 %v4479, %v4517
        %v4519 = vand.u32 %v1836, 4294901760
        %4520 = vmatmul.f32.gmra.mxu0 %v4519
        %v4521 = vpop.f32.mrf.mxu0
        %v4522 = vadd.f32 %v4487, %v4521
        %4523 = vdwg.mxu0
        %4524 = vmatpush.msra.mxu0 0.0
        %4525 = vmatpush.msra.mxu0 0.0
        %4526 = vmatpush.msra.mxu0 0.0
        %4527 = vmatpush.msra.mxu0 0.0
        %4528 = vmatpush.msra.mxu0 0.0
        %4529 = vmatpush.msra.mxu0 0.0
        %4530 = vmatpush.msra.mxu0 0.0
        %4531 = vmatpush.msra.mxu0 0.0
        %4532 = vmatpush.msra.mxu0 0.0
        %4533 = vmatpush.msra.mxu0 0.0
        %4534 = vmatpush.msra.mxu0 0.0
        %4535 = vmatpush.msra.mxu0 0.0
        %4536 = vmatpush.msra.mxu0 0.0
        %4537 = vmatpush.msra.mxu0 0.0
        %v4538 = vand.u32 %v1790, 4294901760
        %v4539 = vsub.f32 %v1790, %v4538
        %4540 = vmatpush.msra.mxu0 %v4539
        %v4541 = vand.u32 %v1786, 4294901760
        %v4542 = vsub.f32 %v1786, %v4541
        %4543 = vmatpush.msra.mxu0 %v4542
        %v4544 = vand.u32 %v1833, 4294901760
        %v4545 = vsub.f32 %v1833, %v4544
        %4546 = vmatmul.f32.gmra.mxu0 %v4545
        %v4547 = vpop.f32.mrf.mxu0
        %v4548 = vadd.f32 %v4518, %v4547
        %v4549 = vand.u32 %v1836, 4294901760
        %v4550 = vsub.f32 %v1836, %v4549
        %4551 = vmatmul.f32.gmra.mxu0 %v4550
        %v4552 = vpop.f32.mrf.mxu0
        %v4553 = vadd.f32 %v4522, %v4552
        %4554 = vdwg.mxu0
        %4555 = vmatpush.msra.mxu0 0.0
        %4556 = vmatpush.msra.mxu0 0.0
        %4557 = vmatpush.msra.mxu0 0.0
        %4558 = vmatpush.msra.mxu0 0.0
        %4559 = vmatpush.msra.mxu0 0.0
        %4560 = vmatpush.msra.mxu0 0.0
        %4561 = vmatpush.msra.mxu0 0.0
        %4562 = vmatpush.msra.mxu0 0.0
        %4563 = vmatpush.msra.mxu0 0.0
        %4564 = vmatpush.msra.mxu0 0.0
        %4565 = vmatpush.msra.mxu0 0.0
        %4566 = vmatpush.msra.mxu0 0.0
        %4567 = vmatpush.msra.mxu0 0.0
        %4568 = vmatpush.msra.mxu0 0.0
        %v4569 = vand.u32 %v1790, 4294901760
        %4570 = vmatpush.msra.mxu0 %v4569
        %v4571 = vand.u32 %v1786, 4294901760
        %4572 = vmatpush.msra.mxu0 %v4571
        %v4573 = vand.u32 %v1833, 4294901760
        %v4574 = vsub.f32 %v1833, %v4573
        %v4575 = vand.u32 %v4574, 4294901760
        %4576 = vmatmul.f32.gmra.mxu0 %v4575
        %v4577 = vpop.f32.mrf.mxu0
        %v4578 = vadd.f32 %v4548, %v4577
        %v4579 = vand.u32 %v1836, 4294901760
        %v4580 = vsub.f32 %v1836, %v4579
        %v4581 = vand.u32 %v4580, 4294901760
        %4582 = vmatmul.f32.gmra.mxu0 %v4581
        %v4583 = vpop.f32.mrf.mxu0
        %v4584 = vadd.f32 %v4553, %v4583
        %4585 = vdwg.mxu0
        %4586 = vmatpush.msra.mxu0 0.0
        %4587 = vmatpush.msra.mxu0 0.0
        %4588 = vmatpush.msra.mxu0 0.0
        %4589 = vmatpush.msra.mxu0 0.0
        %4590 = vmatpush.msra.mxu0 0.0
        %4591 = vmatpush.msra.mxu0 0.0
        %4592 = vmatpush.msra.mxu0 0.0
        %4593 = vmatpush.msra.mxu0 0.0
        %4594 = vmatpush.msra.mxu0 0.0
        %4595 = vmatpush.msra.mxu0 0.0
        %4596 = vmatpush.msra.mxu0 0.0
        %4597 = vmatpush.msra.mxu0 0.0
        %4598 = vmatpush.msra.mxu0 0.0
        %4599 = vmatpush.msra.mxu0 0.0
        %v4600 = vand.u32 %v1790, 4294901760
        %v4601 = vsub.f32 %v1790, %v4600
        %v4602 = vand.u32 %v4601, 4294901760
        %4603 = vmatpush.msra.mxu0 %v4602
        %v4604 = vand.u32 %v1786, 4294901760
        %v4605 = vsub.f32 %v1786, %v4604
        %v4606 = vand.u32 %v4605, 4294901760
        %4607 = vmatpush.msra.mxu0 %v4606
        %v4608 = vand.u32 %v1833, 4294901760
        %4609 = vmatmul.f32.gmra.mxu0 %v4608
        %v4610 = vpop.f32.mrf.mxu0
        %v4611 = vadd.f32 %v4578, %v4610
        %v4612 = vand.u32 %v1836, 4294901760
        %4613 = vmatmul.f32.gmra.mxu0 %v4612
        %v4614 = vpop.f32.mrf.mxu0
        %v4615 = vadd.f32 %v4584, %v4614
        %4616 = vdwg.mxu0
        %4617 = vmatpush.msra.mxu0 0.0
        %4618 = vmatpush.msra.mxu0 0.0
        %4619 = vmatpush.msra.mxu0 0.0
        %4620 = vmatpush.msra.mxu0 0.0
        %4621 = vmatpush.msra.mxu0 0.0
        %4622 = vmatpush.msra.mxu0 0.0
        %4623 = vmatpush.msra.mxu0 0.0
        %4624 = vmatpush.msra.mxu0 0.0
        %4625 = vmatpush.msra.mxu0 0.0
        %4626 = vmatpush.msra.mxu0 0.0
        %4627 = vmatpush.msra.mxu0 0.0
        %4628 = vmatpush.msra.mxu0 0.0
        %4629 = vmatpush.msra.mxu0 0.0
        %4630 = vmatpush.msra.mxu0 0.0
        %v4631 = vand.u32 %v1790, 4294901760
        %4632 = vmatpush.msra.mxu0 %v4631
        %v4633 = vand.u32 %v1786, 4294901760
        %4634 = vmatpush.msra.mxu0 %v4633
        %v4635 = vand.u32 %v1833, 4294901760
        %4636 = vmatmul.f32.gmra.mxu0 %v4635
        %v4637 = vpop.f32.mrf.mxu0
        %v4638 = vadd.f32 %v4611, %v4637
        %v4639 = vand.u32 %v1836, 4294901760
        %4640 = vmatmul.f32.gmra.mxu0 %v4639
        %v4641 = vpop.f32.mrf.mxu0
        %v4642 = vadd.f32 %v4615, %v4641
        %4643 = vdwg.mxu0
        %v4644 = vmul.f32 %v4068, %v4258
        %v4645 = vmul.f32 %v4072, %v4262
        %v4646 = vmul.f32 %v4644, 2.0
        %v4647 = vmul.f32 %v4645, 2.0
        %v4648 = vadd.f32 %v4646, 0.0001
        %v4649 = vadd.f32 %v4647, 0.0001
        %v4650 = vmul.f32 %v4068, %v4068
        %v4651 = vmul.f32 %v4072, %v4072
        %v4652 = vmul.f32 %v4258, %v4258
        %v4653 = vmul.f32 %v4262, %v4262
        %v4654 = vadd.f32 %v4650, %v4652
        %v4655 = vadd.f32 %v4651, %v4653
        %v4656 = vadd.f32 %v4654, 0.0001
        %v4657 = vadd.f32 %v4655, 0.0001
        %v4658 = vmul.f32 %v4448, 2.0
        %v4659 = vmul.f32 %v4452, 2.0
        %v4660 = vsub.f32 %v4658, %v4648
        %v4661 = vsub.f32 %v4659, %v4649
        %v4662 = vadd.f32 %v4660, 0.001
        %v4663 = vadd.f32 %v4661, 0.001
        %4664 = vmatpush.msra.mxu0 0.0
        %4665 = vmatpush.msra.mxu0 0.0
        %4666 = vmatpush.msra.mxu0 0.0
        %4667 = vmatpush.msra.mxu0 0.0
        %4668 = vmatpush.msra.mxu0 0.0
        %4669 = vmatpush.msra.mxu0 0.0
        %4670 = vmatpush.msra.mxu0 0.0
        %4671 = vmatpush.msra.mxu0 0.0
        %4672 = vmatpush.msra.mxu0 0.0
        %4673 = vmatpush.msra.mxu0 0.0
        %4674 = vmatpush.msra.mxu0 0.0
        %4675 = vmatpush.msra.mxu0 0.0
        %4676 = vmatpush.msra.mxu0 0.0
        %4677 = vmatpush.msra.mxu0 0.0
        %v4678 = vand.u32 %v1782, 4294901760
        %4679 = vmatpush.msra.mxu0 %v4678
        %v4680 = vand.u32 %v1778, 4294901760
        %4681 = vmatpush.msra.mxu0 %v4680
        %v4682 = vand.u32 %v1833, 4294901760
        %v4683 = vsub.f32 %v1833, %v4682
        %v4684 = vand.u32 %v4683, 4294901760
        %v4685 = vsub.f32 %v4683, %v4684
        %v4686 = vand.u32 %v4685, 4294901760
        %4687 = vmatmul.f32.gmra.mxu0 %v4686
        %v4688 = vpop.f32.mrf.mxu0
        %v4689 = vadd.f32 %v4638, %v4688
        %v4690 = vand.u32 %v1836, 4294901760
        %v4691 = vsub.f32 %v1836, %v4690
        %v4692 = vand.u32 %v4691, 4294901760
        %v4693 = vsub.f32 %v4691, %v4692
        %v4694 = vand.u32 %v4693, 4294901760
        %4695 = vmatmul.f32.gmra.mxu0 %v4694
        %v4696 = vpop.f32.mrf.mxu0
        %v4697 = vadd.f32 %v4642, %v4696
        %4698 = vdwg.mxu0
        %4699 = vmatpush.msra.mxu0 0.0
        %4700 = vmatpush.msra.mxu0 0.0
        %4701 = vmatpush.msra.mxu0 0.0
        %4702 = vmatpush.msra.mxu0 0.0
        %4703 = vmatpush.msra.mxu0 0.0
        %4704 = vmatpush.msra.mxu0 0.0
        %4705 = vmatpush.msra.mxu0 0.0
        %4706 = vmatpush.msra.mxu0 0.0
        %4707 = vmatpush.msra.mxu0 0.0
        %4708 = vmatpush.msra.mxu0 0.0
        %4709 = vmatpush.msra.mxu0 0.0
        %4710 = vmatpush.msra.mxu0 0.0
        %4711 = vmatpush.msra.mxu0 0.0
        %4712 = vmatpush.msra.mxu0 0.0
        %v4713 = vand.u32 %v1782, 4294901760
        %v4714 = vsub.f32 %v1782, %v4713
        %v4715 = vand.u32 %v4714, 4294901760
        %v4716 = vsub.f32 %v4714, %v4715
        %v4717 = vand.u32 %v4716, 4294901760
        %4718 = vmatpush.msra.mxu0 %v4717
        %v4719 = vand.u32 %v1778, 4294901760
        %v4720 = vsub.f32 %v1778, %v4719
        %v4721 = vand.u32 %v4720, 4294901760
        %v4722 = vsub.f32 %v4720, %v4721
        %v4723 = vand.u32 %v4722, 4294901760
        %4724 = vmatpush.msra.mxu0 %v4723
        %v4725 = vand.u32 %v1833, 4294901760
        %4726 = vmatmul.f32.gmra.mxu0 %v4725
        %v4727 = vpop.f32.mrf.mxu0
        %v4728 = vadd.f32 %v4689, %v4727
        %v4729 = vand.u32 %v1836, 4294901760
        %4730 = vmatmul.f32.gmra.mxu0 %v4729
        %v4731 = vpop.f32.mrf.mxu0
        %v4732 = vadd.f32 %v4697, %v4731
        %4733 = vdwg.mxu0
        %4734 = vmatpush.msra.mxu0 0.0
        %4735 = vmatpush.msra.mxu0 0.0
        %4736 = vmatpush.msra.mxu0 0.0
        %4737 = vmatpush.msra.mxu0 0.0
        %4738 = vmatpush.msra.mxu0 0.0
        %4739 = vmatpush.msra.mxu0 0.0
        %4740 = vmatpush.msra.mxu0 0.0
        %4741 = vmatpush.msra.mxu0 0.0
        %4742 = vmatpush.msra.mxu0 0.0
        %4743 = vmatpush.msra.mxu0 0.0
        %4744 = vmatpush.msra.mxu0 0.0
        %4745 = vmatpush.msra.mxu0 0.0
        %4746 = vmatpush.msra.mxu0 0.0
        %4747 = vmatpush.msra.mxu0 0.0
        %v4748 = vand.u32 %v1782, 4294901760
        %v4749 = vsub.f32 %v1782, %v4748
        %4750 = vmatpush.msra.mxu0 %v4749
        %v4751 = vand.u32 %v1778, 4294901760
        %v4752 = vsub.f32 %v1778, %v4751
        %4753 = vmatpush.msra.mxu0 %v4752
        %v4754 = vand.u32 %v1833, 4294901760
        %v4755 = vsub.f32 %v1833, %v4754
        %4756 = vmatmul.f32.gmra.mxu0 %v4755
        %v4757 = vpop.f32.mrf.mxu0
        %v4758 = vadd.f32 %v4728, %v4757
        %v4759 = vand.u32 %v1836, 4294901760
        %v4760 = vsub.f32 %v1836, %v4759
        %4761 = vmatmul.f32.gmra.mxu0 %v4760
        %v4762 = vpop.f32.mrf.mxu0
        %v4763 = vadd.f32 %v4732, %v4762
        %4764 = vdwg.mxu0
        %4765 = vmatpush.msra.mxu0 0.0
        %4766 = vmatpush.msra.mxu0 0.0
        %4767 = vmatpush.msra.mxu0 0.0
        %4768 = vmatpush.msra.mxu0 0.0
        %4769 = vmatpush.msra.mxu0 0.0
        %4770 = vmatpush.msra.mxu0 0.0
        %4771 = vmatpush.msra.mxu0 0.0
        %4772 = vmatpush.msra.mxu0 0.0
        %4773 = vmatpush.msra.mxu0 0.0
        %4774 = vmatpush.msra.mxu0 0.0
        %4775 = vmatpush.msra.mxu0 0.0
        %4776 = vmatpush.msra.mxu0 0.0
        %4777 = vmatpush.msra.mxu0 0.0
        %4778 = vmatpush.msra.mxu0 0.0
        %v4779 = vand.u32 %v1782, 4294901760
        %4780 = vmatpush.msra.mxu0 %v4779
        %v4781 = vand.u32 %v1778, 4294901760
        %4782 = vmatpush.msra.mxu0 %v4781
        %v4783 = vand.u32 %v1833, 4294901760
        %v4784 = vsub.f32 %v1833, %v4783
        %v4785 = vand.u32 %v4784, 4294901760
        %4786 = vmatmul.f32.gmra.mxu0 %v4785
        %v4787 = vpop.f32.mrf.mxu0
        %v4788 = vadd.f32 %v4758, %v4787
        %v4789 = vand.u32 %v1836, 4294901760
        %v4790 = vsub.f32 %v1836, %v4789
        %v4791 = vand.u32 %v4790, 4294901760
        %4792 = vmatmul.f32.gmra.mxu0 %v4791
        %v4793 = vpop.f32.mrf.mxu0
        %v4794 = vadd.f32 %v4763, %v4793
        %4795 = vdwg.mxu0
        %4796 = vmatpush.msra.mxu0 0.0
        %4797 = vmatpush.msra.mxu0 0.0
        %4798 = vmatpush.msra.mxu0 0.0
        %4799 = vmatpush.msra.mxu0 0.0
        %4800 = vmatpush.msra.mxu0 0.0
        %4801 = vmatpush.msra.mxu0 0.0
        %4802 = vmatpush.msra.mxu0 0.0
        %4803 = vmatpush.msra.mxu0 0.0
        %4804 = vmatpush.msra.mxu0 0.0
        %4805 = vmatpush.msra.mxu0 0.0
        %4806 = vmatpush.msra.mxu0 0.0
        %4807 = vmatpush.msra.mxu0 0.0
        %4808 = vmatpush.msra.mxu0 0.0
        %4809 = vmatpush.msra.mxu0 0.0
        %v4810 = vand.u32 %v1782, 4294901760
        %v4811 = vsub.f32 %v1782, %v4810
        %v4812 = vand.u32 %v4811, 4294901760
        %4813 = vmatpush.msra.mxu0 %v4812
        %v4814 = vand.u32 %v1778, 4294901760
        %v4815 = vsub.f32 %v1778, %v4814
        %v4816 = vand.u32 %v4815, 4294901760
        %4817 = vmatpush.msra.mxu0 %v4816
        %v4818 = vand.u32 %v1833, 4294901760
        %4819 = vmatmul.f32.gmra.mxu0 %v4818
        %v4820 = vpop.f32.mrf.mxu0
        %v4821 = vadd.f32 %v4788, %v4820
        %v4822 = vand.u32 %v1836, 4294901760
        %4823 = vmatmul.f32.gmra.mxu0 %v4822
        %v4824 = vpop.f32.mrf.mxu0
        %v4825 = vadd.f32 %v4794, %v4824
        %4826 = vdwg.mxu0
        %4827 = vmatpush.msra.mxu0 0.0
        %4828 = vmatpush.msra.mxu0 0.0
        %4829 = vmatpush.msra.mxu0 0.0
        %4830 = vmatpush.msra.mxu0 0.0
        %4831 = vmatpush.msra.mxu0 0.0
        %4832 = vmatpush.msra.mxu0 0.0
        %4833 = vmatpush.msra.mxu0 0.0
        %4834 = vmatpush.msra.mxu0 0.0
        %4835 = vmatpush.msra.mxu0 0.0
        %4836 = vmatpush.msra.mxu0 0.0
        %4837 = vmatpush.msra.mxu0 0.0
        %4838 = vmatpush.msra.mxu0 0.0
        %4839 = vmatpush.msra.mxu0 0.0
        %4840 = vmatpush.msra.mxu0 0.0
        %v4841 = vand.u32 %v1782, 4294901760
        %4842 = vmatpush.msra.mxu0 %v4841
        %v4843 = vand.u32 %v1778, 4294901760
        %4844 = vmatpush.msra.mxu0 %v4843
        %v4845 = vand.u32 %v1833, 4294901760
        %4846 = vmatmul.f32.gmra.mxu0 %v4845
        %v4847 = vpop.f32.mrf.mxu0
        %v4848 = vadd.f32 %v4821, %v4847
        %v4849 = vand.u32 %v1836, 4294901760
        %4850 = vmatmul.f32.gmra.mxu0 %v4849
        %v4851 = vpop.f32.mrf.mxu0
        %v4852 = vadd.f32 %v4825, %v4851
        %4853 = vdwg.mxu0
        %v4854 = vsub.f32 %v4848, %v4656
        %v4855 = vsub.f32 %v4852, %v4657
        %v4856 = vadd.f32 %v4854, 0.001
        %v4857 = vadd.f32 %v4855, 0.001
        %v4858 = vmul.f32 %v4648, %v4662
        %v4859 = vmul.f32 %v4649, %v4663
        %v4860 = vmul.f32 %v4656, %v4856
        %v4861 = vmul.f32 %v4657, %v4857
        %v4862 = vrcp.pop %v4860
        %v4863 = vmul.f32 %v4860, %v4862
        %v4864 = vsub.f32 1.0, %v4863
        %v4865 = vmul.f32 %v4862, %v4864
        %v4866 = vadd.f32 %v4862, %v4865
        %vm4867 = vweird.f32 %v4860
        %vm4868 = vweird.f32 %v4862
        %vm4869 = vmor %vm4867, %vm4868
        %v4870 = vsel %vm4869, %v4862, %v4866
        %v4871 = vand.u32 2147483647, %v4860
        %vm4872 = vcmp.eq.f32.partialorder %v4871, 8.507059e+37
        %v4873 = vand.u32 %v4860, 2147483648
        %v4874 = vor.u32 1.1754944e-38, %v4873
        %v4875 = vsel %vm4872, %v4874, %v4870
        %v4876 = vmul.f32 %v4858, %v4875
        %v4877 = vrcp.pop %v4861
        %v4878 = vmul.f32 %v4861, %v4877
        %v4879 = vsub.f32 1.0, %v4878
        %v4880 = vmul.f32 %v4877, %v4879
        %v4881 = vadd.f32 %v4877, %v4880
        %vm4882 = vweird.f32 %v4861
        %vm4883 = vweird.f32 %v4877
        %vm4884 = vmor %vm4882, %vm4883
        %v4885 = vsel %vm4884, %v4877, %v4881
        %v4886 = vand.u32 2147483647, %v4861
        %vm4887 = vcmp.eq.f32.partialorder %v4886, 8.507059e+37
        %v4888 = vand.u32 %v4861, 2147483648
        %v4889 = vor.u32 1.1754944e-38, %v4888
        %v4890 = vsel %vm4887, %v4889, %v4885
        %v4891 = vmul.f32 %v4859, %v4890
        %v4892 = vsel %vm343, %v4876, 0.0
        %v4893 = vsel %vm343, %v4891, 0.0
        %v4894 = vadd.f32 %v4892, %v4893
        %4895 = vadd.xlane.f32.xlu0 %v4894
        %v4896 = vpop.xlane.xlu0 %4895
        %v4897 = vrot.slane %v4896, 4
        %v4898 = vadd.f32 %v4896, %v4897
        %v4899 = vrot.slane %v4898, 2
        %v4900 = vadd.f32 %v4898, %v4899
        %v4901 = vrot.slane %v4900, 1
        %v4902 = vadd.f32 %v4900, %v4901
        %s4903 = vtos %v4902
        %v4904 = vstv %s4903
        %s4905 = scalar_lea.vmem %s291, 2
        %4906 = vst.msk [vmem:[%s4905] sm:$0x1] %vm2859, %v4904
        %4907 = vmatpush.msra.mxu0 0.0
        %4908 = vmatpush.msra.mxu0 0.0
        %4909 = vmatpush.msra.mxu0 0.0
        %4910 = vmatpush.msra.mxu0 0.0
        %4911 = vmatpush.msra.mxu0 0.0
        %4912 = vmatpush.msra.mxu0 0.0
        %4913 = vmatpush.msra.mxu0 0.0
        %4914 = vmatpush.msra.mxu0 0.0
        %4915 = vmatpush.msra.mxu0 0.0
        %4916 = vmatpush.msra.mxu0 0.0
        %4917 = vmatpush.msra.mxu0 0.0
        %4918 = vmatpush.msra.mxu0 0.0
        %4919 = vmatpush.msra.mxu0 0.0
        %4920 = vmatpush.msra.mxu0 0.0
        %v4921 = vand.u32 %v1798, 4294901760
        %4922 = vmatpush.msra.mxu0 %v4921
        %v4923 = vand.u32 %v1794, 4294901760
        %4924 = vmatpush.msra.mxu0 %v4923
        %v4925 = vand.u32 %v1833, 4294901760
        %v4926 = vsub.f32 %v1833, %v4925
        %v4927 = vand.u32 %v4926, 4294901760
        %v4928 = vsub.f32 %v4926, %v4927
        %v4929 = vand.u32 %v4928, 4294901760
        %4930 = vmatmul.f32.gmra.mxu0 %v4929
        %v4931 = vpop.f32.mrf.mxu0
        %v4932 = vadd.f32 0.0, %v4931
        %v4933 = vand.u32 %v1836, 4294901760
        %v4934 = vsub.f32 %v1836, %v4933
        %v4935 = vand.u32 %v4934, 4294901760
        %v4936 = vsub.f32 %v4934, %v4935
        %v4937 = vand.u32 %v4936, 4294901760
        %4938 = vmatmul.f32.gmra.mxu0 %v4937
        %v4939 = vpop.f32.mrf.mxu0
        %v4940 = vadd.f32 0.0, %v4939
        %4941 = vdwg.mxu0
        %4942 = vmatpush.msra.mxu0 0.0
        %4943 = vmatpush.msra.mxu0 0.0
        %4944 = vmatpush.msra.mxu0 0.0
        %4945 = vmatpush.msra.mxu0 0.0
        %4946 = vmatpush.msra.mxu0 0.0
        %4947 = vmatpush.msra.mxu0 0.0
        %4948 = vmatpush.msra.mxu0 0.0
        %4949 = vmatpush.msra.mxu0 0.0
        %4950 = vmatpush.msra.mxu0 0.0
        %4951 = vmatpush.msra.mxu0 0.0
        %4952 = vmatpush.msra.mxu0 0.0
        %4953 = vmatpush.msra.mxu0 0.0
        %4954 = vmatpush.msra.mxu0 0.0
        %4955 = vmatpush.msra.mxu0 0.0
        %v4956 = vand.u32 %v1798, 4294901760
        %v4957 = vsub.f32 %v1798, %v4956
        %v4958 = vand.u32 %v4957, 4294901760
        %v4959 = vsub.f32 %v4957, %v4958
        %v4960 = vand.u32 %v4959, 4294901760
        %4961 = vmatpush.msra.mxu0 %v4960
        %v4962 = vand.u32 %v1794, 4294901760
        %v4963 = vsub.f32 %v1794, %v4962
        %v4964 = vand.u32 %v4963, 4294901760
        %v4965 = vsub.f32 %v4963, %v4964
        %v4966 = vand.u32 %v4965, 4294901760
        %4967 = vmatpush.msra.mxu0 %v4966
        %v4968 = vand.u32 %v1833, 4294901760
        %4969 = vmatmul.f32.gmra.mxu0 %v4968
        %v4970 = vpop.f32.mrf.mxu0
        %v4971 = vadd.f32 %v4932, %v4970
        %v4972 = vand.u32 %v1836, 4294901760
        %4973 = vmatmul.f32.gmra.mxu0 %v4972
        %v4974 = vpop.f32.mrf.mxu0
        %v4975 = vadd.f32 %v4940, %v4974
        %4976 = vdwg.mxu0
        %4977 = vmatpush.msra.mxu0 0.0
        %4978 = vmatpush.msra.mxu0 0.0
        %4979 = vmatpush.msra.mxu0 0.0
        %4980 = vmatpush.msra.mxu0 0.0
        %4981 = vmatpush.msra.mxu0 0.0
        %4982 = vmatpush.msra.mxu0 0.0
        %4983 = vmatpush.msra.mxu0 0.0
        %4984 = vmatpush.msra.mxu0 0.0
        %4985 = vmatpush.msra.mxu0 0.0
        %4986 = vmatpush.msra.mxu0 0.0
        %4987 = vmatpush.msra.mxu0 0.0
        %4988 = vmatpush.msra.mxu0 0.0
        %4989 = vmatpush.msra.mxu0 0.0
        %4990 = vmatpush.msra.mxu0 0.0
        %v4991 = vand.u32 %v1798, 4294901760
        %v4992 = vsub.f32 %v1798, %v4991
        %4993 = vmatpush.msra.mxu0 %v4992
        %v4994 = vand.u32 %v1794, 4294901760
        %v4995 = vsub.f32 %v1794, %v4994
        %4996 = vmatpush.msra.mxu0 %v4995
        %v4997 = vand.u32 %v1833, 4294901760
        %v4998 = vsub.f32 %v1833, %v4997
        %4999 = vmatmul.f32.gmra.mxu0 %v4998
        %v5000 = vpop.f32.mrf.mxu0
        %v5001 = vadd.f32 %v4971, %v5000
        %v5002 = vand.u32 %v1836, 4294901760
        %v5003 = vsub.f32 %v1836, %v5002
        %5004 = vmatmul.f32.gmra.mxu0 %v5003
        %v5005 = vpop.f32.mrf.mxu0
        %v5006 = vadd.f32 %v4975, %v5005
        %5007 = vdwg.mxu0
        %5008 = vmatpush.msra.mxu0 0.0
        %5009 = vmatpush.msra.mxu0 0.0
        %5010 = vmatpush.msra.mxu0 0.0
        %5011 = vmatpush.msra.mxu0 0.0
        %5012 = vmatpush.msra.mxu0 0.0
        %5013 = vmatpush.msra.mxu0 0.0
        %5014 = vmatpush.msra.mxu0 0.0
        %5015 = vmatpush.msra.mxu0 0.0
        %5016 = vmatpush.msra.mxu0 0.0
        %5017 = vmatpush.msra.mxu0 0.0
        %5018 = vmatpush.msra.mxu0 0.0
        %5019 = vmatpush.msra.mxu0 0.0
        %5020 = vmatpush.msra.mxu0 0.0
        %5021 = vmatpush.msra.mxu0 0.0
        %v5022 = vand.u32 %v1798, 4294901760
        %5023 = vmatpush.msra.mxu0 %v5022
        %v5024 = vand.u32 %v1794, 4294901760
        %5025 = vmatpush.msra.mxu0 %v5024
        %v5026 = vand.u32 %v1833, 4294901760
        %v5027 = vsub.f32 %v1833, %v5026
        %v5028 = vand.u32 %v5027, 4294901760
        %5029 = vmatmul.f32.gmra.mxu0 %v5028
        %v5030 = vpop.f32.mrf.mxu0
        %v5031 = vadd.f32 %v5001, %v5030
        %v5032 = vand.u32 %v1836, 4294901760
        %v5033 = vsub.f32 %v1836, %v5032
        %v5034 = vand.u32 %v5033, 4294901760
        %5035 = vmatmul.f32.gmra.mxu0 %v5034
        %v5036 = vpop.f32.mrf.mxu0
        %v5037 = vadd.f32 %v5006, %v5036
        %5038 = vdwg.mxu0
        %5039 = vmatpush.msra.mxu0 0.0
        %5040 = vmatpush.msra.mxu0 0.0
        %5041 = vmatpush.msra.mxu0 0.0
        %5042 = vmatpush.msra.mxu0 0.0
        %5043 = vmatpush.msra.mxu0 0.0
        %5044 = vmatpush.msra.mxu0 0.0
        %5045 = vmatpush.msra.mxu0 0.0
        %5046 = vmatpush.msra.mxu0 0.0
        %5047 = vmatpush.msra.mxu0 0.0
        %5048 = vmatpush.msra.mxu0 0.0
        %5049 = vmatpush.msra.mxu0 0.0
        %5050 = vmatpush.msra.mxu0 0.0
        %5051 = vmatpush.msra.mxu0 0.0
        %5052 = vmatpush.msra.mxu0 0.0
        %v5053 = vand.u32 %v1798, 4294901760
        %v5054 = vsub.f32 %v1798, %v5053
        %v5055 = vand.u32 %v5054, 4294901760
        %5056 = vmatpush.msra.mxu0 %v5055
        %v5057 = vand.u32 %v1794, 4294901760
        %v5058 = vsub.f32 %v1794, %v5057
        %v5059 = vand.u32 %v5058, 4294901760
        %5060 = vmatpush.msra.mxu0 %v5059
        %v5061 = vand.u32 %v1833, 4294901760
        %5062 = vmatmul.f32.gmra.mxu0 %v5061
        %v5063 = vpop.f32.mrf.mxu0
        %v5064 = vadd.f32 %v5031, %v5063
        %v5065 = vand.u32 %v1836, 4294901760
        %5066 = vmatmul.f32.gmra.mxu0 %v5065
        %v5067 = vpop.f32.mrf.mxu0
        %v5068 = vadd.f32 %v5037, %v5067
        %5069 = vdwg.mxu0
        %5070 = vmatpush.msra.mxu0 0.0
        %5071 = vmatpush.msra.mxu0 0.0
        %5072 = vmatpush.msra.mxu0 0.0
        %5073 = vmatpush.msra.mxu0 0.0
        %5074 = vmatpush.msra.mxu0 0.0
        %5075 = vmatpush.msra.mxu0 0.0
        %5076 = vmatpush.msra.mxu0 0.0
        %5077 = vmatpush.msra.mxu0 0.0
        %5078 = vmatpush.msra.mxu0 0.0
        %5079 = vmatpush.msra.mxu0 0.0
        %5080 = vmatpush.msra.mxu0 0.0
        %5081 = vmatpush.msra.mxu0 0.0
        %5082 = vmatpush.msra.mxu0 0.0
        %5083 = vmatpush.msra.mxu0 0.0
        %v5084 = vand.u32 %v1798, 4294901760
        %5085 = vmatpush.msra.mxu0 %v5084
        %v5086 = vand.u32 %v1794, 4294901760
        %5087 = vmatpush.msra.mxu0 %v5086
        %v5088 = vand.u32 %v1833, 4294901760
        %5089 = vmatmul.f32.gmra.mxu0 %v5088
        %v5090 = vpop.f32.mrf.mxu0
        %v5091 = vadd.f32 %v5064, %v5090
        %v5092 = vand.u32 %v1836, 4294901760
        %5093 = vmatmul.f32.gmra.mxu0 %v5092
        %v5094 = vpop.f32.mrf.mxu0
        %v5095 = vadd.f32 %v5068, %v5094
        %5096 = vdwg.mxu0
        %5097 = vmatpush.msra.mxu0 0.0
        %5098 = vmatpush.msra.mxu0 0.0
        %5099 = vmatpush.msra.mxu0 0.0
        %5100 = vmatpush.msra.mxu0 0.0
        %5101 = vmatpush.msra.mxu0 0.0
        %5102 = vmatpush.msra.mxu0 0.0
        %5103 = vmatpush.msra.mxu0 0.0
        %5104 = vmatpush.msra.mxu0 0.0
        %5105 = vmatpush.msra.mxu0 0.0
        %5106 = vmatpush.msra.mxu0 0.0
        %5107 = vmatpush.msra.mxu0 0.0
        %5108 = vmatpush.msra.mxu0 0.0
        %5109 = vmatpush.msra.mxu0 0.0
        %5110 = vmatpush.msra.mxu0 0.0
        %v5111 = vand.u32 %v1806, 4294901760
        %5112 = vmatpush.msra.mxu0 %v5111
        %v5113 = vand.u32 %v1802, 4294901760
        %5114 = vmatpush.msra.mxu0 %v5113
        %v5115 = vand.u32 %v1833, 4294901760
        %v5116 = vsub.f32 %v1833, %v5115
        %v5117 = vand.u32 %v5116, 4294901760
        %v5118 = vsub.f32 %v5116, %v5117
        %v5119 = vand.u32 %v5118, 4294901760
        %5120 = vmatmul.f32.gmra.mxu0 %v5119
        %v5121 = vpop.f32.mrf.mxu0
        %v5122 = vadd.f32 0.0, %v5121
        %v5123 = vand.u32 %v1836, 4294901760
        %v5124 = vsub.f32 %v1836, %v5123
        %v5125 = vand.u32 %v5124, 4294901760
        %v5126 = vsub.f32 %v5124, %v5125
        %v5127 = vand.u32 %v5126, 4294901760
        %5128 = vmatmul.f32.gmra.mxu0 %v5127
        %v5129 = vpop.f32.mrf.mxu0
        %v5130 = vadd.f32 0.0, %v5129
        %5131 = vdwg.mxu0
        %5132 = vmatpush.msra.mxu0 0.0
        %5133 = vmatpush.msra.mxu0 0.0
        %5134 = vmatpush.msra.mxu0 0.0
        %5135 = vmatpush.msra.mxu0 0.0
        %5136 = vmatpush.msra.mxu0 0.0
        %5137 = vmatpush.msra.mxu0 0.0
        %5138 = vmatpush.msra.mxu0 0.0
        %5139 = vmatpush.msra.mxu0 0.0
        %5140 = vmatpush.msra.mxu0 0.0
        %5141 = vmatpush.msra.mxu0 0.0
        %5142 = vmatpush.msra.mxu0 0.0
        %5143 = vmatpush.msra.mxu0 0.0
        %5144 = vmatpush.msra.mxu0 0.0
        %5145 = vmatpush.msra.mxu0 0.0
        %v5146 = vand.u32 %v1806, 4294901760
        %v5147 = vsub.f32 %v1806, %v5146
        %v5148 = vand.u32 %v5147, 4294901760
        %v5149 = vsub.f32 %v5147, %v5148
        %v5150 = vand.u32 %v5149, 4294901760
        %5151 = vmatpush.msra.mxu0 %v5150
        %v5152 = vand.u32 %v1802, 4294901760
        %v5153 = vsub.f32 %v1802, %v5152
        %v5154 = vand.u32 %v5153, 4294901760
        %v5155 = vsub.f32 %v5153, %v5154
        %v5156 = vand.u32 %v5155, 4294901760
        %5157 = vmatpush.msra.mxu0 %v5156
        %v5158 = vand.u32 %v1833, 4294901760
        %5159 = vmatmul.f32.gmra.mxu0 %v5158
        %v5160 = vpop.f32.mrf.mxu0
        %v5161 = vadd.f32 %v5122, %v5160
        %v5162 = vand.u32 %v1836, 4294901760
        %5163 = vmatmul.f32.gmra.mxu0 %v5162
        %v5164 = vpop.f32.mrf.mxu0
        %v5165 = vadd.f32 %v5130, %v5164
        %5166 = vdwg.mxu0
        %5167 = vmatpush.msra.mxu0 0.0
        %5168 = vmatpush.msra.mxu0 0.0
        %5169 = vmatpush.msra.mxu0 0.0
        %5170 = vmatpush.msra.mxu0 0.0
        %5171 = vmatpush.msra.mxu0 0.0
        %5172 = vmatpush.msra.mxu0 0.0
        %5173 = vmatpush.msra.mxu0 0.0
        %5174 = vmatpush.msra.mxu0 0.0
        %5175 = vmatpush.msra.mxu0 0.0
        %5176 = vmatpush.msra.mxu0 0.0
        %5177 = vmatpush.msra.mxu0 0.0
        %5178 = vmatpush.msra.mxu0 0.0
        %5179 = vmatpush.msra.mxu0 0.0
        %5180 = vmatpush.msra.mxu0 0.0
        %v5181 = vand.u32 %v1806, 4294901760
        %v5182 = vsub.f32 %v1806, %v5181
        %5183 = vmatpush.msra.mxu0 %v5182
        %v5184 = vand.u32 %v1802, 4294901760
        %v5185 = vsub.f32 %v1802, %v5184
        %5186 = vmatpush.msra.mxu0 %v5185
        %v5187 = vand.u32 %v1833, 4294901760
        %v5188 = vsub.f32 %v1833, %v5187
        %5189 = vmatmul.f32.gmra.mxu0 %v5188
        %v5190 = vpop.f32.mrf.mxu0
        %v5191 = vadd.f32 %v5161, %v5190
        %v5192 = vand.u32 %v1836, 4294901760
        %v5193 = vsub.f32 %v1836, %v5192
        %5194 = vmatmul.f32.gmra.mxu0 %v5193
        %v5195 = vpop.f32.mrf.mxu0
        %v5196 = vadd.f32 %v5165, %v5195
        %5197 = vdwg.mxu0
        %5198 = vmatpush.msra.mxu0 0.0
        %5199 = vmatpush.msra.mxu0 0.0
        %5200 = vmatpush.msra.mxu0 0.0
        %5201 = vmatpush.msra.mxu0 0.0
        %5202 = vmatpush.msra.mxu0 0.0
        %5203 = vmatpush.msra.mxu0 0.0
        %5204 = vmatpush.msra.mxu0 0.0
        %5205 = vmatpush.msra.mxu0 0.0
        %5206 = vmatpush.msra.mxu0 0.0
        %5207 = vmatpush.msra.mxu0 0.0
        %5208 = vmatpush.msra.mxu0 0.0
        %5209 = vmatpush.msra.mxu0 0.0
        %5210 = vmatpush.msra.mxu0 0.0
        %5211 = vmatpush.msra.mxu0 0.0
        %v5212 = vand.u32 %v1806, 4294901760
        %5213 = vmatpush.msra.mxu0 %v5212
        %v5214 = vand.u32 %v1802, 4294901760
        %5215 = vmatpush.msra.mxu0 %v5214
        %v5216 = vand.u32 %v1833, 4294901760
        %v5217 = vsub.f32 %v1833, %v5216
        %v5218 = vand.u32 %v5217, 4294901760
        %5219 = vmatmul.f32.gmra.mxu0 %v5218
        %v5220 = vpop.f32.mrf.mxu0
        %v5221 = vadd.f32 %v5191, %v5220
        %v5222 = vand.u32 %v1836, 4294901760
        %v5223 = vsub.f32 %v1836, %v5222
        %v5224 = vand.u32 %v5223, 4294901760
        %5225 = vmatmul.f32.gmra.mxu0 %v5224
        %v5226 = vpop.f32.mrf.mxu0
        %v5227 = vadd.f32 %v5196, %v5226
        %5228 = vdwg.mxu0
        %5229 = vmatpush.msra.mxu0 0.0
        %5230 = vmatpush.msra.mxu0 0.0
        %5231 = vmatpush.msra.mxu0 0.0
        %5232 = vmatpush.msra.mxu0 0.0
        %5233 = vmatpush.msra.mxu0 0.0
        %5234 = vmatpush.msra.mxu0 0.0
        %5235 = vmatpush.msra.mxu0 0.0
        %5236 = vmatpush.msra.mxu0 0.0
        %5237 = vmatpush.msra.mxu0 0.0
        %5238 = vmatpush.msra.mxu0 0.0
        %5239 = vmatpush.msra.mxu0 0.0
        %5240 = vmatpush.msra.mxu0 0.0
        %5241 = vmatpush.msra.mxu0 0.0
        %5242 = vmatpush.msra.mxu0 0.0
        %v5243 = vand.u32 %v1806, 4294901760
        %v5244 = vsub.f32 %v1806, %v5243
        %v5245 = vand.u32 %v5244, 4294901760
        %5246 = vmatpush.msra.mxu0 %v5245
        %v5247 = vand.u32 %v1802, 4294901760
        %v5248 = vsub.f32 %v1802, %v5247
        %v5249 = vand.u32 %v5248, 4294901760
        %5250 = vmatpush.msra.mxu0 %v5249
        %v5251 = vand.u32 %v1833, 4294901760
        %5252 = vmatmul.f32.gmra.mxu0 %v5251
        %v5253 = vpop.f32.mrf.mxu0
        %v5254 = vadd.f32 %v5221, %v5253
        %v5255 = vand.u32 %v1836, 4294901760
        %5256 = vmatmul.f32.gmra.mxu0 %v5255
        %v5257 = vpop.f32.mrf.mxu0
        %v5258 = vadd.f32 %v5227, %v5257
        %5259 = vdwg.mxu0
        %5260 = vmatpush.msra.mxu0 0.0
        %5261 = vmatpush.msra.mxu0 0.0
        %5262 = vmatpush.msra.mxu0 0.0
        %5263 = vmatpush.msra.mxu0 0.0
        %5264 = vmatpush.msra.mxu0 0.0
        %5265 = vmatpush.msra.mxu0 0.0
        %5266 = vmatpush.msra.mxu0 0.0
        %5267 = vmatpush.msra.mxu0 0.0
        %5268 = vmatpush.msra.mxu0 0.0
        %5269 = vmatpush.msra.mxu0 0.0
        %5270 = vmatpush.msra.mxu0 0.0
        %5271 = vmatpush.msra.mxu0 0.0
        %5272 = vmatpush.msra.mxu0 0.0
        %5273 = vmatpush.msra.mxu0 0.0
        %v5274 = vand.u32 %v1806, 4294901760
        %5275 = vmatpush.msra.mxu0 %v5274
        %v5276 = vand.u32 %v1802, 4294901760
        %5277 = vmatpush.msra.mxu0 %v5276
        %v5278 = vand.u32 %v1833, 4294901760
        %5279 = vmatmul.f32.gmra.mxu0 %v5278
        %v5280 = vpop.f32.mrf.mxu0
        %v5281 = vadd.f32 %v5254, %v5280
        %v5282 = vand.u32 %v1836, 4294901760
        %5283 = vmatmul.f32.gmra.mxu0 %v5282
        %v5284 = vpop.f32.mrf.mxu0
        %v5285 = vadd.f32 %v5258, %v5284
        %5286 = vdwg.mxu0
        %5287 = vmatpush.msra.mxu0 0.0
        %5288 = vmatpush.msra.mxu0 0.0
        %5289 = vmatpush.msra.mxu0 0.0
        %5290 = vmatpush.msra.mxu0 0.0
        %5291 = vmatpush.msra.mxu0 0.0
        %5292 = vmatpush.msra.mxu0 0.0
        %5293 = vmatpush.msra.mxu0 0.0
        %5294 = vmatpush.msra.mxu0 0.0
        %5295 = vmatpush.msra.mxu0 0.0
        %5296 = vmatpush.msra.mxu0 0.0
        %5297 = vmatpush.msra.mxu0 0.0
        %5298 = vmatpush.msra.mxu0 0.0
        %5299 = vmatpush.msra.mxu0 0.0
        %5300 = vmatpush.msra.mxu0 0.0
        %v5301 = vand.u32 %v1814, 4294901760
        %5302 = vmatpush.msra.mxu0 %v5301
        %v5303 = vand.u32 %v1810, 4294901760
        %5304 = vmatpush.msra.mxu0 %v5303
        %v5305 = vand.u32 %v1833, 4294901760
        %v5306 = vsub.f32 %v1833, %v5305
        %v5307 = vand.u32 %v5306, 4294901760
        %v5308 = vsub.f32 %v5306, %v5307
        %v5309 = vand.u32 %v5308, 4294901760
        %5310 = vmatmul.f32.gmra.mxu0 %v5309
        %v5311 = vpop.f32.mrf.mxu0
        %v5312 = vadd.f32 0.0, %v5311
        %v5313 = vand.u32 %v1836, 4294901760
        %v5314 = vsub.f32 %v1836, %v5313
        %v5315 = vand.u32 %v5314, 4294901760
        %v5316 = vsub.f32 %v5314, %v5315
        %v5317 = vand.u32 %v5316, 4294901760
        %5318 = vmatmul.f32.gmra.mxu0 %v5317
        %v5319 = vpop.f32.mrf.mxu0
        %v5320 = vadd.f32 0.0, %v5319
        %5321 = vdwg.mxu0
        %5322 = vmatpush.msra.mxu0 0.0
        %5323 = vmatpush.msra.mxu0 0.0
        %5324 = vmatpush.msra.mxu0 0.0
        %5325 = vmatpush.msra.mxu0 0.0
        %5326 = vmatpush.msra.mxu0 0.0
        %5327 = vmatpush.msra.mxu0 0.0
        %5328 = vmatpush.msra.mxu0 0.0
        %5329 = vmatpush.msra.mxu0 0.0
        %5330 = vmatpush.msra.mxu0 0.0
        %5331 = vmatpush.msra.mxu0 0.0
        %5332 = vmatpush.msra.mxu0 0.0
        %5333 = vmatpush.msra.mxu0 0.0
        %5334 = vmatpush.msra.mxu0 0.0
        %5335 = vmatpush.msra.mxu0 0.0
        %v5336 = vand.u32 %v1814, 4294901760
        %v5337 = vsub.f32 %v1814, %v5336
        %v5338 = vand.u32 %v5337, 4294901760
        %v5339 = vsub.f32 %v5337, %v5338
        %v5340 = vand.u32 %v5339, 4294901760
        %5341 = vmatpush.msra.mxu0 %v5340
        %v5342 = vand.u32 %v1810, 4294901760
        %v5343 = vsub.f32 %v1810, %v5342
        %v5344 = vand.u32 %v5343, 4294901760
        %v5345 = vsub.f32 %v5343, %v5344
        %v5346 = vand.u32 %v5345, 4294901760
        %5347 = vmatpush.msra.mxu0 %v5346
        %v5348 = vand.u32 %v1833, 4294901760
        %5349 = vmatmul.f32.gmra.mxu0 %v5348
        %v5350 = vpop.f32.mrf.mxu0
        %v5351 = vadd.f32 %v5312, %v5350
        %v5352 = vand.u32 %v1836, 4294901760
        %5353 = vmatmul.f32.gmra.mxu0 %v5352
        %v5354 = vpop.f32.mrf.mxu0
        %v5355 = vadd.f32 %v5320, %v5354
        %5356 = vdwg.mxu0
        %5357 = vmatpush.msra.mxu0 0.0
        %5358 = vmatpush.msra.mxu0 0.0
        %5359 = vmatpush.msra.mxu0 0.0
        %5360 = vmatpush.msra.mxu0 0.0
        %5361 = vmatpush.msra.mxu0 0.0
        %5362 = vmatpush.msra.mxu0 0.0
        %5363 = vmatpush.msra.mxu0 0.0
        %5364 = vmatpush.msra.mxu0 0.0
        %5365 = vmatpush.msra.mxu0 0.0
        %5366 = vmatpush.msra.mxu0 0.0
        %5367 = vmatpush.msra.mxu0 0.0
        %5368 = vmatpush.msra.mxu0 0.0
        %5369 = vmatpush.msra.mxu0 0.0
        %5370 = vmatpush.msra.mxu0 0.0
        %v5371 = vand.u32 %v1814, 4294901760
        %v5372 = vsub.f32 %v1814, %v5371
        %5373 = vmatpush.msra.mxu0 %v5372
        %v5374 = vand.u32 %v1810, 4294901760
        %v5375 = vsub.f32 %v1810, %v5374
        %5376 = vmatpush.msra.mxu0 %v5375
        %v5377 = vand.u32 %v1833, 4294901760
        %v5378 = vsub.f32 %v1833, %v5377
        %5379 = vmatmul.f32.gmra.mxu0 %v5378
        %v5380 = vpop.f32.mrf.mxu0
        %v5381 = vadd.f32 %v5351, %v5380
        %v5382 = vand.u32 %v1836, 4294901760
        %v5383 = vsub.f32 %v1836, %v5382
        %5384 = vmatmul.f32.gmra.mxu0 %v5383
        %v5385 = vpop.f32.mrf.mxu0
        %v5386 = vadd.f32 %v5355, %v5385
        %5387 = vdwg.mxu0
        %5388 = vmatpush.msra.mxu0 0.0
        %5389 = vmatpush.msra.mxu0 0.0
        %5390 = vmatpush.msra.mxu0 0.0
        %5391 = vmatpush.msra.mxu0 0.0
        %5392 = vmatpush.msra.mxu0 0.0
        %5393 = vmatpush.msra.mxu0 0.0
        %5394 = vmatpush.msra.mxu0 0.0
        %5395 = vmatpush.msra.mxu0 0.0
        %5396 = vmatpush.msra.mxu0 0.0
        %5397 = vmatpush.msra.mxu0 0.0
        %5398 = vmatpush.msra.mxu0 0.0
        %5399 = vmatpush.msra.mxu0 0.0
        %5400 = vmatpush.msra.mxu0 0.0
        %5401 = vmatpush.msra.mxu0 0.0
        %v5402 = vand.u32 %v1814, 4294901760
        %5403 = vmatpush.msra.mxu0 %v5402
        %v5404 = vand.u32 %v1810, 4294901760
        %5405 = vmatpush.msra.mxu0 %v5404
        %v5406 = vand.u32 %v1833, 4294901760
        %v5407 = vsub.f32 %v1833, %v5406
        %v5408 = vand.u32 %v5407, 4294901760
        %5409 = vmatmul.f32.gmra.mxu0 %v5408
        %v5410 = vpop.f32.mrf.mxu0
        %v5411 = vadd.f32 %v5381, %v5410
        %v5412 = vand.u32 %v1836, 4294901760
        %v5413 = vsub.f32 %v1836, %v5412
        %v5414 = vand.u32 %v5413, 4294901760
        %5415 = vmatmul.f32.gmra.mxu0 %v5414
        %v5416 = vpop.f32.mrf.mxu0
        %v5417 = vadd.f32 %v5386, %v5416
        %5418 = vdwg.mxu0
        %5419 = vmatpush.msra.mxu0 0.0
        %5420 = vmatpush.msra.mxu0 0.0
        %5421 = vmatpush.msra.mxu0 0.0
        %5422 = vmatpush.msra.mxu0 0.0
        %5423 = vmatpush.msra.mxu0 0.0
        %5424 = vmatpush.msra.mxu0 0.0
        %5425 = vmatpush.msra.mxu0 0.0
        %5426 = vmatpush.msra.mxu0 0.0
        %5427 = vmatpush.msra.mxu0 0.0
        %5428 = vmatpush.msra.mxu0 0.0
        %5429 = vmatpush.msra.mxu0 0.0
        %5430 = vmatpush.msra.mxu0 0.0
        %5431 = vmatpush.msra.mxu0 0.0
        %5432 = vmatpush.msra.mxu0 0.0
        %v5433 = vand.u32 %v1814, 4294901760
        %v5434 = vsub.f32 %v1814, %v5433
        %v5435 = vand.u32 %v5434, 4294901760
        %5436 = vmatpush.msra.mxu0 %v5435
        %v5437 = vand.u32 %v1810, 4294901760
        %v5438 = vsub.f32 %v1810, %v5437
        %v5439 = vand.u32 %v5438, 4294901760
        %5440 = vmatpush.msra.mxu0 %v5439
        %v5441 = vand.u32 %v1833, 4294901760
        %5442 = vmatmul.f32.gmra.mxu0 %v5441
        %v5443 = vpop.f32.mrf.mxu0
        %v5444 = vadd.f32 %v5411, %v5443
        %v5445 = vand.u32 %v1836, 4294901760
        %5446 = vmatmul.f32.gmra.mxu0 %v5445
        %v5447 = vpop.f32.mrf.mxu0
        %v5448 = vadd.f32 %v5417, %v5447
        %5449 = vdwg.mxu0
        %5450 = vmatpush.msra.mxu0 0.0
        %5451 = vmatpush.msra.mxu0 0.0
        %5452 = vmatpush.msra.mxu0 0.0
        %5453 = vmatpush.msra.mxu0 0.0
        %5454 = vmatpush.msra.mxu0 0.0
        %5455 = vmatpush.msra.mxu0 0.0
        %5456 = vmatpush.msra.mxu0 0.0
        %5457 = vmatpush.msra.mxu0 0.0
        %5458 = vmatpush.msra.mxu0 0.0
        %5459 = vmatpush.msra.mxu0 0.0
        %5460 = vmatpush.msra.mxu0 0.0
        %5461 = vmatpush.msra.mxu0 0.0
        %5462 = vmatpush.msra.mxu0 0.0
        %5463 = vmatpush.msra.mxu0 0.0
        %v5464 = vand.u32 %v1814, 4294901760
        %5465 = vmatpush.msra.mxu0 %v5464
        %v5466 = vand.u32 %v1810, 4294901760
        %5467 = vmatpush.msra.mxu0 %v5466
        %v5468 = vand.u32 %v1833, 4294901760
        %5469 = vmatmul.f32.gmra.mxu0 %v5468
        %v5470 = vpop.f32.mrf.mxu0
        %v5471 = vadd.f32 %v5444, %v5470
        %v5472 = vand.u32 %v1836, 4294901760
        %5473 = vmatmul.f32.gmra.mxu0 %v5472
        %v5474 = vpop.f32.mrf.mxu0
        %v5475 = vadd.f32 %v5448, %v5474
        %5476 = vdwg.mxu0
        %5477 = vmatpush.msra.mxu0 0.0
        %5478 = vmatpush.msra.mxu0 0.0
        %5479 = vmatpush.msra.mxu0 0.0
        %5480 = vmatpush.msra.mxu0 0.0
        %5481 = vmatpush.msra.mxu0 0.0
        %5482 = vmatpush.msra.mxu0 0.0
        %5483 = vmatpush.msra.mxu0 0.0
        %5484 = vmatpush.msra.mxu0 0.0
        %5485 = vmatpush.msra.mxu0 0.0
        %5486 = vmatpush.msra.mxu0 0.0
        %5487 = vmatpush.msra.mxu0 0.0
        %5488 = vmatpush.msra.mxu0 0.0
        %5489 = vmatpush.msra.mxu0 0.0
        %5490 = vmatpush.msra.mxu0 0.0
        %v5491 = vand.u32 %v1830, 4294901760
        %5492 = vmatpush.msra.mxu0 %v5491
        %v5493 = vand.u32 %v1826, 4294901760
        %5494 = vmatpush.msra.mxu0 %v5493
        %v5495 = vand.u32 %v1833, 4294901760
        %v5496 = vsub.f32 %v1833, %v5495
        %v5497 = vand.u32 %v5496, 4294901760
        %v5498 = vsub.f32 %v5496, %v5497
        %v5499 = vand.u32 %v5498, 4294901760
        %5500 = vmatmul.f32.gmra.mxu0 %v5499
        %v5501 = vpop.f32.mrf.mxu0
        %v5502 = vadd.f32 0.0, %v5501
        %v5503 = vand.u32 %v1836, 4294901760
        %v5504 = vsub.f32 %v1836, %v5503
        %v5505 = vand.u32 %v5504, 4294901760
        %v5506 = vsub.f32 %v5504, %v5505
        %v5507 = vand.u32 %v5506, 4294901760
        %5508 = vmatmul.f32.gmra.mxu0 %v5507
        %v5509 = vpop.f32.mrf.mxu0
        %v5510 = vadd.f32 0.0, %v5509
        %5511 = vdwg.mxu0
        %5512 = vmatpush.msra.mxu0 0.0
        %5513 = vmatpush.msra.mxu0 0.0
        %5514 = vmatpush.msra.mxu0 0.0
        %5515 = vmatpush.msra.mxu0 0.0
        %5516 = vmatpush.msra.mxu0 0.0
        %5517 = vmatpush.msra.mxu0 0.0
        %5518 = vmatpush.msra.mxu0 0.0
        %5519 = vmatpush.msra.mxu0 0.0
        %5520 = vmatpush.msra.mxu0 0.0
        %5521 = vmatpush.msra.mxu0 0.0
        %5522 = vmatpush.msra.mxu0 0.0
        %5523 = vmatpush.msra.mxu0 0.0
        %5524 = vmatpush.msra.mxu0 0.0
        %5525 = vmatpush.msra.mxu0 0.0
        %v5526 = vand.u32 %v1830, 4294901760
        %v5527 = vsub.f32 %v1830, %v5526
        %v5528 = vand.u32 %v5527, 4294901760
        %v5529 = vsub.f32 %v5527, %v5528
        %v5530 = vand.u32 %v5529, 4294901760
        %5531 = vmatpush.msra.mxu0 %v5530
        %v5532 = vand.u32 %v1826, 4294901760
        %v5533 = vsub.f32 %v1826, %v5532
        %v5534 = vand.u32 %v5533, 4294901760
        %v5535 = vsub.f32 %v5533, %v5534
        %v5536 = vand.u32 %v5535, 4294901760
        %5537 = vmatpush.msra.mxu0 %v5536
        %v5538 = vand.u32 %v1833, 4294901760
        %5539 = vmatmul.f32.gmra.mxu0 %v5538
        %v5540 = vpop.f32.mrf.mxu0
        %v5541 = vadd.f32 %v5502, %v5540
        %v5542 = vand.u32 %v1836, 4294901760
        %5543 = vmatmul.f32.gmra.mxu0 %v5542
        %v5544 = vpop.f32.mrf.mxu0
        %v5545 = vadd.f32 %v5510, %v5544
        %5546 = vdwg.mxu0
        %5547 = vmatpush.msra.mxu0 0.0
        %5548 = vmatpush.msra.mxu0 0.0
        %5549 = vmatpush.msra.mxu0 0.0
        %5550 = vmatpush.msra.mxu0 0.0
        %5551 = vmatpush.msra.mxu0 0.0
        %5552 = vmatpush.msra.mxu0 0.0
        %5553 = vmatpush.msra.mxu0 0.0
        %5554 = vmatpush.msra.mxu0 0.0
        %5555 = vmatpush.msra.mxu0 0.0
        %5556 = vmatpush.msra.mxu0 0.0
        %5557 = vmatpush.msra.mxu0 0.0
        %5558 = vmatpush.msra.mxu0 0.0
        %5559 = vmatpush.msra.mxu0 0.0
        %5560 = vmatpush.msra.mxu0 0.0
        %v5561 = vand.u32 %v1830, 4294901760
        %v5562 = vsub.f32 %v1830, %v5561
        %5563 = vmatpush.msra.mxu0 %v5562
        %v5564 = vand.u32 %v1826, 4294901760
        %v5565 = vsub.f32 %v1826, %v5564
        %5566 = vmatpush.msra.mxu0 %v5565
        %v5567 = vand.u32 %v1833, 4294901760
        %v5568 = vsub.f32 %v1833, %v5567
        %5569 = vmatmul.f32.gmra.mxu0 %v5568
        %v5570 = vpop.f32.mrf.mxu0
        %v5571 = vadd.f32 %v5541, %v5570
        %v5572 = vand.u32 %v1836, 4294901760
        %v5573 = vsub.f32 %v1836, %v5572
        %5574 = vmatmul.f32.gmra.mxu0 %v5573
        %v5575 = vpop.f32.mrf.mxu0
        %v5576 = vadd.f32 %v5545, %v5575
        %5577 = vdwg.mxu0
        %5578 = vmatpush.msra.mxu0 0.0
        %5579 = vmatpush.msra.mxu0 0.0
        %5580 = vmatpush.msra.mxu0 0.0
        %5581 = vmatpush.msra.mxu0 0.0
        %5582 = vmatpush.msra.mxu0 0.0
        %5583 = vmatpush.msra.mxu0 0.0
        %5584 = vmatpush.msra.mxu0 0.0
        %5585 = vmatpush.msra.mxu0 0.0
        %5586 = vmatpush.msra.mxu0 0.0
        %5587 = vmatpush.msra.mxu0 0.0
        %5588 = vmatpush.msra.mxu0 0.0
        %5589 = vmatpush.msra.mxu0 0.0
        %5590 = vmatpush.msra.mxu0 0.0
        %5591 = vmatpush.msra.mxu0 0.0
        %v5592 = vand.u32 %v1830, 4294901760
        %5593 = vmatpush.msra.mxu0 %v5592
        %v5594 = vand.u32 %v1826, 4294901760
        %5595 = vmatpush.msra.mxu0 %v5594
        %v5596 = vand.u32 %v1833, 4294901760
        %v5597 = vsub.f32 %v1833, %v5596
        %v5598 = vand.u32 %v5597, 4294901760
        %5599 = vmatmul.f32.gmra.mxu0 %v5598
        %v5600 = vpop.f32.mrf.mxu0
        %v5601 = vadd.f32 %v5571, %v5600
        %v5602 = vand.u32 %v1836, 4294901760
        %v5603 = vsub.f32 %v1836, %v5602
        %v5604 = vand.u32 %v5603, 4294901760
        %5605 = vmatmul.f32.gmra.mxu0 %v5604
        %v5606 = vpop.f32.mrf.mxu0
        %v5607 = vadd.f32 %v5576, %v5606
        %5608 = vdwg.mxu0
        %5609 = vmatpush.msra.mxu0 0.0
        %5610 = vmatpush.msra.mxu0 0.0
        %5611 = vmatpush.msra.mxu0 0.0
        %5612 = vmatpush.msra.mxu0 0.0
        %5613 = vmatpush.msra.mxu0 0.0
        %5614 = vmatpush.msra.mxu0 0.0
        %5615 = vmatpush.msra.mxu0 0.0
        %5616 = vmatpush.msra.mxu0 0.0
        %5617 = vmatpush.msra.mxu0 0.0
        %5618 = vmatpush.msra.mxu0 0.0
        %5619 = vmatpush.msra.mxu0 0.0
        %5620 = vmatpush.msra.mxu0 0.0
        %5621 = vmatpush.msra.mxu0 0.0
        %5622 = vmatpush.msra.mxu0 0.0
        %v5623 = vand.u32 %v1830, 4294901760
        %v5624 = vsub.f32 %v1830, %v5623
        %v5625 = vand.u32 %v5624, 4294901760
        %5626 = vmatpush.msra.mxu0 %v5625
        %v5627 = vand.u32 %v1826, 4294901760
        %v5628 = vsub.f32 %v1826, %v5627
        %v5629 = vand.u32 %v5628, 4294901760
        %5630 = vmatpush.msra.mxu0 %v5629
        %v5631 = vand.u32 %v1833, 4294901760
        %5632 = vmatmul.f32.gmra.mxu0 %v5631
        %v5633 = vpop.f32.mrf.mxu0
        %v5634 = vadd.f32 %v5601, %v5633
        %v5635 = vand.u32 %v1836, 4294901760
        %5636 = vmatmul.f32.gmra.mxu0 %v5635
        %v5637 = vpop.f32.mrf.mxu0
        %v5638 = vadd.f32 %v5607, %v5637
        %5639 = vdwg.mxu0
        %5640 = vmatpush.msra.mxu0 0.0
        %5641 = vmatpush.msra.mxu0 0.0
        %5642 = vmatpush.msra.mxu0 0.0
        %5643 = vmatpush.msra.mxu0 0.0
        %5644 = vmatpush.msra.mxu0 0.0
        %5645 = vmatpush.msra.mxu0 0.0
        %5646 = vmatpush.msra.mxu0 0.0
        %5647 = vmatpush.msra.mxu0 0.0
        %5648 = vmatpush.msra.mxu0 0.0
        %5649 = vmatpush.msra.mxu0 0.0
        %5650 = vmatpush.msra.mxu0 0.0
        %5651 = vmatpush.msra.mxu0 0.0
        %5652 = vmatpush.msra.mxu0 0.0
        %5653 = vmatpush.msra.mxu0 0.0
        %v5654 = vand.u32 %v1830, 4294901760
        %5655 = vmatpush.msra.mxu0 %v5654
        %v5656 = vand.u32 %v1826, 4294901760
        %5657 = vmatpush.msra.mxu0 %v5656
        %v5658 = vand.u32 %v1833, 4294901760
        %5659 = vmatmul.f32.gmra.mxu0 %v5658
        %v5660 = vpop.f32.mrf.mxu0
        %v5661 = vadd.f32 %v5634, %v5660
        %v5662 = vand.u32 %v1836, 4294901760
        %5663 = vmatmul.f32.gmra.mxu0 %v5662
        %v5664 = vpop.f32.mrf.mxu0
        %v5665 = vadd.f32 %v5638, %v5664
        %5666 = vdwg.mxu0
        %v5667 = vmul.f32 %v5091, %v5281
        %v5668 = vmul.f32 %v5095, %v5285
        %v5669 = vmul.f32 %v5667, 2.0
        %v5670 = vmul.f32 %v5668, 2.0
        %v5671 = vadd.f32 %v5669, 0.0001
        %v5672 = vadd.f32 %v5670, 0.0001
        %v5673 = vmul.f32 %v5091, %v5091
        %v5674 = vmul.f32 %v5095, %v5095
        %v5675 = vmul.f32 %v5281, %v5281
        %v5676 = vmul.f32 %v5285, %v5285
        %v5677 = vadd.f32 %v5673, %v5675
        %v5678 = vadd.f32 %v5674, %v5676
        %v5679 = vadd.f32 %v5677, 0.0001
        %v5680 = vadd.f32 %v5678, 0.0001
        %v5681 = vmul.f32 %v5471, 2.0
        %v5682 = vmul.f32 %v5475, 2.0
        %v5683 = vsub.f32 %v5681, %v5671
        %v5684 = vsub.f32 %v5682, %v5672
        %v5685 = vadd.f32 %v5683, 0.001
        %v5686 = vadd.f32 %v5684, 0.001
        %5687 = vmatpush.msra.mxu0 0.0
        %5688 = vmatpush.msra.mxu0 0.0
        %5689 = vmatpush.msra.mxu0 0.0
        %5690 = vmatpush.msra.mxu0 0.0
        %5691 = vmatpush.msra.mxu0 0.0
        %5692 = vmatpush.msra.mxu0 0.0
        %5693 = vmatpush.msra.mxu0 0.0
        %5694 = vmatpush.msra.mxu0 0.0
        %5695 = vmatpush.msra.mxu0 0.0
        %5696 = vmatpush.msra.mxu0 0.0
        %5697 = vmatpush.msra.mxu0 0.0
        %5698 = vmatpush.msra.mxu0 0.0
        %5699 = vmatpush.msra.mxu0 0.0
        %5700 = vmatpush.msra.mxu0 0.0
        %v5701 = vand.u32 %v1822, 4294901760
        %5702 = vmatpush.msra.mxu0 %v5701
        %v5703 = vand.u32 %v1818, 4294901760
        %5704 = vmatpush.msra.mxu0 %v5703
        %v5705 = vand.u32 %v1833, 4294901760
        %v5706 = vsub.f32 %v1833, %v5705
        %v5707 = vand.u32 %v5706, 4294901760
        %v5708 = vsub.f32 %v5706, %v5707
        %v5709 = vand.u32 %v5708, 4294901760
        %5710 = vmatmul.f32.gmra.mxu0 %v5709
        %v5711 = vpop.f32.mrf.mxu0
        %v5712 = vadd.f32 %v5661, %v5711
        %v5713 = vand.u32 %v1836, 4294901760
        %v5714 = vsub.f32 %v1836, %v5713
        %v5715 = vand.u32 %v5714, 4294901760
        %v5716 = vsub.f32 %v5714, %v5715
        %v5717 = vand.u32 %v5716, 4294901760
        %5718 = vmatmul.f32.gmra.mxu0 %v5717
        %v5719 = vpop.f32.mrf.mxu0
        %v5720 = vadd.f32 %v5665, %v5719
        %5721 = vdwg.mxu0
        %5722 = vmatpush.msra.mxu0 0.0
        %5723 = vmatpush.msra.mxu0 0.0
        %5724 = vmatpush.msra.mxu0 0.0
        %5725 = vmatpush.msra.mxu0 0.0
        %5726 = vmatpush.msra.mxu0 0.0
        %5727 = vmatpush.msra.mxu0 0.0
        %5728 = vmatpush.msra.mxu0 0.0
        %5729 = vmatpush.msra.mxu0 0.0
        %5730 = vmatpush.msra.mxu0 0.0
        %5731 = vmatpush.msra.mxu0 0.0
        %5732 = vmatpush.msra.mxu0 0.0
        %5733 = vmatpush.msra.mxu0 0.0
        %5734 = vmatpush.msra.mxu0 0.0
        %5735 = vmatpush.msra.mxu0 0.0
        %v5736 = vand.u32 %v1822, 4294901760
        %v5737 = vsub.f32 %v1822, %v5736
        %v5738 = vand.u32 %v5737, 4294901760
        %v5739 = vsub.f32 %v5737, %v5738
        %v5740 = vand.u32 %v5739, 4294901760
        %5741 = vmatpush.msra.mxu0 %v5740
        %v5742 = vand.u32 %v1818, 4294901760
        %v5743 = vsub.f32 %v1818, %v5742
        %v5744 = vand.u32 %v5743, 4294901760
        %v5745 = vsub.f32 %v5743, %v5744
        %v5746 = vand.u32 %v5745, 4294901760
        %5747 = vmatpush.msra.mxu0 %v5746
        %v5748 = vand.u32 %v1833, 4294901760
        %5749 = vmatmul.f32.gmra.mxu0 %v5748
        %v5750 = vpop.f32.mrf.mxu0
        %v5751 = vadd.f32 %v5712, %v5750
        %v5752 = vand.u32 %v1836, 4294901760
        %5753 = vmatmul.f32.gmra.mxu0 %v5752
        %v5754 = vpop.f32.mrf.mxu0
        %v5755 = vadd.f32 %v5720, %v5754
        %5756 = vdwg.mxu0
        %5757 = vmatpush.msra.mxu0 0.0
        %5758 = vmatpush.msra.mxu0 0.0
        %5759 = vmatpush.msra.mxu0 0.0
        %5760 = vmatpush.msra.mxu0 0.0
        %5761 = vmatpush.msra.mxu0 0.0
        %5762 = vmatpush.msra.mxu0 0.0
        %5763 = vmatpush.msra.mxu0 0.0
        %5764 = vmatpush.msra.mxu0 0.0
        %5765 = vmatpush.msra.mxu0 0.0
        %5766 = vmatpush.msra.mxu0 0.0
        %5767 = vmatpush.msra.mxu0 0.0
        %5768 = vmatpush.msra.mxu0 0.0
        %5769 = vmatpush.msra.mxu0 0.0
        %5770 = vmatpush.msra.mxu0 0.0
        %v5771 = vand.u32 %v1822, 4294901760
        %v5772 = vsub.f32 %v1822, %v5771
        %5773 = vmatpush.msra.mxu0 %v5772
        %v5774 = vand.u32 %v1818, 4294901760
        %v5775 = vsub.f32 %v1818, %v5774
        %5776 = vmatpush.msra.mxu0 %v5775
        %v5777 = vand.u32 %v1833, 4294901760
        %v5778 = vsub.f32 %v1833, %v5777
        %5779 = vmatmul.f32.gmra.mxu0 %v5778
        %v5780 = vpop.f32.mrf.mxu0
        %v5781 = vadd.f32 %v5751, %v5780
        %v5782 = vand.u32 %v1836, 4294901760
        %v5783 = vsub.f32 %v1836, %v5782
        %5784 = vmatmul.f32.gmra.mxu0 %v5783
        %v5785 = vpop.f32.mrf.mxu0
        %v5786 = vadd.f32 %v5755, %v5785
        %5787 = vdwg.mxu0
        %5788 = vmatpush.msra.mxu0 0.0
        %5789 = vmatpush.msra.mxu0 0.0
        %5790 = vmatpush.msra.mxu0 0.0
        %5791 = vmatpush.msra.mxu0 0.0
        %5792 = vmatpush.msra.mxu0 0.0
        %5793 = vmatpush.msra.mxu0 0.0
        %5794 = vmatpush.msra.mxu0 0.0
        %5795 = vmatpush.msra.mxu0 0.0
        %5796 = vmatpush.msra.mxu0 0.0
        %5797 = vmatpush.msra.mxu0 0.0
        %5798 = vmatpush.msra.mxu0 0.0
        %5799 = vmatpush.msra.mxu0 0.0
        %5800 = vmatpush.msra.mxu0 0.0
        %5801 = vmatpush.msra.mxu0 0.0
        %v5802 = vand.u32 %v1822, 4294901760
        %5803 = vmatpush.msra.mxu0 %v5802
        %v5804 = vand.u32 %v1818, 4294901760
        %5805 = vmatpush.msra.mxu0 %v5804
        %v5806 = vand.u32 %v1833, 4294901760
        %v5807 = vsub.f32 %v1833, %v5806
        %v5808 = vand.u32 %v5807, 4294901760
        %5809 = vmatmul.f32.gmra.mxu0 %v5808
        %v5810 = vpop.f32.mrf.mxu0
        %v5811 = vadd.f32 %v5781, %v5810
        %v5812 = vand.u32 %v1836, 4294901760
        %v5813 = vsub.f32 %v1836, %v5812
        %v5814 = vand.u32 %v5813, 4294901760
        %5815 = vmatmul.f32.gmra.mxu0 %v5814
        %v5816 = vpop.f32.mrf.mxu0
        %v5817 = vadd.f32 %v5786, %v5816
        %5818 = vdwg.mxu0
        %5819 = vmatpush.msra.mxu0 0.0
        %5820 = vmatpush.msra.mxu0 0.0
        %5821 = vmatpush.msra.mxu0 0.0
        %5822 = vmatpush.msra.mxu0 0.0
        %5823 = vmatpush.msra.mxu0 0.0
        %5824 = vmatpush.msra.mxu0 0.0
        %5825 = vmatpush.msra.mxu0 0.0
        %5826 = vmatpush.msra.mxu0 0.0
        %5827 = vmatpush.msra.mxu0 0.0
        %5828 = vmatpush.msra.mxu0 0.0
        %5829 = vmatpush.msra.mxu0 0.0
        %5830 = vmatpush.msra.mxu0 0.0
        %5831 = vmatpush.msra.mxu0 0.0
        %5832 = vmatpush.msra.mxu0 0.0
        %v5833 = vand.u32 %v1822, 4294901760
        %v5834 = vsub.f32 %v1822, %v5833
        %v5835 = vand.u32 %v5834, 4294901760
        %5836 = vmatpush.msra.mxu0 %v5835
        %v5837 = vand.u32 %v1818, 4294901760
        %v5838 = vsub.f32 %v1818, %v5837
        %v5839 = vand.u32 %v5838, 4294901760
        %5840 = vmatpush.msra.mxu0 %v5839
        %v5841 = vand.u32 %v1833, 4294901760
        %5842 = vmatmul.f32.gmra.mxu0 %v5841
        %v5843 = vpop.f32.mrf.mxu0
        %v5844 = vadd.f32 %v5811, %v5843
        %v5845 = vand.u32 %v1836, 4294901760
        %5846 = vmatmul.f32.gmra.mxu0 %v5845
        %v5847 = vpop.f32.mrf.mxu0
        %v5848 = vadd.f32 %v5817, %v5847
        %5849 = vdwg.mxu0
        %5850 = vmatpush.msra.mxu0 0.0
        %5851 = vmatpush.msra.mxu0 0.0
        %5852 = vmatpush.msra.mxu0 0.0
        %5853 = vmatpush.msra.mxu0 0.0
        %5854 = vmatpush.msra.mxu0 0.0
        %5855 = vmatpush.msra.mxu0 0.0
        %5856 = vmatpush.msra.mxu0 0.0
        %5857 = vmatpush.msra.mxu0 0.0
        %5858 = vmatpush.msra.mxu0 0.0
        %5859 = vmatpush.msra.mxu0 0.0
        %5860 = vmatpush.msra.mxu0 0.0
        %5861 = vmatpush.msra.mxu0 0.0
        %5862 = vmatpush.msra.mxu0 0.0
        %5863 = vmatpush.msra.mxu0 0.0
        %v5864 = vand.u32 %v1822, 4294901760
        %5865 = vmatpush.msra.mxu0 %v5864
        %v5866 = vand.u32 %v1818, 4294901760
        %5867 = vmatpush.msra.mxu0 %v5866
        %v5868 = vand.u32 %v1833, 4294901760
        %5869 = vmatmul.f32.gmra.mxu0 %v5868
        %v5870 = vpop.f32.mrf.mxu0
        %v5871 = vadd.f32 %v5844, %v5870
        %v5872 = vand.u32 %v1836, 4294901760
        %5873 = vmatmul.f32.gmra.mxu0 %v5872
        %v5874 = vpop.f32.mrf.mxu0
        %v5875 = vadd.f32 %v5848, %v5874
        %5876 = vdwg.mxu0
        %v5877 = vsub.f32 %v5871, %v5679
        %v5878 = vsub.f32 %v5875, %v5680
        %v5879 = vadd.f32 %v5877, 0.001
        %v5880 = vadd.f32 %v5878, 0.001
        %v5881 = vmul.f32 %v5671, %v5685
        %v5882 = vmul.f32 %v5672, %v5686
        %v5883 = vmul.f32 %v5679, %v5879
        %v5884 = vmul.f32 %v5680, %v5880
        %v5885 = vrcp.pop %v5883
        %v5886 = vmul.f32 %v5883, %v5885
        %v5887 = vsub.f32 1.0, %v5886
        %v5888 = vmul.f32 %v5885, %v5887
        %v5889 = vadd.f32 %v5885, %v5888
        %vm5890 = vweird.f32 %v5883
        %vm5891 = vweird.f32 %v5885
        %vm5892 = vmor %vm5890, %vm5891
        %v5893 = vsel %vm5892, %v5885, %v5889
        %v5894 = vand.u32 2147483647, %v5883
        %vm5895 = vcmp.eq.f32.partialorder %v5894, 8.507059e+37
        %v5896 = vand.u32 %v5883, 2147483648
        %v5897 = vor.u32 1.1754944e-38, %v5896
        %v5898 = vsel %vm5895, %v5897, %v5893
        %v5899 = vmul.f32 %v5881, %v5898
        %v5900 = vrcp.pop %v5884
        %v5901 = vmul.f32 %v5884, %v5900
        %v5902 = vsub.f32 1.0, %v5901
        %v5903 = vmul.f32 %v5900, %v5902
        %v5904 = vadd.f32 %v5900, %v5903
        %vm5905 = vweird.f32 %v5884
        %vm5906 = vweird.f32 %v5900
        %vm5907 = vmor %vm5905, %vm5906
        %v5908 = vsel %vm5907, %v5900, %v5904
        %v5909 = vand.u32 2147483647, %v5884
        %vm5910 = vcmp.eq.f32.partialorder %v5909, 8.507059e+37
        %v5911 = vand.u32 %v5884, 2147483648
        %v5912 = vor.u32 1.1754944e-38, %v5911
        %v5913 = vsel %vm5910, %v5912, %v5908
        %v5914 = vmul.f32 %v5882, %v5913
        %v5915 = vsel %vm343, %v5899, 0.0
        %v5916 = vsel %vm343, %v5914, 0.0
        %v5917 = vadd.f32 %v5915, %v5916
        %5918 = vadd.xlane.f32.xlu0 %v5917
        %v5919 = vpop.xlane.xlu0 %5918
        %v5920 = vrot.slane %v5919, 4
        %v5921 = vadd.f32 %v5919, %v5920
        %v5922 = vrot.slane %v5921, 2
        %v5923 = vadd.f32 %v5921, %v5922
        %v5924 = vrot.slane %v5923, 1
        %v5925 = vadd.f32 %v5923, %v5924
        %s5926 = vtos %v5925
        %v5927 = vstv %s5926
        %s5928 = scalar_lea.vmem %s291, 3
        %5929 = vst.msk [vmem:[%s5928] sm:$0x1] %vm2859, %v5927
        %s5930 = smul.u32 4, %s17
        %p5931 = scmp.lt.s32.totalorder %s5930, 7
        %s5932 = scalar_select %p5931, %s5930, 7
        %s5933 = scalar_lea.vmem %s4, %s5932
        // Predicated region
        $region53: #{tpu_custom_call.1} parent=35 // pred_check
          %p5934 = pneg %p129
        $region54: #{tpu_custom_call.1} parent=35 // pred_check_branch
          %5936 = sbr.rel (%p5934) target = $region56
        $region55: #{tpu_custom_call.1} parent=35 // pred_region
          %s5937 = smul.u32 4, %s17
        $region56: #{tpu_custom_call.1} parent=35 // pred_fallthru
          _
      $region36: #{tpu_custom_call.1} parent=5 // pred_fallthru
        _
      %p5938 = scmp.le.s32.totalorder 2, %s12
      // Predicated region
      $region57: #{tpu_custom_call.1} parent=5 // pred_check
        %p5939 = pneg %p5938
      $region58: #{tpu_custom_call.1} parent=5 // pred_check_branch
        %5941 = sbr.rel (%p5939) target = $region60
      $region59: #{tpu_custom_call.1} parent=5 // pred_region
        %s5942 = ssub.s32 %s12, 2
        // Predicated region
        $region61: #{tpu_custom_call.1} parent=59 // pred_check
          %p5943 = pneg %p135
        $region62: #{tpu_custom_call.1} parent=59 // pred_check_branch
          %5945 = sbr.rel (%p5943) target = $region64
        $region63: #{tpu_custom_call.1} parent=59 // pred_region
          %s5946 = smul.u32 4, %s18
          %p5947 = scmp.lt.s32.totalorder %s5946, 7
          %s5948 = scalar_select %p5947, %s5946, 7
          %s5949 = scalar_lea.vmem %s4, %s5948
        $region64: #{tpu_custom_call.1} parent=59 // pred_fallthru
          _
      $region60: #{tpu_custom_call.1} parent=5 // pred_fallthru
        _
    $region6: #{tpu_custom_call.1} parent=1 // loop_footer
      %s16 = sadd.s32 1, %s12
    $region7: #{tpu_custom_call.1} parent=1 // loop_footer_branch
      %11 = sbr.rel target = $region3
    $region8: #{tpu_custom_call.1} parent=1 // loop_exit
      _
    %5950 = vsyncpa [#allocation3], 1
    %s5951 = scalar_lea.sflag [#allocation3], 1
    %5952 = vsyncpa %s5951, 1
    %5953 = vsyncpa [#allocation5], 1

</llo_original>
